<compile_context>
chip_gen: v7x
topology: tpu7x:2x2x1
jax: 0.10.0
libtpu: 0.0.40
codegen_flags: <defaults>
</compile_context>

<pallas_src>
import jax
import jax.numpy as jnp
from jax.experimental import pallas as pl
from jax.experimental.pallas import tpu as pltpu


# ----------------------------------------------------------------------------
# Pallas kernel: fused pointwise-MLP (Conv2d 1x1 + folded BN + ReLU) + max-pool
# ----------------------------------------------------------------------------
def make_mlp_maxpool_kernel(n_layers, tile_p, nsample):
    def kernel(x_ref, *refs):
        out_ref = refs[-1]           # (1, Cout_last, TILE_P)
        params = refs[:-1]           # n_layers * (w_folded, shift)
        # x_ref block: (1, TILE_P*S, Cin_pad) bf16 -> single MXU-friendly M axis.
        h = x_ref[0]
        for l in range(n_layers):
            w = params[2 * l][...]           # (Cin_l, Cout_l) bf16, BN scale folded in
            t = params[2 * l + 1][...]       # (1, Cout_l) f32, BN shift
            acc = jnp.dot(h, w, preferred_element_type=jnp.float32)
            acc = jnp.maximum(acc + t, 0.0)  # folded BN shift + ReLU, f32
            h = acc.astype(w.dtype) if l < n_layers - 1 else acc
        cout = h.shape[-1]
        # max-pool over nsample (== F.max_pool2d(kernel=[1, nsample]))
        pooled = jnp.max(h.reshape(tile_p, nsample, cout), axis=1)   # (TILE_P, Cout)
        out_ref[0] = pooled.T                                        # lane-dense (Cout, TILE_P)
    return kernel


def mlp_maxpool_pallas(grouped, layers):
    """grouped: (B, P, S, Cin) f32; layers: list of (w, bn_scale, bn_shift).

    Returns lane-dense (B, Cout_last, P) f32.
    """
    B, P, S, Cin = grouped.shape
    n_layers = len(layers)
    cout_last = layers[-1][0].shape[1]

    # Fold eval-mode BN scale into the conv weights; keep only the shift in-kernel.
    ws, ts = [], []
    for w, scale, shift in layers:
        ws.append((w * scale).astype(jnp.bfloat16))
        ts.append(shift.astype(jnp.float32))

    # Pad Cin of the first layer to a multiple of 8 (zero channels / zero weight rows).
    cin_pad = -(-Cin // 8) * 8
    if cin_pad != Cin:
        grouped = jnp.pad(grouped, ((0, 0), (0, 0), (0, 0), (0, cin_pad - Cin)))
        ws[0] = jnp.pad(ws[0], ((0, cin_pad - Cin), (0, 0)))

    # Flatten (P, S) -> M in the wrapper (free metadata reshape) and cast to bf16.
    grouped = grouped.reshape(B, P * S, cin_pad).astype(jnp.bfloat16)

    # TILE_P = 128 keeps the (Cout, TILE_P) output block 128-lane aligned and fits the
    # v7x 64 MiB VMEM budget; sweep 256-512 on v6e/v5e for lower per-step overhead.
    tile_p = 128 if P % 128 == 0 else P
    grid = (B, P // tile_p)

    in_specs = [pl.BlockSpec((1, tile_p * S, cin_pad), lambda b, p: (b, p, 0))]
    flat_params = []
    for w, t in zip(ws, ts):
        in_specs.append(pl.BlockSpec(w.shape, lambda b, p: (0, 0)))   # VMEM-resident
        in_specs.append(pl.BlockSpec(t.shape, lambda b, p: (0, 0)))
        flat_params += [w, t]
    out_spec = pl.BlockSpec((1, cout_last, tile_p), lambda b, p: (b, 0, p))

    param_bytes = sum(w.size * 2 for w in ws) + sum(t.size * 4 for t in ts)
    flops = 2 * B * P * S * sum(w.shape[0] * w.shape[1] for w in ws)
    bytes_accessed = grouped.size * 2 + B * cout_last * P * 4 + param_bytes

    max_cout = max(w.shape[1] for w in ws)
    est_vmem = (2 * tile_p * S * cin_pad * 2          # double-buffered bf16 input tile
                + 2 * cout_last * tile_p * 4          # double-buffered output tile
                + param_bytes
                + 2 * tile_p * S * max_cout * 4)      # live f32 layer intermediates
    vmem_limit = int(min(max(2 * est_vmem, 32 * 2 ** 20), 48 * 2 ** 20))

    return pl.pallas_call(
        make_mlp_maxpool_kernel(n_layers, tile_p, S),
        out_shape=jax.ShapeDtypeStruct((B, cout_last, P), jnp.float32),
        grid=grid,
        in_specs=in_specs,
        out_specs=out_spec,
        compiler_params=pltpu.CompilerParams(
            dimension_semantics=("parallel", "parallel"),
            vmem_limit_bytes=vmem_limit),
        cost_estimate=pl.CostEstimate(flops=flops, transcendentals=0,
                                      bytes_accessed=bytes_accessed),
    )(grouped, *flat_params)


# ----------------------------------------------------------------------------
# Glue (plain JAX): furthest point sampling, gather, ball query + grouping.
# TODO(synk): FPS / ball-query are data-dependent sequential argmax loops & gathers
# with no clean rectangular-tile Pallas expression at these sizes; kept as JAX glue.
# ----------------------------------------------------------------------------
def furthest_point_sample(xyz, npoint):
    """xyz: (B, N, 3) -> (B, npoint) int32, same semantics as the CUDA FPS (seed idx 0)."""
    B, N, _ = xyz.shape

    def per_batch(pts):
        dist = jnp.full((N,), 1e10, jnp.float32)
        idxs = jnp.zeros((npoint,), jnp.int32)

        def step(i, carry):
            dist, last, idxs = carry
            d = jnp.sum((pts - pts[last]) ** 2, axis=-1)
            dist = jnp.minimum(dist, d)
            nxt = jnp.argmax(dist).astype(jnp.int32)
            idxs = idxs.at[i].set(nxt)
            return dist, nxt, idxs

        _, _, idxs = jax.lax.fori_loop(1, npoint, step, (dist, jnp.int32(0), idxs))
        return idxs

    return jax.vmap(per_batch)(xyz)


def ball_query(radius, nsample, xyz, new_xyz):
    """xyz: (B,N,3), new_xyz: (B,P,3) -> (B,P,nsample) int32 (CUDA ball_query semantics)."""
    N = xyz.shape[1]
    d2 = jnp.sum((new_xyz[:, :, None, :] - xyz[:, None, :, :]) ** 2, axis=-1)  # (B,P,N)
    in_ball = d2 < (radius * radius)
    ar = jnp.arange(N, dtype=jnp.int32)
    key = jnp.where(in_ball, ar, N)                  # invalid -> N (sorts last)
    first_k = jnp.sort(key, axis=-1)[..., :nsample]  # first nsample valid, in index order
    # Since new_xyz is a subset of xyz, every ball contains its own center, so
    # first_valid < N always; the clamp is purely defensive against future changes.
    first_valid = jnp.minimum(first_k[..., :1], N - 1)
    idx = jnp.where(first_k == N, first_valid, first_k)  # pad with first valid neighbor
    return idx.astype(jnp.int32)


def query_and_group(xyz, new_xyz, features, idx):
    """Returns (B, P, nsample, 3 + C): centered xyz concat features (use_xyz=True)."""
    gather = jax.vmap(lambda pts, ii: pts[ii])
    grouped_xyz = gather(xyz, idx) - new_xyz[:, :, None, :]   # (B,P,S,3)
    grouped_feat = gather(features, idx)                      # (B,P,S,C)
    return jnp.concatenate([grouped_xyz, grouped_feat], axis=-1)


# ----------------------------------------------------------------------------
# Module: deterministic synthetic parameters (Conv2d 1x1 weights + folded BN)
# ----------------------------------------------------------------------------
def init_params(key, mlp_specs):
    """mlp_specs: list (per grouper) of channel lists [Cin, c1, ..., cK]."""
    params = []
    for spec in mlp_specs:
        layers = []
        for cin, cout in zip(spec[:-1], spec[1:]):
            key, k1, k2, k3 = jax.random.split(key, 4)
            w = (jax.random.normal(k1, (cin, cout), jnp.float32)
                 * (2.0 / cin) ** 0.5)
            gamma = jax.random.uniform(k2, (1, cout), jnp.float32, 0.8, 1.2)
            beta = jax.random.uniform(k3, (1, cout), jnp.float32, -0.1, 0.1)
            run_mean = jnp.zeros((1, cout), jnp.float32)
            run_var = jnp.ones((1, cout), jnp.float32)
            scale = gamma / jnp.sqrt(run_var + 1e-5)   # eval-mode BN fold
            shift = beta - run_mean * scale
            layers.append((w, scale, shift))
        params.append(layers)
    return params


def pointnet_sa_module_forward(xyz, features, npoint, radii, nsamples, params):
    """Mirrors _PointnetSAModuleBase.forward (return_critical_index=False).

    xyz:      (B, N, 3)
    features: (B, N, C)
    returns   new_xyz (B, npoint, 3), new_features (B, sum_k mlps[k][-1], npoint)
    """
    fps_idx = furthest_point_sample(xyz, npoint)
    new_xyz = jax.vmap(lambda pts, ii: pts[ii])(xyz, fps_idx)   # (B, npoint, 3)

    new_features_list = []
    for radius, nsample, layers in zip(radii, nsamples, params):
        idx = ball_query(radius, nsample, xyz, new_xyz)
        grouped = query_and_group(xyz, new_xyz, features, idx)  # (B,P,S,3+C)
        new_features_list.append(mlp_maxpool_pallas(grouped, layers))  # (B,Cout,P)
    return new_xyz, jnp.concatenate(new_features_list, axis=1)


# Quantization-matched plain-JAX reference for the fused MLP + maxpool.
def ref_mlp_maxpool(grouped, layers):
    ws = [(w * s).astype(jnp.bfloat16) for w, s, _ in layers]
    ts = [t.astype(jnp.float32) for _, _, t in layers]
    h = grouped.astype(jnp.bfloat16)
    for l, (w, t) in enumerate(zip(ws, ts)):
        acc = jnp.einsum("bpsc,cd->bpsd", h, w, preferred_element_type=jnp.float32)
        acc = jnp.maximum(acc + t[0], 0.0)
        h = acc.astype(jnp.bfloat16) if l < len(ws) - 1 else acc
    return jnp.transpose(jnp.max(h, axis=2), (0, 2, 1))   # (B, Cout, P)


if __name__ == "__main__":
    key = jax.random.PRNGKey(0)
    B, N, C = 2, 512, 4
    npoint = 256                       # 2 P-tiles of 128 per batch -> grid (B, 2)
    radii = [0.2, 0.4]
    nsamples = [8, 16]
    mlp_specs = [[3 + C, 16, 32], [3 + C, 32, 64]]   # use_xyz=True -> Cin = 3 + C

    kx, kf, kp = jax.random.split(key, 3)
    xyz = jax.random.uniform(kx, (B, N, 3), jnp.float32)
    features = jax.random.normal(kf, (B, N, C), jnp.float32)
    params = init_params(kp, mlp_specs)

    new_xyz, new_features = pointnet_sa_module_forward(
        xyz, features, npoint, radii, nsamples, params)
    jax.block_until_ready((new_xyz, new_features))

    assert new_xyz.shape == (B, npoint, 3)
    assert new_features.shape == (B, sum(s[-1] for s in mlp_specs), npoint)

    # Cross-check the Pallas hot path against a quantization-matched JAX reference.
    fps_idx = furthest_point_sample(xyz, npoint)
    nx = jax.vmap(lambda p, i: p[i])(xyz, fps_idx)
    ref_feats = []
    for radius, nsample, layers in zip(radii, nsamples, params):
        idx = ball_query(radius, nsample, xyz, nx)
        grouped = query_and_group(xyz, nx, features, idx)
        ref_feats.append(ref_mlp_maxpool(grouped, layers))
    ref = jnp.concatenate(ref_feats, axis=1)
    # Tolerance accounts for bf16 activations (f32 accumulation kept in both paths).
    assert jnp.allclose(new_features, ref, rtol=1e-2, atol=1e-2), "mismatch vs reference"

    print("KERNEL_OK")
</pallas_src>

<mosaic_0001>
module attributes {stable_mosaic.version = 11 : i64} {
  func.func @kernel(%arg0: i32, %arg1: i32, %arg2: memref<1x1024x8xbf16, #tpu.memory_space<vmem>>, %arg3: memref<8x16xbf16, #tpu.memory_space<vmem>>, %arg4: memref<1x16xf32, #tpu.memory_space<vmem>>, %arg5: memref<16x32xbf16, #tpu.memory_space<vmem>>, %arg6: memref<1x32xf32, #tpu.memory_space<vmem>>, %arg7: memref<1x32x128xf32, #tpu.memory_space<vmem>>) attributes {dimension_semantics = [#tpu.dimension_semantics<parallel>, #tpu.dimension_semantics<parallel>], iteration_bounds = array<i64: 2, 2>, scalar_prefetch = 0 : i64, scratch_operands = 0 : i64, tpu.core_type = #tpu.core_type<tc>, window_params = [{transform_indices = @transform_0, window_bounds = array<i64: 1, 1024, 8>}, {pipeline_mode = #tpu.pipeline_mode<synchronous>, transform_indices = @transform_1, window_bounds = array<i64: 8, 16>}, {pipeline_mode = #tpu.pipeline_mode<synchronous>, transform_indices = @transform_2, window_bounds = array<i64: 1, 16>}, {pipeline_mode = #tpu.pipeline_mode<synchronous>, transform_indices = @transform_3, window_bounds = array<i64: 16, 32>}, {pipeline_mode = #tpu.pipeline_mode<synchronous>, transform_indices = @transform_4, window_bounds = array<i64: 1, 32>}, {transform_indices = @transform_5, window_bounds = array<i64: 1, 32, 128>}]} {
    %c0 = arith.constant 0 : index
    %c0_0 = arith.constant 0 : index
    %c0_1 = arith.constant 0 : index
    %0 = vector.load %arg2[%c0, %c0_0, %c0_1] : memref<1x1024x8xbf16, #tpu.memory_space<vmem>>, vector<1x1024x8xbf16>
    %1 = vector.shape_cast %0 : vector<1x1024x8xbf16> to vector<1024x8xbf16>
    %c0_2 = arith.constant 0 : index
    %c0_3 = arith.constant 0 : index
    %2 = vector.load %arg3[%c0_2, %c0_3] : memref<8x16xbf16, #tpu.memory_space<vmem>>, vector<8x16xbf16>
    %c0_4 = arith.constant 0 : index
    %c0_5 = arith.constant 0 : index
    %3 = vector.load %arg4[%c0_4, %c0_5] : memref<1x16xf32, #tpu.memory_space<vmem>>, vector<1x16xf32>
    %cst = arith.constant dense<0.000000e+00> : vector<1024x16xf32>
    %4 = tpu.matmul %1, %2, %cst {dimension_numbers = #tpu.dot_dimension_numbers<[1], [0], [0], [1], [0, 0, 1, 1], [], []>} : vector<1024x8xbf16>, vector<8x16xbf16>, vector<1024x16xf32> -> vector<1024x16xf32>
    %5 = vector.broadcast %3 : vector<1x16xf32> to vector<1024x16xf32>
    %6 = arith.addf %4, %5 : vector<1024x16xf32>
    %cst_6 = arith.constant 0.000000e+00 : f32
    %7 = vector.broadcast %cst_6 : f32 to vector<1024x16xf32>
    %8 = arith.maximumf %6, %7 : vector<1024x16xf32>
    %9 = arith.truncf %8 : vector<1024x16xf32> to vector<1024x16xbf16>
    %c0_7 = arith.constant 0 : index
    %c0_8 = arith.constant 0 : index
    %10 = vector.load %arg5[%c0_7, %c0_8] : memref<16x32xbf16, #tpu.memory_space<vmem>>, vector<16x32xbf16>
    %c0_9 = arith.constant 0 : index
    %c0_10 = arith.constant 0 : index
    %11 = vector.load %arg6[%c0_9, %c0_10] : memref<1x32xf32, #tpu.memory_space<vmem>>, vector<1x32xf32>
    %cst_11 = arith.constant dense<0.000000e+00> : vector<1024x32xf32>
    %12 = tpu.matmul %9, %10, %cst_11 {dimension_numbers = #tpu.dot_dimension_numbers<[1], [0], [0], [1], [0, 0, 1, 1], [], []>} : vector<1024x16xbf16>, vector<16x32xbf16>, vector<1024x32xf32> -> vector<1024x32xf32>
    %13 = vector.broadcast %11 : vector<1x32xf32> to vector<1024x32xf32>
    %14 = arith.addf %12, %13 : vector<1024x32xf32>
    %cst_12 = arith.constant 0.000000e+00 : f32
    %15 = vector.broadcast %cst_12 : f32 to vector<1024x32xf32>
    %16 = arith.maximumf %14, %15 : vector<1024x32xf32>
    %17 = vector.shape_cast %16 : vector<1024x32xf32> to vector<128x8x32xf32>
    %cst_13 = arith.constant dense<0xFF800000> : vector<128x32xf32>
    %18 = vector.multi_reduction <maximumf>, %17, %cst_13 [1] : vector<128x8x32xf32> to vector<128x32xf32>
    %19 = tpu.transpose %18, [1, 0] : vector<128x32xf32> -> vector<32x128xf32>
    %c0_14 = arith.constant 0 : index
    %c0_15 = arith.constant 0 : index
    %c0_16 = arith.constant 0 : index
    %20 = vector.load %arg7[%c0_14, %c0_15, %c0_16] : memref<1x32x128xf32, #tpu.memory_space<vmem>>, vector<1x32x128xf32>
    %21 = vector.shape_cast %20 : vector<1x32x128xf32> to vector<32x128xf32>
    %22 = vector.shape_cast %19 : vector<32x128xf32> to vector<1x32x128xf32>
    tpu.vector_store %arg7[%c0_14, %c0_15, %c0_16], %22 {strides = array<i32>} : memref<1x32x128xf32, #tpu.memory_space<vmem>>, vector<1x32x128xf32>,
    return
  }
  func.func @transform_0(%arg0: i32, %arg1: i32) -> (i32, i32, i32) {
    %c0_i32 = arith.constant 0 : i32
    %c0_i32_0 = arith.constant 0 : i32
    return %arg0, %arg1, %c0_i32 : i32, i32, i32
  }
  func.func @transform_1(%arg0: i32, %arg1: i32) -> (i32, i32) {
    %c0_i32 = arith.constant 0 : i32
    %c0_i32_0 = arith.constant 0 : i32
    %c0_i32_1 = arith.constant 0 : i32
    return %c0_i32, %c0_i32_0 : i32, i32
  }
  func.func @transform_2(%arg0: i32, %arg1: i32) -> (i32, i32) {
    %c0_i32 = arith.constant 0 : i32
    %c0_i32_0 = arith.constant 0 : i32
    %c0_i32_1 = arith.constant 0 : i32
    return %c0_i32, %c0_i32_0 : i32, i32
  }
  func.func @transform_3(%arg0: i32, %arg1: i32) -> (i32, i32) {
    %c0_i32 = arith.constant 0 : i32
    %c0_i32_0 = arith.constant 0 : i32
    %c0_i32_1 = arith.constant 0 : i32
    return %c0_i32, %c0_i32_0 : i32, i32
  }
  func.func @transform_4(%arg0: i32, %arg1: i32) -> (i32, i32) {
    %c0_i32 = arith.constant 0 : i32
    %c0_i32_0 = arith.constant 0 : i32
    %c0_i32_1 = arith.constant 0 : i32
    return %c0_i32, %c0_i32_0 : i32, i32
  }
  func.func @transform_5(%arg0: i32, %arg1: i32) -> (i32, i32, i32) {
    %c0_i32 = arith.constant 0 : i32
    %c0_i32_0 = arith.constant 0 : i32
    return %arg0, %c0_i32, %arg1 : i32, i32, i32
  }
}

</mosaic_0001>

<llo_original>
// kernel: tpu_custom_call.1
$region0: #{tpu_custom_call.1}
  #allocation0 [shape = 'u32[]', space=smem, size = 0x4, offset = 0x4, fixed_abs, tag = 'smem constant byte address 0x4 - core index']
  #allocation1 [shape = 'u32[144,128]{1,0:T(1,128)}', space=vmem, size = 0x12000, scoped, tag = 'internal scratch']
  %s0 = inlined_call_operand.vmem [shape: bf16[2,2048,8], index: 0, kind: input, shape index: {}]
  %s1 = inlined_call_operand.vmem [shape: bf16[8,16], index: 1, kind: input, shape index: {}]
  %s2 = inlined_call_operand.vmem [shape: f32[1,16], index: 2, kind: input, shape index: {}]
  %s3 = inlined_call_operand.vmem [shape: bf16[16,32], index: 3, kind: input, shape index: {}]
  %s4 = inlined_call_operand.vmem [shape: f32[1,32], index: 4, kind: input, shape index: {}]
  %s5 = inlined_call_operand.hbm [shape: f32[2,32,256], index: 5, kind: output, shape index: {}]
  %s6 = sld [smem:[#allocation0]]
  $region53: #{tpu_custom_call.1} parent=0
    _
  %s8 = ssub.s32 1, %s6
  %s9 = scalar_select 0, %s8, %s6
  $region1: #{tpu_custom_call.1} parent=0
    #allocation2 [shape = 'u8[32768]{0}', space=vmem, size = 0x8000, scoped, tag = 'output window, operand 0']
    #allocation3 [shape = 's32[2]{0}', space=sflag, size = 0x8, scoped, tag = 'scoped memory for tpu_custom_call.1']
    %10 = vsyncpa [#allocation3], 0
    %s11 = scalar_lea.sflag [#allocation3], 1
    %12 = vsyncpa %s11, 0
    loop: start=0, step=1, limit=6
    $region2: #{tpu_custom_call.1} parent=1 // loop_pre_header
      _
    $region3: #{tpu_custom_call.1} parent=1 // loop_header
      %s14 = sphi 0, %s18
      %p15 = scmp.ge.s32.totalorder %s14, 6
      %s21 = sphi 0, %s33
      %s22 = sphi 0, %s29
      %s23 = sphi 0, %s21
      %s24 = sphi 0, %s22
      %s25 = sphi 0, %s23
      %s26 = sphi 0, %s24
      %s38 = sphi 0, %s40
      %s41 = sphi 0, %s38
      %s42 = sphi 0, %s41
      %s58 = sphi 0, %s42
      %s62 = sphi 0, %s62
      %s64 = sphi 0, %s62
      %s65 = sphi 0, %s64
      %s79 = sphi 0, %s65
      %s83 = sphi 0, %s83
      %s85 = sphi 0, %s83
      %s86 = sphi 0, %s85
      %s100 = sphi 0, %s86
      %s104 = sphi 0, %s104
      %s106 = sphi 0, %s104
      %s107 = sphi 0, %s106
      %s121 = sphi 0, %s107
      %s125 = sphi 0, %s125
      %s127 = sphi 0, %s125
      %s128 = sphi 0, %s127
      %s142 = sphi 0, %s128
      %s150 = sphi 0, %s152
      %s153 = sphi 0, %s150
      %s154 = sphi 0, %s153
      %s170 = sphi 0, %s154
    $region4: #{tpu_custom_call.1} parent=1 // loop_header_branch
      %17 = sbr.rel (%p15) target = $region8
    $region5: #{tpu_custom_call.1} parent=1 // loop_body
      %s19 = ssub.s32 %s14, 1
      %s20 = ssub.s32 %s14, 2
      %s27 = sadd.s32 1, %s22
      %p28 = scmp.ge.s32.totalorder %s27, 2
      %s29 = scalar_select %p28, 0, %s27
      %s30 = sadd.s32 1, %s21
      %s31 = scalar_select %p28, %s30, %s21
      %p32 = scmp.ge.s32.totalorder %s31, 2
      %s33 = scalar_select %p32, 0, %s31
      %s34 = ssub.s32 %s21, %s33
      %s35 = ssub.s32 %s22, %s29
      %s36 = sor.u32 %s34, %s35
      %p37 = scmp.eq.s32.totalorder %s36, 0
      %s39 = sadd.s32 %s38, 1
      %s40 = scalar_select %p37, %s38, %s39
      %p43 = pneg %p37
      %p44 = scmp.eq.s32.totalorder %s14, 3
      %p45 = por %p43, %p44
      %p46 = scmp.ne.s32.totalorder %s38, %s41
      %p47 = scmp.eq.s32.totalorder %s14, 0
      %p48 = por %p46, %p47
      %p49 = scmp.ne.s32.totalorder %s38, %s41
      %p50 = scmp.eq.s32.totalorder %s19, 3
      %p51 = por %p49, %p50
      %p52 = scmp.ne.s32.totalorder %s41, %s42
      %p53 = scmp.eq.s32.totalorder %s19, 0
      %p54 = por %p52, %p53
      %p55 = scmp.ne.s32.totalorder %s41, %s42
      %p56 = scmp.eq.s32.totalorder %s20, 3
      %p57 = por %p55, %p56
      %p59 = scmp.ne.s32.totalorder %s42, %s58
      %p60 = scmp.eq.s32.totalorder %s20, 0
      %p61 = por %p59, %p60
      %s63 = sadd.s32 %s62, 1
      %p66 = scmp.eq.s32.totalorder %s14, 3
      %p67 = scmp.ne.s32.totalorder %s62, %s64
      %p68 = scmp.eq.s32.totalorder %s14, 0
      %p69 = por %p67, %p68
      %p70 = scmp.ne.s32.totalorder %s62, %s64
      %p71 = scmp.eq.s32.totalorder %s19, 3
      %p72 = por %p70, %p71
      %p73 = scmp.ne.s32.totalorder %s64, %s65
      %p74 = scmp.eq.s32.totalorder %s19, 0
      %p75 = por %p73, %p74
      %p76 = scmp.ne.s32.totalorder %s64, %s65
      %p77 = scmp.eq.s32.totalorder %s20, 3
      %p78 = por %p76, %p77
      %p80 = scmp.ne.s32.totalorder %s65, %s79
      %p81 = scmp.eq.s32.totalorder %s20, 0
      %p82 = por %p80, %p81
      %s84 = sadd.s32 %s83, 1
      %p87 = scmp.eq.s32.totalorder %s14, 3
      %p88 = scmp.ne.s32.totalorder %s83, %s85
      %p89 = scmp.eq.s32.totalorder %s14, 0
      %p90 = por %p88, %p89
      %p91 = scmp.ne.s32.totalorder %s83, %s85
      %p92 = scmp.eq.s32.totalorder %s19, 3
      %p93 = por %p91, %p92
      %p94 = scmp.ne.s32.totalorder %s85, %s86
      %p95 = scmp.eq.s32.totalorder %s19, 0
      %p96 = por %p94, %p95
      %p97 = scmp.ne.s32.totalorder %s85, %s86
      %p98 = scmp.eq.s32.totalorder %s20, 3
      %p99 = por %p97, %p98
      %p101 = scmp.ne.s32.totalorder %s86, %s100
      %p102 = scmp.eq.s32.totalorder %s20, 0
      %p103 = por %p101, %p102
      %s105 = sadd.s32 %s104, 1
      %p108 = scmp.eq.s32.totalorder %s14, 3
      %p109 = scmp.ne.s32.totalorder %s104, %s106
      %p110 = scmp.eq.s32.totalorder %s14, 0
      %p111 = por %p109, %p110
      %p112 = scmp.ne.s32.totalorder %s104, %s106
      %p113 = scmp.eq.s32.totalorder %s19, 3
      %p114 = por %p112, %p113
      %p115 = scmp.ne.s32.totalorder %s106, %s107
      %p116 = scmp.eq.s32.totalorder %s19, 0
      %p117 = por %p115, %p116
      %p118 = scmp.ne.s32.totalorder %s106, %s107
      %p119 = scmp.eq.s32.totalorder %s20, 3
      %p120 = por %p118, %p119
      %p122 = scmp.ne.s32.totalorder %s107, %s121
      %p123 = scmp.eq.s32.totalorder %s20, 0
      %p124 = por %p122, %p123
      %s126 = sadd.s32 %s125, 1
      %p129 = scmp.eq.s32.totalorder %s14, 3
      %p130 = scmp.ne.s32.totalorder %s125, %s127
      %p131 = scmp.eq.s32.totalorder %s14, 0
      %p132 = por %p130, %p131
      %p133 = scmp.ne.s32.totalorder %s125, %s127
      %p134 = scmp.eq.s32.totalorder %s19, 3
      %p135 = por %p133, %p134
      %p136 = scmp.ne.s32.totalorder %s127, %s128
      %p137 = scmp.eq.s32.totalorder %s19, 0
      %p138 = por %p136, %p137
      %p139 = scmp.ne.s32.totalorder %s127, %s128
      %p140 = scmp.eq.s32.totalorder %s20, 3
      %p141 = por %p139, %p140
      %p143 = scmp.ne.s32.totalorder %s128, %s142
      %p144 = scmp.eq.s32.totalorder %s20, 0
      %p145 = por %p143, %p144
      %s146 = ssub.s32 %s21, %s33
      %s147 = ssub.s32 %s22, %s29
      %s148 = sor.u32 %s146, %s147
      %p149 = scmp.eq.s32.totalorder %s148, 0
      %s151 = sadd.s32 %s150, 1
      %s152 = scalar_select %p149, %s150, %s151
      %p155 = pneg %p149
      %p156 = scmp.eq.s32.totalorder %s14, 3
      %p157 = por %p155, %p156
      %p158 = scmp.ne.s32.totalorder %s150, %s153
      %p159 = scmp.eq.s32.totalorder %s14, 0
      %p160 = por %p158, %p159
      %p161 = scmp.ne.s32.totalorder %s150, %s153
      %p162 = scmp.eq.s32.totalorder %s19, 3
      %p163 = por %p161, %p162
      %p164 = scmp.ne.s32.totalorder %s153, %s154
      %p165 = scmp.eq.s32.totalorder %s19, 0
      %p166 = por %p164, %p165
      %p167 = scmp.ne.s32.totalorder %s153, %s154
      %p168 = scmp.eq.s32.totalorder %s20, 3
      %p169 = por %p167, %p168
      %p171 = scmp.ne.s32.totalorder %s154, %s170
      %p172 = scmp.eq.s32.totalorder %s20, 0
      %p173 = por %p171, %p172
      %p174 = scmp.le.s32.totalorder 1, %s14
      %p175 = scmp.lt.s32.totalorder %s14, 5
      %p176 = pnand %p174, %p175
      %p177 = pneg %p176
      // Predicated region
      $region9: #{tpu_custom_call.1} parent=5 // pred_check
        _
      $region10: #{tpu_custom_call.1} parent=5 // pred_check_branch
        %179 = sbr.rel (%p176) target = $region12
      $region11: #{tpu_custom_call.1} parent=5 // pred_region
        %s180 = ssub.s32 %s14, 1
        // Predicated region
        $region13: #{tpu_custom_call.1} parent=11 // pred_check
          %p181 = pneg %p75
        $region14: #{tpu_custom_call.1} parent=11 // pred_check_branch
          %183 = sbr.rel (%p181) target = $region16
        $region15: #{tpu_custom_call.1} parent=11 // pred_region
          _
        $region16: #{tpu_custom_call.1} parent=11 // pred_fallthru
          _
        // Predicated region
        $region17: #{tpu_custom_call.1} parent=11 // pred_check
          %p184 = pneg %p96
        $region18: #{tpu_custom_call.1} parent=11 // pred_check_branch
          %186 = sbr.rel (%p184) target = $region20
        $region19: #{tpu_custom_call.1} parent=11 // pred_region
          _
        $region20: #{tpu_custom_call.1} parent=11 // pred_fallthru
          _
        // Predicated region
        $region21: #{tpu_custom_call.1} parent=11 // pred_check
          %p187 = pneg %p117
        $region22: #{tpu_custom_call.1} parent=11 // pred_check_branch
          %189 = sbr.rel (%p187) target = $region24
        $region23: #{tpu_custom_call.1} parent=11 // pred_region
          _
        $region24: #{tpu_custom_call.1} parent=11 // pred_fallthru
          _
        // Predicated region
        $region25: #{tpu_custom_call.1} parent=11 // pred_check
          %p190 = pneg %p138
        $region26: #{tpu_custom_call.1} parent=11 // pred_check_branch
          %192 = sbr.rel (%p190) target = $region28
        $region27: #{tpu_custom_call.1} parent=11 // pred_region
          _
        $region28: #{tpu_custom_call.1} parent=11 // pred_fallthru
          _
      $region12: #{tpu_custom_call.1} parent=5 // pred_fallthru
        _
      %p193 = scmp.lt.s32.totalorder %s14, 4
      // Predicated region
      $region29: #{tpu_custom_call.1} parent=5 // pred_check
        %p194 = pneg %p193
      $region30: #{tpu_custom_call.1} parent=5 // pred_check_branch
        %196 = sbr.rel (%p194) target = $region32
      $region31: #{tpu_custom_call.1} parent=5 // pred_region
        // Predicated region
        $region33: #{tpu_custom_call.1} parent=31 // pred_check
          %p197 = pneg %p48
        $region34: #{tpu_custom_call.1} parent=31 // pred_check_branch
          %199 = sbr.rel (%p197) target = $region36
        $region35: #{tpu_custom_call.1} parent=31 // pred_region
          %s200 = smul.u32 128, %s22
          %p201 = scmp.lt.s32.totalorder %s21, 1
          %s202 = scalar_select %p201, %s21, 1
          %p203 = scmp.lt.s32.totalorder %s200, 255
          %s204 = scalar_select %p203, %s200, 255
          %s205 = smul.addr %s202, 256
          %s206 = sadd.s32 %s204, %s205
          %s207 = smul.addr %s206, 4
          %s208 = scalar_lea.vmem %s0, %s207
          %s209 = smul.u32 128, %s22
        $region36: #{tpu_custom_call.1} parent=31 // pred_fallthru
          _
      $region32: #{tpu_custom_call.1} parent=5 // pred_fallthru
        _
      %p210 = scmp.le.s32.totalorder 1, %s14
      %p211 = scmp.lt.s32.totalorder %s14, 5
      %p212 = pnand %p210, %p211
      %p213 = pneg %p212
      // Predicated region
      $region37: #{tpu_custom_call.1} parent=5 // pred_check
        _
      $region38: #{tpu_custom_call.1} parent=5 // pred_check_branch
        %215 = sbr.rel (%p212) target = $region40
      $region39: #{tpu_custom_call.1} parent=5 // pred_region
        %s216 = ssub.s32 %s14, 1
        %s217 = smul.u32 128, %s24
        %p218 = scmp.lt.s32.totalorder %s23, 1
        %s219 = scalar_select %p218, %s23, 1
        %p220 = scmp.lt.s32.totalorder %s217, 255
        %s221 = scalar_select %p220, %s217, 255
        %s222 = smul.addr %s219, 256
        %s223 = sadd.s32 %s221, %s222
        %s224 = smul.addr %s223, 4
        %s225 = scalar_lea.vmem %s0, %s224
        %p226 = pneg %p54
        %p227 = pneg %p51
        %p228 = pneg %p75
        %p229 = pneg %p72
        %p230 = pneg %p96
        %p231 = pneg %p93
        %p232 = pneg %p117
        %p233 = pneg %p114
        %p234 = pneg %p138
        %p235 = pneg %p135
        %p236 = pneg %p166
        %p237 = pneg %p163
        %s238 = sand.u32 %s153, 1
        %s239 = scalar_lea.sflag [#allocation3], %s238
        %s240 = sand.u32 %s153, 1
        %s241 = smul.addr %s240, 32
        %s242 = scalar_lea.vmem [#allocation2], %s241
        %s243 = smul.u32 128, %s24
        %p244 = scmp.lt.s32.totalorder %s23, 1
        %s245 = scalar_select %p244, %s23, 1
        %p246 = scmp.lt.s32.totalorder %s243, 255
        %s247 = scalar_select %p246, %s243, 255
        %s248 = smul.addr %s245, 256
        %s249 = sadd.s32 %s247, %s248
        %s250 = smul.addr %s249, 4
        %s251 = scalar_lea.vmem %s0, %s250
        %s252 = smul.u32 128, %s24
        %v254 = vld [vmem:[%s251] sm:$0xf]
        %v255 = vld [vmem:[%s251 + $0x4] sm:$0xf]
        %v256 = vld [vmem:[%s251 + $0x8] sm:$0xf]
        %v257 = vld [vmem:[%s251 + $0xc] sm:$0xf]
        %v258 = vld [vmem:[%s251 + $0x10] sm:$0xf]
        %v259 = vld [vmem:[%s251 + $0x14] sm:$0xf]
        %v260 = vld [vmem:[%s251 + $0x18] sm:$0xf]
        %v261 = vld [vmem:[%s251 + $0x1c] sm:$0xf]
        %v262 = vld [vmem:[%s251 + $0x20] sm:$0xf]
        %v263 = vld [vmem:[%s251 + $0x24] sm:$0xf]
        %v264 = vld [vmem:[%s251 + $0x28] sm:$0xf]
        %v265 = vld [vmem:[%s251 + $0x2c] sm:$0xf]
        %v266 = vld [vmem:[%s251 + $0x30] sm:$0xf]
        %v267 = vld [vmem:[%s251 + $0x34] sm:$0xf]
        %v268 = vld [vmem:[%s251 + $0x38] sm:$0xf]
        %v269 = vld [vmem:[%s251 + $0x3c] sm:$0xf]
        %v270 = vld [vmem:[%s251 + $0x40] sm:$0xf]
        %v271 = vld [vmem:[%s251 + $0x44] sm:$0xf]
        %v272 = vld [vmem:[%s251 + $0x48] sm:$0xf]
        %v273 = vld [vmem:[%s251 + $0x4c] sm:$0xf]
        %v274 = vld [vmem:[%s251 + $0x50] sm:$0xf]
        %v275 = vld [vmem:[%s251 + $0x54] sm:$0xf]
        %v276 = vld [vmem:[%s251 + $0x58] sm:$0xf]
        %v277 = vld [vmem:[%s251 + $0x5c] sm:$0xf]
        %v278 = vld [vmem:[%s251 + $0x60] sm:$0xf]
        %v279 = vld [vmem:[%s251 + $0x64] sm:$0xf]
        %v280 = vld [vmem:[%s251 + $0x68] sm:$0xf]
        %v281 = vld [vmem:[%s251 + $0x6c] sm:$0xf]
        %v282 = vld [vmem:[%s251 + $0x70] sm:$0xf]
        %v283 = vld [vmem:[%s251 + $0x74] sm:$0xf]
        %v284 = vld [vmem:[%s251 + $0x78] sm:$0xf]
        %v285 = vld [vmem:[%s251 + $0x7c] sm:$0xf]
        %v286 = vld [vmem:[%s251 + $0x80] sm:$0xf]
        %v287 = vld [vmem:[%s251 + $0x84] sm:$0xf]
        %v288 = vld [vmem:[%s251 + $0x88] sm:$0xf]
        %v289 = vld [vmem:[%s251 + $0x8c] sm:$0xf]
        %v290 = vld [vmem:[%s251 + $0x90] sm:$0xf]
        %v291 = vld [vmem:[%s251 + $0x94] sm:$0xf]
        %v292 = vld [vmem:[%s251 + $0x98] sm:$0xf]
        %v293 = vld [vmem:[%s251 + $0x9c] sm:$0xf]
        %v294 = vld [vmem:[%s251 + $0xa0] sm:$0xf]
        %v295 = vld [vmem:[%s251 + $0xa4] sm:$0xf]
        %v296 = vld [vmem:[%s251 + $0xa8] sm:$0xf]
        %v297 = vld [vmem:[%s251 + $0xac] sm:$0xf]
        %v298 = vld [vmem:[%s251 + $0xb0] sm:$0xf]
        %v299 = vld [vmem:[%s251 + $0xb4] sm:$0xf]
        %v300 = vld [vmem:[%s251 + $0xb8] sm:$0xf]
        %v301 = vld [vmem:[%s251 + $0xbc] sm:$0xf]
        %v302 = vld [vmem:[%s251 + $0xc0] sm:$0xf]
        %v303 = vld [vmem:[%s251 + $0xc4] sm:$0xf]
        %v304 = vld [vmem:[%s251 + $0xc8] sm:$0xf]
        %v305 = vld [vmem:[%s251 + $0xcc] sm:$0xf]
        %v306 = vld [vmem:[%s251 + $0xd0] sm:$0xf]
        %v307 = vld [vmem:[%s251 + $0xd4] sm:$0xf]
        %v308 = vld [vmem:[%s251 + $0xd8] sm:$0xf]
        %v309 = vld [vmem:[%s251 + $0xdc] sm:$0xf]
        %v310 = vld [vmem:[%s251 + $0xe0] sm:$0xf]
        %v311 = vld [vmem:[%s251 + $0xe4] sm:$0xf]
        %v312 = vld [vmem:[%s251 + $0xe8] sm:$0xf]
        %v313 = vld [vmem:[%s251 + $0xec] sm:$0xf]
        %v314 = vld [vmem:[%s251 + $0xf0] sm:$0xf]
        %v315 = vld [vmem:[%s251 + $0xf4] sm:$0xf]
        %v316 = vld [vmem:[%s251 + $0xf8] sm:$0xf]
        %v317 = vld [vmem:[%s251 + $0xfc] sm:$0xf]
        %v318 = vld [vmem:[%s251 + $0x100] sm:$0xf]
        %v319 = vld [vmem:[%s251 + $0x104] sm:$0xf]
        %v320 = vld [vmem:[%s251 + $0x108] sm:$0xf]
        %v321 = vld [vmem:[%s251 + $0x10c] sm:$0xf]
        %v322 = vld [vmem:[%s251 + $0x110] sm:$0xf]
        %v323 = vld [vmem:[%s251 + $0x114] sm:$0xf]
        %v324 = vld [vmem:[%s251 + $0x118] sm:$0xf]
        %v325 = vld [vmem:[%s251 + $0x11c] sm:$0xf]
        %v326 = vld [vmem:[%s251 + $0x120] sm:$0xf]
        %v327 = vld [vmem:[%s251 + $0x124] sm:$0xf]
        %v328 = vld [vmem:[%s251 + $0x128] sm:$0xf]
        %v329 = vld [vmem:[%s251 + $0x12c] sm:$0xf]
        %v330 = vld [vmem:[%s251 + $0x130] sm:$0xf]
        %v331 = vld [vmem:[%s251 + $0x134] sm:$0xf]
        %v332 = vld [vmem:[%s251 + $0x138] sm:$0xf]
        %v333 = vld [vmem:[%s251 + $0x13c] sm:$0xf]
        %v334 = vld [vmem:[%s251 + $0x140] sm:$0xf]
        %v335 = vld [vmem:[%s251 + $0x144] sm:$0xf]
        %v336 = vld [vmem:[%s251 + $0x148] sm:$0xf]
        %v337 = vld [vmem:[%s251 + $0x14c] sm:$0xf]
        %v338 = vld [vmem:[%s251 + $0x150] sm:$0xf]
        %v339 = vld [vmem:[%s251 + $0x154] sm:$0xf]
        %v340 = vld [vmem:[%s251 + $0x158] sm:$0xf]
        %v341 = vld [vmem:[%s251 + $0x15c] sm:$0xf]
        %v342 = vld [vmem:[%s251 + $0x160] sm:$0xf]
        %v343 = vld [vmem:[%s251 + $0x164] sm:$0xf]
        %v344 = vld [vmem:[%s251 + $0x168] sm:$0xf]
        %v345 = vld [vmem:[%s251 + $0x16c] sm:$0xf]
        %v346 = vld [vmem:[%s251 + $0x170] sm:$0xf]
        %v347 = vld [vmem:[%s251 + $0x174] sm:$0xf]
        %v348 = vld [vmem:[%s251 + $0x178] sm:$0xf]
        %v349 = vld [vmem:[%s251 + $0x17c] sm:$0xf]
        %v350 = vld [vmem:[%s251 + $0x180] sm:$0xf]
        %v351 = vld [vmem:[%s251 + $0x184] sm:$0xf]
        %v352 = vld [vmem:[%s251 + $0x188] sm:$0xf]
        %v353 = vld [vmem:[%s251 + $0x18c] sm:$0xf]
        %v354 = vld [vmem:[%s251 + $0x190] sm:$0xf]
        %v355 = vld [vmem:[%s251 + $0x194] sm:$0xf]
        %v356 = vld [vmem:[%s251 + $0x198] sm:$0xf]
        %v357 = vld [vmem:[%s251 + $0x19c] sm:$0xf]
        %v358 = vld [vmem:[%s251 + $0x1a0] sm:$0xf]
        %v359 = vld [vmem:[%s251 + $0x1a4] sm:$0xf]
        %v360 = vld [vmem:[%s251 + $0x1a8] sm:$0xf]
        %v361 = vld [vmem:[%s251 + $0x1ac] sm:$0xf]
        %v362 = vld [vmem:[%s251 + $0x1b0] sm:$0xf]
        %v363 = vld [vmem:[%s251 + $0x1b4] sm:$0xf]
        %v364 = vld [vmem:[%s251 + $0x1b8] sm:$0xf]
        %v365 = vld [vmem:[%s251 + $0x1bc] sm:$0xf]
        %v366 = vld [vmem:[%s251 + $0x1c0] sm:$0xf]
        %v367 = vld [vmem:[%s251 + $0x1c4] sm:$0xf]
        %v368 = vld [vmem:[%s251 + $0x1c8] sm:$0xf]
        %v369 = vld [vmem:[%s251 + $0x1cc] sm:$0xf]
        %v370 = vld [vmem:[%s251 + $0x1d0] sm:$0xf]
        %v371 = vld [vmem:[%s251 + $0x1d4] sm:$0xf]
        %v372 = vld [vmem:[%s251 + $0x1d8] sm:$0xf]
        %v373 = vld [vmem:[%s251 + $0x1dc] sm:$0xf]
        %v374 = vld [vmem:[%s251 + $0x1e0] sm:$0xf]
        %v375 = vld [vmem:[%s251 + $0x1e4] sm:$0xf]
        %v376 = vld [vmem:[%s251 + $0x1e8] sm:$0xf]
        %v377 = vld [vmem:[%s251 + $0x1ec] sm:$0xf]
        %v378 = vld [vmem:[%s251 + $0x1f0] sm:$0xf]
        %v379 = vld [vmem:[%s251 + $0x1f4] sm:$0xf]
        %v380 = vld [vmem:[%s251 + $0x1f8] sm:$0xf]
        %v381 = vld [vmem:[%s251 + $0x1fc] sm:$0xf]
        %v382 = vld [vmem:[%s1] sm:$0xf]
        %v383 = vld [vmem:[%s2] sm:$0x1]
        %v385 = vlaneseq
        %v386 = vshrl.u32 %v385, 7
        %v387 = vsub.s32 0, %v386
        %v388 = vrot.slane %v383, %v387
        %v518 = vunpack.c.l.b16 %v254
        %v519 = vunpack.c.l.b16 %v255
        %v520 = vunpack.c.l.b16 %v256
        %v521 = vunpack.c.l.b16 %v257
        %v522 = vunpack.c.l.b16 %v258
        %v523 = vunpack.c.l.b16 %v259
        %v524 = vunpack.c.l.b16 %v260
        %v525 = vunpack.c.l.b16 %v261
        %v526 = vunpack.c.l.b16 %v262
        %v527 = vunpack.c.l.b16 %v263
        %v528 = vunpack.c.l.b16 %v264
        %v529 = vunpack.c.l.b16 %v265
        %v530 = vunpack.c.l.b16 %v266
        %v531 = vunpack.c.l.b16 %v267
        %v532 = vunpack.c.l.b16 %v268
        %v533 = vunpack.c.l.b16 %v269
        %v534 = vunpack.c.l.b16 %v270
        %v535 = vunpack.c.l.b16 %v271
        %v536 = vunpack.c.l.b16 %v272
        %v537 = vunpack.c.l.b16 %v273
        %v538 = vunpack.c.l.b16 %v274
        %v539 = vunpack.c.l.b16 %v275
        %v540 = vunpack.c.l.b16 %v276
        %v541 = vunpack.c.l.b16 %v277
        %v542 = vunpack.c.l.b16 %v278
        %v543 = vunpack.c.l.b16 %v279
        %v544 = vunpack.c.l.b16 %v280
        %v545 = vunpack.c.l.b16 %v281
        %v546 = vunpack.c.l.b16 %v282
        %v547 = vunpack.c.l.b16 %v283
        %v548 = vunpack.c.l.b16 %v284
        %v549 = vunpack.c.l.b16 %v285
        %v550 = vunpack.c.l.b16 %v286
        %v551 = vunpack.c.l.b16 %v287
        %v552 = vunpack.c.l.b16 %v288
        %v553 = vunpack.c.l.b16 %v289
        %v554 = vunpack.c.l.b16 %v290
        %v555 = vunpack.c.l.b16 %v291
        %v556 = vunpack.c.l.b16 %v292
        %v557 = vunpack.c.l.b16 %v293
        %v558 = vunpack.c.l.b16 %v294
        %v559 = vunpack.c.l.b16 %v295
        %v560 = vunpack.c.l.b16 %v296
        %v561 = vunpack.c.l.b16 %v297
        %v562 = vunpack.c.l.b16 %v298
        %v563 = vunpack.c.l.b16 %v299
        %v564 = vunpack.c.l.b16 %v300
        %v565 = vunpack.c.l.b16 %v301
        %v566 = vunpack.c.l.b16 %v302
        %v567 = vunpack.c.l.b16 %v303
        %v568 = vunpack.c.l.b16 %v304
        %v569 = vunpack.c.l.b16 %v305
        %v570 = vunpack.c.l.b16 %v306
        %v571 = vunpack.c.l.b16 %v307
        %v572 = vunpack.c.l.b16 %v308
        %v573 = vunpack.c.l.b16 %v309
        %v574 = vunpack.c.l.b16 %v310
        %v575 = vunpack.c.l.b16 %v311
        %v576 = vunpack.c.l.b16 %v312
        %v577 = vunpack.c.l.b16 %v313
        %v578 = vunpack.c.l.b16 %v314
        %v579 = vunpack.c.l.b16 %v315
        %v580 = vunpack.c.l.b16 %v316
        %v581 = vunpack.c.l.b16 %v317
        %v582 = vunpack.c.l.b16 %v318
        %v583 = vunpack.c.l.b16 %v319
        %v584 = vunpack.c.l.b16 %v320
        %v585 = vunpack.c.l.b16 %v321
        %v586 = vunpack.c.l.b16 %v322
        %v587 = vunpack.c.l.b16 %v323
        %v588 = vunpack.c.l.b16 %v324
        %v589 = vunpack.c.l.b16 %v325
        %v590 = vunpack.c.l.b16 %v326
        %v591 = vunpack.c.l.b16 %v327
        %v592 = vunpack.c.l.b16 %v328
        %v593 = vunpack.c.l.b16 %v329
        %v594 = vunpack.c.l.b16 %v330
        %v595 = vunpack.c.l.b16 %v331
        %v596 = vunpack.c.l.b16 %v332
        %v597 = vunpack.c.l.b16 %v333
        %v598 = vunpack.c.l.b16 %v334
        %v599 = vunpack.c.l.b16 %v335
        %v600 = vunpack.c.l.b16 %v336
        %v601 = vunpack.c.l.b16 %v337
        %v602 = vunpack.c.l.b16 %v338
        %v603 = vunpack.c.l.b16 %v339
        %v604 = vunpack.c.l.b16 %v340
        %v605 = vunpack.c.l.b16 %v341
        %v606 = vunpack.c.l.b16 %v342
        %v607 = vunpack.c.l.b16 %v343
        %v608 = vunpack.c.l.b16 %v344
        %v609 = vunpack.c.l.b16 %v345
        %v610 = vunpack.c.l.b16 %v346
        %v611 = vunpack.c.l.b16 %v347
        %v612 = vunpack.c.l.b16 %v348
        %v613 = vunpack.c.l.b16 %v349
        %v614 = vunpack.c.l.b16 %v350
        %v615 = vunpack.c.l.b16 %v351
        %v616 = vunpack.c.l.b16 %v352
        %v617 = vunpack.c.l.b16 %v353
        %v618 = vunpack.c.l.b16 %v354
        %v619 = vunpack.c.l.b16 %v355
        %v620 = vunpack.c.l.b16 %v356
        %v621 = vunpack.c.l.b16 %v357
        %v622 = vunpack.c.l.b16 %v358
        %v623 = vunpack.c.l.b16 %v359
        %v624 = vunpack.c.l.b16 %v360
        %v625 = vunpack.c.l.b16 %v361
        %v626 = vunpack.c.l.b16 %v362
        %v627 = vunpack.c.l.b16 %v363
        %v628 = vunpack.c.l.b16 %v364
        %v629 = vunpack.c.l.b16 %v365
        %v630 = vunpack.c.l.b16 %v366
        %v631 = vunpack.c.l.b16 %v367
        %v632 = vunpack.c.l.b16 %v368
        %v633 = vunpack.c.l.b16 %v369
        %v634 = vunpack.c.l.b16 %v370
        %v635 = vunpack.c.l.b16 %v371
        %v636 = vunpack.c.l.b16 %v372
        %v637 = vunpack.c.l.b16 %v373
        %v638 = vunpack.c.l.b16 %v374
        %v639 = vunpack.c.l.b16 %v375
        %v640 = vunpack.c.l.b16 %v376
        %v641 = vunpack.c.l.b16 %v377
        %v642 = vunpack.c.l.b16 %v378
        %v643 = vunpack.c.l.b16 %v379
        %v644 = vunpack.c.l.b16 %v380
        %v645 = vunpack.c.l.b16 %v381
        %v646 = vpack.c.b16 %v519, %v518
        %v647 = vpack.c.b16 %v521, %v520
        %v648 = vpack.c.b16 %v523, %v522
        %v649 = vpack.c.b16 %v525, %v524
        %v650 = vpack.c.b16 %v527, %v526
        %v651 = vpack.c.b16 %v529, %v528
        %v652 = vpack.c.b16 %v531, %v530
        %v653 = vpack.c.b16 %v533, %v532
        %v654 = vpack.c.b16 %v535, %v534
        %v655 = vpack.c.b16 %v537, %v536
        %v656 = vpack.c.b16 %v539, %v538
        %v657 = vpack.c.b16 %v541, %v540
        %v658 = vpack.c.b16 %v543, %v542
        %v659 = vpack.c.b16 %v545, %v544
        %v660 = vpack.c.b16 %v547, %v546
        %v661 = vpack.c.b16 %v549, %v548
        %v662 = vpack.c.b16 %v551, %v550
        %v663 = vpack.c.b16 %v553, %v552
        %v664 = vpack.c.b16 %v555, %v554
        %v665 = vpack.c.b16 %v557, %v556
        %v666 = vpack.c.b16 %v559, %v558
        %v667 = vpack.c.b16 %v561, %v560
        %v668 = vpack.c.b16 %v563, %v562
        %v669 = vpack.c.b16 %v565, %v564
        %v670 = vpack.c.b16 %v567, %v566
        %v671 = vpack.c.b16 %v569, %v568
        %v672 = vpack.c.b16 %v571, %v570
        %v673 = vpack.c.b16 %v573, %v572
        %v674 = vpack.c.b16 %v575, %v574
        %v675 = vpack.c.b16 %v577, %v576
        %v676 = vpack.c.b16 %v579, %v578
        %v677 = vpack.c.b16 %v581, %v580
        %v678 = vpack.c.b16 %v583, %v582
        %v679 = vpack.c.b16 %v585, %v584
        %v680 = vpack.c.b16 %v587, %v586
        %v681 = vpack.c.b16 %v589, %v588
        %v682 = vpack.c.b16 %v591, %v590
        %v683 = vpack.c.b16 %v593, %v592
        %v684 = vpack.c.b16 %v595, %v594
        %v685 = vpack.c.b16 %v597, %v596
        %v686 = vpack.c.b16 %v599, %v598
        %v687 = vpack.c.b16 %v601, %v600
        %v688 = vpack.c.b16 %v603, %v602
        %v689 = vpack.c.b16 %v605, %v604
        %v690 = vpack.c.b16 %v607, %v606
        %v691 = vpack.c.b16 %v609, %v608
        %v692 = vpack.c.b16 %v611, %v610
        %v693 = vpack.c.b16 %v613, %v612
        %v694 = vpack.c.b16 %v615, %v614
        %v695 = vpack.c.b16 %v617, %v616
        %v696 = vpack.c.b16 %v619, %v618
        %v697 = vpack.c.b16 %v621, %v620
        %v698 = vpack.c.b16 %v623, %v622
        %v699 = vpack.c.b16 %v625, %v624
        %v700 = vpack.c.b16 %v627, %v626
        %v701 = vpack.c.b16 %v629, %v628
        %v702 = vpack.c.b16 %v631, %v630
        %v703 = vpack.c.b16 %v633, %v632
        %v704 = vpack.c.b16 %v635, %v634
        %v705 = vpack.c.b16 %v637, %v636
        %v706 = vpack.c.b16 %v639, %v638
        %v707 = vpack.c.b16 %v641, %v640
        %v708 = vpack.c.b16 %v643, %v642
        %v709 = vpack.c.b16 %v645, %v644
        %vm710 = vcmask 64512
        %v712 = vsel %vm710, %v646, 0
        %v715 = vsel %vm710, %v647, 0
        %v718 = vsel %vm710, %v648, 0
        %v721 = vsel %vm710, %v649, 0
        %v724 = vsel %vm710, %v650, 0
        %v727 = vsel %vm710, %v651, 0
        %v730 = vsel %vm710, %v652, 0
        %v733 = vsel %vm710, %v653, 0
        %v736 = vsel %vm710, %v654, 0
        %v739 = vsel %vm710, %v655, 0
        %v742 = vsel %vm710, %v656, 0
        %v745 = vsel %vm710, %v657, 0
        %v748 = vsel %vm710, %v658, 0
        %v751 = vsel %vm710, %v659, 0
        %v754 = vsel %vm710, %v660, 0
        %v757 = vsel %vm710, %v661, 0
        %v760 = vsel %vm710, %v662, 0
        %v763 = vsel %vm710, %v663, 0
        %v766 = vsel %vm710, %v664, 0
        %v769 = vsel %vm710, %v665, 0
        %v772 = vsel %vm710, %v666, 0
        %v775 = vsel %vm710, %v667, 0
        %v778 = vsel %vm710, %v668, 0
        %v781 = vsel %vm710, %v669, 0
        %v784 = vsel %vm710, %v670, 0
        %v787 = vsel %vm710, %v671, 0
        %v790 = vsel %vm710, %v672, 0
        %v793 = vsel %vm710, %v673, 0
        %v796 = vsel %vm710, %v674, 0
        %v799 = vsel %vm710, %v675, 0
        %v802 = vsel %vm710, %v676, 0
        %v805 = vsel %vm710, %v677, 0
        %v808 = vsel %vm710, %v678, 0
        %v811 = vsel %vm710, %v679, 0
        %v814 = vsel %vm710, %v680, 0
        %v817 = vsel %vm710, %v681, 0
        %v820 = vsel %vm710, %v682, 0
        %v823 = vsel %vm710, %v683, 0
        %v826 = vsel %vm710, %v684, 0
        %v829 = vsel %vm710, %v685, 0
        %v832 = vsel %vm710, %v686, 0
        %v835 = vsel %vm710, %v687, 0
        %v838 = vsel %vm710, %v688, 0
        %v841 = vsel %vm710, %v689, 0
        %v844 = vsel %vm710, %v690, 0
        %v847 = vsel %vm710, %v691, 0
        %v850 = vsel %vm710, %v692, 0
        %v853 = vsel %vm710, %v693, 0
        %v856 = vsel %vm710, %v694, 0
        %v859 = vsel %vm710, %v695, 0
        %v862 = vsel %vm710, %v696, 0
        %v865 = vsel %vm710, %v697, 0
        %v868 = vsel %vm710, %v698, 0
        %v871 = vsel %vm710, %v699, 0
        %v874 = vsel %vm710, %v700, 0
        %v877 = vsel %vm710, %v701, 0
        %v880 = vsel %vm710, %v702, 0
        %v883 = vsel %vm710, %v703, 0
        %v886 = vsel %vm710, %v704, 0
        %v889 = vsel %vm710, %v705, 0
        %v892 = vsel %vm710, %v706, 0
        %v895 = vsel %vm710, %v707, 0
        %v898 = vsel %vm710, %v708, 0
        %v901 = vsel %vm710, %v709, 0
        %vm903 = vcmask 1043456
        %v905 = vsel %vm903, %v382, 0
        %907 = vmatprep.subr.bf16.mxu0 0
        %908 = vmatpush1.bf16.msra.mxu0 %v905
        %909 = vmatprep.subr.bf16.mxu0 0
        %910 = vmatpush1.bf16.msra.mxu0 0
        %911 = vmatprep.subr.bf16.mxu0 0
        %912 = vmatpush1.bf16.msra.mxu0 0
        %913 = vmatprep.subr.bf16.mxu0 0
        %914 = vmatpush1.bf16.msra.mxu0 0
        %915 = vmatprep.subr.bf16.mxu0 0
        %916 = vmatpush1.bf16.msra.mxu0 0
        %917 = vmatprep.subr.bf16.mxu0 0
        %918 = vmatpush1.bf16.msra.mxu0 0
        %919 = vmatprep.subr.bf16.mxu0 0
        %920 = vmatpush1.bf16.msra.mxu0 0
        %921 = vmatprep.subr.bf16.mxu0 0
        %922 = vmatpush1.bf16.msra.mxu0 0
        %923 = vmatprep.subr.bf16.mxu0 0
        %924 = vmatpush1.bf16.msra.mxu0 0
        %925 = vmatprep.subr.bf16.mxu0 0
        %926 = vmatpush1.bf16.msra.mxu0 0
        %927 = vmatprep.subr.bf16.mxu0 0
        %928 = vmatpush1.bf16.msra.mxu0 0
        %929 = vmatprep.subr.bf16.mxu0 0
        %930 = vmatpush1.bf16.msra.mxu0 0
        %931 = vmatprep.subr.bf16.mxu0 0
        %932 = vmatpush1.bf16.msra.mxu0 0
        %933 = vmatprep.subr.bf16.mxu0 0
        %934 = vmatpush1.bf16.msra.mxu0 0
        %935 = vmatprep.subr.bf16.mxu0 0
        %936 = vmatpush1.bf16.msra.mxu0 0
        %937 = vmatprep.subr.bf16.mxu0 0
        %938 = vmatpush1.bf16.msra.mxu0 0
        %939 = vmatprep.mubr.bf16.mxu0 0
        %940 = vmatmul.mubr.bf16.gmra.mrb[0].mxu0 %v712
        %v941 = vpop.f32.mrb[0].mxu0
        %v942 = vadd.f32 %v388, %v941
        %v943 = vpop.f32.mrb[0].mxu0
        %v944 = vpop.f32.mrb[0].mxu0
        %v945 = vadd.f32 %v388, %v944
        %v946 = vpop.f32.mrb[0].mxu0
        %947 = vmatprep.mubr.bf16.mxu0 0
        %948 = vmatmul.mubr.bf16.gmra.mrb[0].mxu0 %v715
        %v949 = vpop.f32.mrb[0].mxu0
        %v950 = vadd.f32 %v388, %v949
        %v951 = vpop.f32.mrb[0].mxu0
        %v952 = vpop.f32.mrb[0].mxu0
        %v953 = vadd.f32 %v388, %v952
        %v954 = vpop.f32.mrb[0].mxu0
        %955 = vmatprep.mubr.bf16.mxu0 0
        %956 = vmatmul.mubr.bf16.gmra.mrb[0].mxu0 %v718
        %v957 = vpop.f32.mrb[0].mxu0
        %v958 = vadd.f32 %v388, %v957
        %v959 = vpop.f32.mrb[0].mxu0
        %v960 = vpop.f32.mrb[0].mxu0
        %v961 = vadd.f32 %v388, %v960
        %v962 = vpop.f32.mrb[0].mxu0
        %963 = vmatprep.mubr.bf16.mxu0 0
        %964 = vmatmul.mubr.bf16.gmra.mrb[0].mxu0 %v721
        %v965 = vpop.f32.mrb[0].mxu0
        %v966 = vadd.f32 %v388, %v965
        %v967 = vpop.f32.mrb[0].mxu0
        %v968 = vpop.f32.mrb[0].mxu0
        %v969 = vadd.f32 %v388, %v968
        %v970 = vpop.f32.mrb[0].mxu0
        %971 = vmatprep.mubr.bf16.mxu0 0
        %972 = vmatmul.mubr.bf16.gmra.mrb[0].mxu0 %v724
        %v973 = vpop.f32.mrb[0].mxu0
        %v974 = vadd.f32 %v388, %v973
        %v975 = vpop.f32.mrb[0].mxu0
        %v976 = vpop.f32.mrb[0].mxu0
        %v977 = vadd.f32 %v388, %v976
        %v978 = vpop.f32.mrb[0].mxu0
        %979 = vmatprep.mubr.bf16.mxu0 0
        %980 = vmatmul.mubr.bf16.gmra.mrb[0].mxu0 %v727
        %v981 = vpop.f32.mrb[0].mxu0
        %v982 = vadd.f32 %v388, %v981
        %v983 = vpop.f32.mrb[0].mxu0
        %v984 = vpop.f32.mrb[0].mxu0
        %v985 = vadd.f32 %v388, %v984
        %v986 = vpop.f32.mrb[0].mxu0
        %987 = vmatprep.mubr.bf16.mxu0 0
        %988 = vmatmul.mubr.bf16.gmra.mrb[0].mxu0 %v730
        %v989 = vpop.f32.mrb[0].mxu0
        %v990 = vadd.f32 %v388, %v989
        %v991 = vpop.f32.mrb[0].mxu0
        %v992 = vpop.f32.mrb[0].mxu0
        %v993 = vadd.f32 %v388, %v992
        %v994 = vpop.f32.mrb[0].mxu0
        %995 = vmatprep.mubr.bf16.mxu0 0
        %996 = vmatmul.mubr.bf16.gmra.mrb[0].mxu0 %v733
        %v997 = vpop.f32.mrb[0].mxu0
        %v998 = vadd.f32 %v388, %v997
        %v999 = vpop.f32.mrb[0].mxu0
        %v1000 = vpop.f32.mrb[0].mxu0
        %v1001 = vadd.f32 %v388, %v1000
        %v1002 = vpop.f32.mrb[0].mxu0
        %1003 = vmatprep.mubr.bf16.mxu0 0
        %1004 = vmatmul.mubr.bf16.gmra.mrb[0].mxu0 %v736
        %v1005 = vpop.f32.mrb[0].mxu0
        %v1006 = vadd.f32 %v388, %v1005
        %v1007 = vpop.f32.mrb[0].mxu0
        %v1008 = vpop.f32.mrb[0].mxu0
        %v1009 = vadd.f32 %v388, %v1008
        %v1010 = vpop.f32.mrb[0].mxu0
        %1011 = vmatprep.mubr.bf16.mxu0 0
        %1012 = vmatmul.mubr.bf16.gmra.mrb[0].mxu0 %v739
        %v1013 = vpop.f32.mrb[0].mxu0
        %v1014 = vadd.f32 %v388, %v1013
        %v1015 = vpop.f32.mrb[0].mxu0
        %v1016 = vpop.f32.mrb[0].mxu0
        %v1017 = vadd.f32 %v388, %v1016
        %v1018 = vpop.f32.mrb[0].mxu0
        %1019 = vmatprep.mubr.bf16.mxu0 0
        %1020 = vmatmul.mubr.bf16.gmra.mrb[0].mxu0 %v742
        %v1021 = vpop.f32.mrb[0].mxu0
        %v1022 = vadd.f32 %v388, %v1021
        %v1023 = vpop.f32.mrb[0].mxu0
        %v1024 = vpop.f32.mrb[0].mxu0
        %v1025 = vadd.f32 %v388, %v1024
        %v1026 = vpop.f32.mrb[0].mxu0
        %1027 = vmatprep.mubr.bf16.mxu0 0
        %1028 = vmatmul.mubr.bf16.gmra.mrb[0].mxu0 %v745
        %v1029 = vpop.f32.mrb[0].mxu0
        %v1030 = vadd.f32 %v388, %v1029
        %v1031 = vpop.f32.mrb[0].mxu0
        %v1032 = vpop.f32.mrb[0].mxu0
        %v1033 = vadd.f32 %v388, %v1032
        %v1034 = vpop.f32.mrb[0].mxu0
        %1035 = vmatprep.mubr.bf16.mxu0 0
        %1036 = vmatmul.mubr.bf16.gmra.mrb[0].mxu0 %v748
        %v1037 = vpop.f32.mrb[0].mxu0
        %v1038 = vadd.f32 %v388, %v1037
        %v1039 = vpop.f32.mrb[0].mxu0
        %v1040 = vpop.f32.mrb[0].mxu0
        %v1041 = vadd.f32 %v388, %v1040
        %v1042 = vpop.f32.mrb[0].mxu0
        %1043 = vmatprep.mubr.bf16.mxu0 0
        %1044 = vmatmul.mubr.bf16.gmra.mrb[0].mxu0 %v751
        %v1045 = vpop.f32.mrb[0].mxu0
        %v1046 = vadd.f32 %v388, %v1045
        %v1047 = vpop.f32.mrb[0].mxu0
        %v1048 = vpop.f32.mrb[0].mxu0
        %v1049 = vadd.f32 %v388, %v1048
        %v1050 = vpop.f32.mrb[0].mxu0
        %1051 = vmatprep.mubr.bf16.mxu0 0
        %1052 = vmatmul.mubr.bf16.gmra.mrb[0].mxu0 %v754
        %v1053 = vpop.f32.mrb[0].mxu0
        %v1054 = vadd.f32 %v388, %v1053
        %v1055 = vpop.f32.mrb[0].mxu0
        %v1056 = vpop.f32.mrb[0].mxu0
        %v1057 = vadd.f32 %v388, %v1056
        %v1058 = vpop.f32.mrb[0].mxu0
        %1059 = vmatprep.mubr.bf16.mxu0 0
        %1060 = vmatmul.mubr.bf16.gmra.mrb[0].mxu0 %v757
        %v1061 = vpop.f32.mrb[0].mxu0
        %v1062 = vadd.f32 %v388, %v1061
        %v1063 = vpop.f32.mrb[0].mxu0
        %v1064 = vpop.f32.mrb[0].mxu0
        %v1065 = vadd.f32 %v388, %v1064
        %v1066 = vpop.f32.mrb[0].mxu0
        %1067 = vmatprep.mubr.bf16.mxu0 0
        %1068 = vmatmul.mubr.bf16.gmra.mrb[0].mxu0 %v760
        %v1069 = vpop.f32.mrb[0].mxu0
        %v1070 = vadd.f32 %v388, %v1069
        %v1071 = vpop.f32.mrb[0].mxu0
        %v1072 = vpop.f32.mrb[0].mxu0
        %v1073 = vadd.f32 %v388, %v1072
        %v1074 = vpop.f32.mrb[0].mxu0
        %1075 = vmatprep.mubr.bf16.mxu0 0
        %1076 = vmatmul.mubr.bf16.gmra.mrb[0].mxu0 %v763
        %v1077 = vpop.f32.mrb[0].mxu0
        %v1078 = vadd.f32 %v388, %v1077
        %v1079 = vpop.f32.mrb[0].mxu0
        %v1080 = vpop.f32.mrb[0].mxu0
        %v1081 = vadd.f32 %v388, %v1080
        %v1082 = vpop.f32.mrb[0].mxu0
        %1083 = vmatprep.mubr.bf16.mxu0 0
        %1084 = vmatmul.mubr.bf16.gmra.mrb[0].mxu0 %v766
        %v1085 = vpop.f32.mrb[0].mxu0
        %v1086 = vadd.f32 %v388, %v1085
        %v1087 = vpop.f32.mrb[0].mxu0
        %v1088 = vpop.f32.mrb[0].mxu0
        %v1089 = vadd.f32 %v388, %v1088
        %v1090 = vpop.f32.mrb[0].mxu0
        %1091 = vmatprep.mubr.bf16.mxu0 0
        %1092 = vmatmul.mubr.bf16.gmra.mrb[0].mxu0 %v769
        %v1093 = vpop.f32.mrb[0].mxu0
        %v1094 = vadd.f32 %v388, %v1093
        %v1095 = vpop.f32.mrb[0].mxu0
        %v1096 = vpop.f32.mrb[0].mxu0
        %v1097 = vadd.f32 %v388, %v1096
        %v1098 = vpop.f32.mrb[0].mxu0
        %1099 = vmatprep.mubr.bf16.mxu0 0
        %1100 = vmatmul.mubr.bf16.gmra.mrb[0].mxu0 %v772
        %v1101 = vpop.f32.mrb[0].mxu0
        %v1102 = vadd.f32 %v388, %v1101
        %v1103 = vpop.f32.mrb[0].mxu0
        %v1104 = vpop.f32.mrb[0].mxu0
        %v1105 = vadd.f32 %v388, %v1104
        %v1106 = vpop.f32.mrb[0].mxu0
        %1107 = vmatprep.mubr.bf16.mxu0 0
        %1108 = vmatmul.mubr.bf16.gmra.mrb[0].mxu0 %v775
        %v1109 = vpop.f32.mrb[0].mxu0
        %v1110 = vadd.f32 %v388, %v1109
        %v1111 = vpop.f32.mrb[0].mxu0
        %v1112 = vpop.f32.mrb[0].mxu0
        %v1113 = vadd.f32 %v388, %v1112
        %v1114 = vpop.f32.mrb[0].mxu0
        %1115 = vmatprep.mubr.bf16.mxu0 0
        %1116 = vmatmul.mubr.bf16.gmra.mrb[0].mxu0 %v778
        %v1117 = vpop.f32.mrb[0].mxu0
        %v1118 = vadd.f32 %v388, %v1117
        %v1119 = vpop.f32.mrb[0].mxu0
        %v1120 = vpop.f32.mrb[0].mxu0
        %v1121 = vadd.f32 %v388, %v1120
        %v1122 = vpop.f32.mrb[0].mxu0
        %1123 = vmatprep.mubr.bf16.mxu0 0
        %1124 = vmatmul.mubr.bf16.gmra.mrb[0].mxu0 %v781
        %v1125 = vpop.f32.mrb[0].mxu0
        %v1126 = vadd.f32 %v388, %v1125
        %v1127 = vpop.f32.mrb[0].mxu0
        %v1128 = vpop.f32.mrb[0].mxu0
        %v1129 = vadd.f32 %v388, %v1128
        %v1130 = vpop.f32.mrb[0].mxu0
        %1131 = vmatprep.mubr.bf16.mxu0 0
        %1132 = vmatmul.mubr.bf16.gmra.mrb[0].mxu0 %v784
        %v1133 = vpop.f32.mrb[0].mxu0
        %v1134 = vadd.f32 %v388, %v1133
        %v1135 = vpop.f32.mrb[0].mxu0
        %v1136 = vpop.f32.mrb[0].mxu0
        %v1137 = vadd.f32 %v388, %v1136
        %v1138 = vpop.f32.mrb[0].mxu0
        %1139 = vmatprep.mubr.bf16.mxu0 0
        %1140 = vmatmul.mubr.bf16.gmra.mrb[0].mxu0 %v787
        %v1141 = vpop.f32.mrb[0].mxu0
        %v1142 = vadd.f32 %v388, %v1141
        %v1143 = vpop.f32.mrb[0].mxu0
        %v1144 = vpop.f32.mrb[0].mxu0
        %v1145 = vadd.f32 %v388, %v1144
        %v1146 = vpop.f32.mrb[0].mxu0
        %1147 = vmatprep.mubr.bf16.mxu0 0
        %1148 = vmatmul.mubr.bf16.gmra.mrb[0].mxu0 %v790
        %v1149 = vpop.f32.mrb[0].mxu0
        %v1150 = vadd.f32 %v388, %v1149
        %v1151 = vpop.f32.mrb[0].mxu0
        %v1152 = vpop.f32.mrb[0].mxu0
        %v1153 = vadd.f32 %v388, %v1152
        %v1154 = vpop.f32.mrb[0].mxu0
        %1155 = vmatprep.mubr.bf16.mxu0 0
        %1156 = vmatmul.mubr.bf16.gmra.mrb[0].mxu0 %v793
        %v1157 = vpop.f32.mrb[0].mxu0
        %v1158 = vadd.f32 %v388, %v1157
        %v1159 = vpop.f32.mrb[0].mxu0
        %v1160 = vpop.f32.mrb[0].mxu0
        %v1161 = vadd.f32 %v388, %v1160
        %v1162 = vpop.f32.mrb[0].mxu0
        %1163 = vmatprep.mubr.bf16.mxu0 0
        %1164 = vmatmul.mubr.bf16.gmra.mrb[0].mxu0 %v796
        %v1165 = vpop.f32.mrb[0].mxu0
        %v1166 = vadd.f32 %v388, %v1165
        %v1167 = vpop.f32.mrb[0].mxu0
        %v1168 = vpop.f32.mrb[0].mxu0
        %v1169 = vadd.f32 %v388, %v1168
        %v1170 = vpop.f32.mrb[0].mxu0
        %1171 = vmatprep.mubr.bf16.mxu0 0
        %1172 = vmatmul.mubr.bf16.gmra.mrb[0].mxu0 %v799
        %v1173 = vpop.f32.mrb[0].mxu0
        %v1174 = vadd.f32 %v388, %v1173
        %v1175 = vpop.f32.mrb[0].mxu0
        %v1176 = vpop.f32.mrb[0].mxu0
        %v1177 = vadd.f32 %v388, %v1176
        %v1178 = vpop.f32.mrb[0].mxu0
        %1179 = vmatprep.mubr.bf16.mxu0 0
        %1180 = vmatmul.mubr.bf16.gmra.mrb[0].mxu0 %v802
        %v1181 = vpop.f32.mrb[0].mxu0
        %v1182 = vadd.f32 %v388, %v1181
        %v1183 = vpop.f32.mrb[0].mxu0
        %v1184 = vpop.f32.mrb[0].mxu0
        %v1185 = vadd.f32 %v388, %v1184
        %v1186 = vpop.f32.mrb[0].mxu0
        %1187 = vmatprep.mubr.bf16.mxu0 0
        %1188 = vmatmul.mubr.bf16.gmra.mrb[0].mxu0 %v805
        %v1189 = vpop.f32.mrb[0].mxu0
        %v1190 = vadd.f32 %v388, %v1189
        %v1191 = vpop.f32.mrb[0].mxu0
        %v1192 = vpop.f32.mrb[0].mxu0
        %v1193 = vadd.f32 %v388, %v1192
        %v1194 = vpop.f32.mrb[0].mxu0
        %1195 = vmatprep.mubr.bf16.mxu0 0
        %1196 = vmatmul.mubr.bf16.gmra.mrb[0].mxu0 %v808
        %v1197 = vpop.f32.mrb[0].mxu0
        %v1198 = vadd.f32 %v388, %v1197
        %v1199 = vpop.f32.mrb[0].mxu0
        %v1200 = vpop.f32.mrb[0].mxu0
        %v1201 = vadd.f32 %v388, %v1200
        %v1202 = vpop.f32.mrb[0].mxu0
        %1203 = vmatprep.mubr.bf16.mxu0 0
        %1204 = vmatmul.mubr.bf16.gmra.mrb[0].mxu0 %v811
        %v1205 = vpop.f32.mrb[0].mxu0
        %v1206 = vadd.f32 %v388, %v1205
        %v1207 = vpop.f32.mrb[0].mxu0
        %v1208 = vpop.f32.mrb[0].mxu0
        %v1209 = vadd.f32 %v388, %v1208
        %v1210 = vpop.f32.mrb[0].mxu0
        %1211 = vmatprep.mubr.bf16.mxu0 0
        %1212 = vmatmul.mubr.bf16.gmra.mrb[0].mxu0 %v814
        %v1213 = vpop.f32.mrb[0].mxu0
        %v1214 = vadd.f32 %v388, %v1213
        %v1215 = vpop.f32.mrb[0].mxu0
        %v1216 = vpop.f32.mrb[0].mxu0
        %v1217 = vadd.f32 %v388, %v1216
        %v1218 = vpop.f32.mrb[0].mxu0
        %1219 = vmatprep.mubr.bf16.mxu0 0
        %1220 = vmatmul.mubr.bf16.gmra.mrb[0].mxu0 %v817
        %v1221 = vpop.f32.mrb[0].mxu0
        %v1222 = vadd.f32 %v388, %v1221
        %v1223 = vpop.f32.mrb[0].mxu0
        %v1224 = vpop.f32.mrb[0].mxu0
        %v1225 = vadd.f32 %v388, %v1224
        %v1226 = vpop.f32.mrb[0].mxu0
        %1227 = vmatprep.mubr.bf16.mxu0 0
        %1228 = vmatmul.mubr.bf16.gmra.mrb[0].mxu0 %v820
        %v1229 = vpop.f32.mrb[0].mxu0
        %v1230 = vadd.f32 %v388, %v1229
        %v1231 = vpop.f32.mrb[0].mxu0
        %v1232 = vpop.f32.mrb[0].mxu0
        %v1233 = vadd.f32 %v388, %v1232
        %v1234 = vpop.f32.mrb[0].mxu0
        %1235 = vmatprep.mubr.bf16.mxu0 0
        %1236 = vmatmul.mubr.bf16.gmra.mrb[0].mxu0 %v823
        %v1237 = vpop.f32.mrb[0].mxu0
        %v1238 = vadd.f32 %v388, %v1237
        %v1239 = vpop.f32.mrb[0].mxu0
        %v1240 = vpop.f32.mrb[0].mxu0
        %v1241 = vadd.f32 %v388, %v1240
        %v1242 = vpop.f32.mrb[0].mxu0
        %1243 = vmatprep.mubr.bf16.mxu0 0
        %1244 = vmatmul.mubr.bf16.gmra.mrb[0].mxu0 %v826
        %v1245 = vpop.f32.mrb[0].mxu0
        %v1246 = vadd.f32 %v388, %v1245
        %v1247 = vpop.f32.mrb[0].mxu0
        %v1248 = vpop.f32.mrb[0].mxu0
        %v1249 = vadd.f32 %v388, %v1248
        %v1250 = vpop.f32.mrb[0].mxu0
        %1251 = vmatprep.mubr.bf16.mxu0 0
        %1252 = vmatmul.mubr.bf16.gmra.mrb[0].mxu0 %v829
        %v1253 = vpop.f32.mrb[0].mxu0
        %v1254 = vadd.f32 %v388, %v1253
        %v1255 = vpop.f32.mrb[0].mxu0
        %v1256 = vpop.f32.mrb[0].mxu0
        %v1257 = vadd.f32 %v388, %v1256
        %v1258 = vpop.f32.mrb[0].mxu0
        %1259 = vmatprep.mubr.bf16.mxu0 0
        %1260 = vmatmul.mubr.bf16.gmra.mrb[0].mxu0 %v832
        %v1261 = vpop.f32.mrb[0].mxu0
        %v1262 = vadd.f32 %v388, %v1261
        %v1263 = vpop.f32.mrb[0].mxu0
        %v1264 = vpop.f32.mrb[0].mxu0
        %v1265 = vadd.f32 %v388, %v1264
        %v1266 = vpop.f32.mrb[0].mxu0
        %1267 = vmatprep.mubr.bf16.mxu0 0
        %1268 = vmatmul.mubr.bf16.gmra.mrb[0].mxu0 %v835
        %v1269 = vpop.f32.mrb[0].mxu0
        %v1270 = vadd.f32 %v388, %v1269
        %v1271 = vpop.f32.mrb[0].mxu0
        %v1272 = vpop.f32.mrb[0].mxu0
        %v1273 = vadd.f32 %v388, %v1272
        %v1274 = vpop.f32.mrb[0].mxu0
        %1275 = vmatprep.mubr.bf16.mxu0 0
        %1276 = vmatmul.mubr.bf16.gmra.mrb[0].mxu0 %v838
        %v1277 = vpop.f32.mrb[0].mxu0
        %v1278 = vadd.f32 %v388, %v1277
        %v1279 = vpop.f32.mrb[0].mxu0
        %v1280 = vpop.f32.mrb[0].mxu0
        %v1281 = vadd.f32 %v388, %v1280
        %v1282 = vpop.f32.mrb[0].mxu0
        %1283 = vmatprep.mubr.bf16.mxu0 0
        %1284 = vmatmul.mubr.bf16.gmra.mrb[0].mxu0 %v841
        %v1285 = vpop.f32.mrb[0].mxu0
        %v1286 = vadd.f32 %v388, %v1285
        %v1287 = vpop.f32.mrb[0].mxu0
        %v1288 = vpop.f32.mrb[0].mxu0
        %v1289 = vadd.f32 %v388, %v1288
        %v1290 = vpop.f32.mrb[0].mxu0
        %1291 = vmatprep.mubr.bf16.mxu0 0
        %1292 = vmatmul.mubr.bf16.gmra.mrb[0].mxu0 %v844
        %v1293 = vpop.f32.mrb[0].mxu0
        %v1294 = vadd.f32 %v388, %v1293
        %v1295 = vpop.f32.mrb[0].mxu0
        %v1296 = vpop.f32.mrb[0].mxu0
        %v1297 = vadd.f32 %v388, %v1296
        %v1298 = vpop.f32.mrb[0].mxu0
        %1299 = vmatprep.mubr.bf16.mxu0 0
        %1300 = vmatmul.mubr.bf16.gmra.mrb[0].mxu0 %v847
        %v1301 = vpop.f32.mrb[0].mxu0
        %v1302 = vadd.f32 %v388, %v1301
        %v1303 = vpop.f32.mrb[0].mxu0
        %v1304 = vpop.f32.mrb[0].mxu0
        %v1305 = vadd.f32 %v388, %v1304
        %v1306 = vpop.f32.mrb[0].mxu0
        %1307 = vmatprep.mubr.bf16.mxu0 0
        %1308 = vmatmul.mubr.bf16.gmra.mrb[0].mxu0 %v850
        %v1309 = vpop.f32.mrb[0].mxu0
        %v1310 = vadd.f32 %v388, %v1309
        %v1311 = vpop.f32.mrb[0].mxu0
        %v1312 = vpop.f32.mrb[0].mxu0
        %v1313 = vadd.f32 %v388, %v1312
        %v1314 = vpop.f32.mrb[0].mxu0
        %1315 = vmatprep.mubr.bf16.mxu0 0
        %1316 = vmatmul.mubr.bf16.gmra.mrb[0].mxu0 %v853
        %v1317 = vpop.f32.mrb[0].mxu0
        %v1318 = vadd.f32 %v388, %v1317
        %v1319 = vpop.f32.mrb[0].mxu0
        %v1320 = vpop.f32.mrb[0].mxu0
        %v1321 = vadd.f32 %v388, %v1320
        %v1322 = vpop.f32.mrb[0].mxu0
        %1323 = vmatprep.mubr.bf16.mxu0 0
        %1324 = vmatmul.mubr.bf16.gmra.mrb[0].mxu0 %v856
        %v1325 = vpop.f32.mrb[0].mxu0
        %v1326 = vadd.f32 %v388, %v1325
        %v1327 = vpop.f32.mrb[0].mxu0
        %v1328 = vpop.f32.mrb[0].mxu0
        %v1329 = vadd.f32 %v388, %v1328
        %v1330 = vpop.f32.mrb[0].mxu0
        %1331 = vmatprep.mubr.bf16.mxu0 0
        %1332 = vmatmul.mubr.bf16.gmra.mrb[0].mxu0 %v859
        %v1333 = vpop.f32.mrb[0].mxu0
        %v1334 = vadd.f32 %v388, %v1333
        %v1335 = vpop.f32.mrb[0].mxu0
        %v1336 = vpop.f32.mrb[0].mxu0
        %v1337 = vadd.f32 %v388, %v1336
        %v1338 = vpop.f32.mrb[0].mxu0
        %1339 = vmatprep.mubr.bf16.mxu0 0
        %1340 = vmatmul.mubr.bf16.gmra.mrb[0].mxu0 %v862
        %v1341 = vpop.f32.mrb[0].mxu0
        %v1342 = vadd.f32 %v388, %v1341
        %v1343 = vpop.f32.mrb[0].mxu0
        %v1344 = vpop.f32.mrb[0].mxu0
        %v1345 = vadd.f32 %v388, %v1344
        %v1346 = vpop.f32.mrb[0].mxu0
        %1347 = vmatprep.mubr.bf16.mxu0 0
        %1348 = vmatmul.mubr.bf16.gmra.mrb[0].mxu0 %v865
        %v1349 = vpop.f32.mrb[0].mxu0
        %v1350 = vadd.f32 %v388, %v1349
        %v1351 = vpop.f32.mrb[0].mxu0
        %v1352 = vpop.f32.mrb[0].mxu0
        %v1353 = vadd.f32 %v388, %v1352
        %v1354 = vpop.f32.mrb[0].mxu0
        %1355 = vmatprep.mubr.bf16.mxu0 0
        %1356 = vmatmul.mubr.bf16.gmra.mrb[0].mxu0 %v868
        %v1357 = vpop.f32.mrb[0].mxu0
        %v1358 = vadd.f32 %v388, %v1357
        %v1359 = vpop.f32.mrb[0].mxu0
        %v1360 = vpop.f32.mrb[0].mxu0
        %v1361 = vadd.f32 %v388, %v1360
        %v1362 = vpop.f32.mrb[0].mxu0
        %1363 = vmatprep.mubr.bf16.mxu0 0
        %1364 = vmatmul.mubr.bf16.gmra.mrb[0].mxu0 %v871
        %v1365 = vpop.f32.mrb[0].mxu0
        %v1366 = vadd.f32 %v388, %v1365
        %v1367 = vpop.f32.mrb[0].mxu0
        %v1368 = vpop.f32.mrb[0].mxu0
        %v1369 = vadd.f32 %v388, %v1368
        %v1370 = vpop.f32.mrb[0].mxu0
        %1371 = vmatprep.mubr.bf16.mxu0 0
        %1372 = vmatmul.mubr.bf16.gmra.mrb[0].mxu0 %v874
        %v1373 = vpop.f32.mrb[0].mxu0
        %v1374 = vadd.f32 %v388, %v1373
        %v1375 = vpop.f32.mrb[0].mxu0
        %v1376 = vpop.f32.mrb[0].mxu0
        %v1377 = vadd.f32 %v388, %v1376
        %v1378 = vpop.f32.mrb[0].mxu0
        %1379 = vmatprep.mubr.bf16.mxu0 0
        %1380 = vmatmul.mubr.bf16.gmra.mrb[0].mxu0 %v877
        %v1381 = vpop.f32.mrb[0].mxu0
        %v1382 = vadd.f32 %v388, %v1381
        %v1383 = vpop.f32.mrb[0].mxu0
        %v1384 = vpop.f32.mrb[0].mxu0
        %v1385 = vadd.f32 %v388, %v1384
        %v1386 = vpop.f32.mrb[0].mxu0
        %1387 = vmatprep.mubr.bf16.mxu0 0
        %1388 = vmatmul.mubr.bf16.gmra.mrb[0].mxu0 %v880
        %v1389 = vpop.f32.mrb[0].mxu0
        %v1390 = vadd.f32 %v388, %v1389
        %v1391 = vpop.f32.mrb[0].mxu0
        %v1392 = vpop.f32.mrb[0].mxu0
        %v1393 = vadd.f32 %v388, %v1392
        %v1394 = vpop.f32.mrb[0].mxu0
        %1395 = vmatprep.mubr.bf16.mxu0 0
        %1396 = vmatmul.mubr.bf16.gmra.mrb[0].mxu0 %v883
        %v1397 = vpop.f32.mrb[0].mxu0
        %v1398 = vadd.f32 %v388, %v1397
        %v1399 = vpop.f32.mrb[0].mxu0
        %v1400 = vpop.f32.mrb[0].mxu0
        %v1401 = vadd.f32 %v388, %v1400
        %v1402 = vpop.f32.mrb[0].mxu0
        %1403 = vmatprep.mubr.bf16.mxu0 0
        %1404 = vmatmul.mubr.bf16.gmra.mrb[0].mxu0 %v886
        %v1405 = vpop.f32.mrb[0].mxu0
        %v1406 = vadd.f32 %v388, %v1405
        %v1407 = vpop.f32.mrb[0].mxu0
        %v1408 = vpop.f32.mrb[0].mxu0
        %v1409 = vadd.f32 %v388, %v1408
        %v1410 = vpop.f32.mrb[0].mxu0
        %1411 = vmatprep.mubr.bf16.mxu0 0
        %1412 = vmatmul.mubr.bf16.gmra.mrb[0].mxu0 %v889
        %v1413 = vpop.f32.mrb[0].mxu0
        %v1414 = vadd.f32 %v388, %v1413
        %v1415 = vpop.f32.mrb[0].mxu0
        %v1416 = vpop.f32.mrb[0].mxu0
        %v1417 = vadd.f32 %v388, %v1416
        %v1418 = vpop.f32.mrb[0].mxu0
        %1419 = vmatprep.mubr.bf16.mxu0 0
        %1420 = vmatmul.mubr.bf16.gmra.mrb[0].mxu0 %v892
        %v1421 = vpop.f32.mrb[0].mxu0
        %v1422 = vadd.f32 %v388, %v1421
        %v1423 = vpop.f32.mrb[0].mxu0
        %v1424 = vpop.f32.mrb[0].mxu0
        %v1425 = vadd.f32 %v388, %v1424
        %v1426 = vpop.f32.mrb[0].mxu0
        %1427 = vmatprep.mubr.bf16.mxu0 0
        %1428 = vmatmul.mubr.bf16.gmra.mrb[0].mxu0 %v895
        %v1429 = vpop.f32.mrb[0].mxu0
        %v1430 = vadd.f32 %v388, %v1429
        %v1431 = vpop.f32.mrb[0].mxu0
        %v1432 = vpop.f32.mrb[0].mxu0
        %v1433 = vadd.f32 %v388, %v1432
        %v1434 = vpop.f32.mrb[0].mxu0
        %1435 = vmatprep.mubr.bf16.mxu0 0
        %1436 = vmatmul.mubr.bf16.gmra.mrb[0].mxu0 %v898
        %v1437 = vpop.f32.mrb[0].mxu0
        %v1438 = vadd.f32 %v388, %v1437
        %v1439 = vpop.f32.mrb[0].mxu0
        %v1440 = vpop.f32.mrb[0].mxu0
        %v1441 = vadd.f32 %v388, %v1440
        %v1442 = vpop.f32.mrb[0].mxu0
        %1443 = vmatprep.mubr.bf16.mxu0 0
        %1444 = vmatmul.mubr.bf16.gmra.mrb[0].mxu0 %v901
        %v1445 = vpop.f32.mrb[0].mxu0
        %v1446 = vadd.f32 %v388, %v1445
        %v1447 = vpop.f32.mrb[0].mxu0
        %v1448 = vpop.f32.mrb[0].mxu0
        %v1449 = vadd.f32 %v388, %v1448
        %v1450 = vpop.f32.mrb[0].mxu0
        %1451 = vdwg.mxu0
        %v1452 = vmax.f32 %v942, 0.0
        %v1453 = vmax.f32 %v945, 0.0
        %v1454 = vmax.f32 %v950, 0.0
        %v1455 = vmax.f32 %v953, 0.0
        %v1456 = vmax.f32 %v958, 0.0
        %v1457 = vmax.f32 %v961, 0.0
        %v1458 = vmax.f32 %v966, 0.0
        %v1459 = vmax.f32 %v969, 0.0
        %v1460 = vmax.f32 %v974, 0.0
        %v1461 = vmax.f32 %v977, 0.0
        %v1462 = vmax.f32 %v982, 0.0
        %v1463 = vmax.f32 %v985, 0.0
        %v1464 = vmax.f32 %v990, 0.0
        %v1465 = vmax.f32 %v993, 0.0
        %v1466 = vmax.f32 %v998, 0.0
        %v1467 = vmax.f32 %v1001, 0.0
        %v1468 = vmax.f32 %v1006, 0.0
        %v1469 = vmax.f32 %v1009, 0.0
        %v1470 = vmax.f32 %v1014, 0.0
        %v1471 = vmax.f32 %v1017, 0.0
        %v1472 = vmax.f32 %v1022, 0.0
        %v1473 = vmax.f32 %v1025, 0.0
        %v1474 = vmax.f32 %v1030, 0.0
        %v1475 = vmax.f32 %v1033, 0.0
        %v1476 = vmax.f32 %v1038, 0.0
        %v1477 = vmax.f32 %v1041, 0.0
        %v1478 = vmax.f32 %v1046, 0.0
        %v1479 = vmax.f32 %v1049, 0.0
        %v1480 = vmax.f32 %v1054, 0.0
        %v1481 = vmax.f32 %v1057, 0.0
        %v1482 = vmax.f32 %v1062, 0.0
        %v1483 = vmax.f32 %v1065, 0.0
        %v1484 = vmax.f32 %v1070, 0.0
        %v1485 = vmax.f32 %v1073, 0.0
        %v1486 = vmax.f32 %v1078, 0.0
        %v1487 = vmax.f32 %v1081, 0.0
        %v1488 = vmax.f32 %v1086, 0.0
        %v1489 = vmax.f32 %v1089, 0.0
        %v1490 = vmax.f32 %v1094, 0.0
        %v1491 = vmax.f32 %v1097, 0.0
        %v1492 = vmax.f32 %v1102, 0.0
        %v1493 = vmax.f32 %v1105, 0.0
        %v1494 = vmax.f32 %v1110, 0.0
        %v1495 = vmax.f32 %v1113, 0.0
        %v1496 = vmax.f32 %v1118, 0.0
        %v1497 = vmax.f32 %v1121, 0.0
        %v1498 = vmax.f32 %v1126, 0.0
        %v1499 = vmax.f32 %v1129, 0.0
        %v1500 = vmax.f32 %v1134, 0.0
        %v1501 = vmax.f32 %v1137, 0.0
        %v1502 = vmax.f32 %v1142, 0.0
        %v1503 = vmax.f32 %v1145, 0.0
        %v1504 = vmax.f32 %v1150, 0.0
        %v1505 = vmax.f32 %v1153, 0.0
        %v1506 = vmax.f32 %v1158, 0.0
        %v1507 = vmax.f32 %v1161, 0.0
        %v1508 = vmax.f32 %v1166, 0.0
        %v1509 = vmax.f32 %v1169, 0.0
        %v1510 = vmax.f32 %v1174, 0.0
        %v1511 = vmax.f32 %v1177, 0.0
        %v1512 = vmax.f32 %v1182, 0.0
        %v1513 = vmax.f32 %v1185, 0.0
        %v1514 = vmax.f32 %v1190, 0.0
        %v1515 = vmax.f32 %v1193, 0.0
        %v1516 = vmax.f32 %v1198, 0.0
        %v1517 = vmax.f32 %v1201, 0.0
        %v1518 = vmax.f32 %v1206, 0.0
        %v1519 = vmax.f32 %v1209, 0.0
        %v1520 = vmax.f32 %v1214, 0.0
        %v1521 = vmax.f32 %v1217, 0.0
        %v1522 = vmax.f32 %v1222, 0.0
        %v1523 = vmax.f32 %v1225, 0.0
        %v1524 = vmax.f32 %v1230, 0.0
        %v1525 = vmax.f32 %v1233, 0.0
        %v1526 = vmax.f32 %v1238, 0.0
        %v1527 = vmax.f32 %v1241, 0.0
        %v1528 = vmax.f32 %v1246, 0.0
        %v1529 = vmax.f32 %v1249, 0.0
        %v1530 = vmax.f32 %v1254, 0.0
        %v1531 = vmax.f32 %v1257, 0.0
        %v1532 = vmax.f32 %v1262, 0.0
        %v1533 = vmax.f32 %v1265, 0.0
        %v1534 = vmax.f32 %v1270, 0.0
        %v1535 = vmax.f32 %v1273, 0.0
        %v1536 = vmax.f32 %v1278, 0.0
        %v1537 = vmax.f32 %v1281, 0.0
        %v1538 = vmax.f32 %v1286, 0.0
        %v1539 = vmax.f32 %v1289, 0.0
        %v1540 = vmax.f32 %v1294, 0.0
        %v1541 = vmax.f32 %v1297, 0.0
        %v1542 = vmax.f32 %v1302, 0.0
        %v1543 = vmax.f32 %v1305, 0.0
        %v1544 = vmax.f32 %v1310, 0.0
        %v1545 = vmax.f32 %v1313, 0.0
        %v1546 = vmax.f32 %v1318, 0.0
        %v1547 = vmax.f32 %v1321, 0.0
        %v1548 = vmax.f32 %v1326, 0.0
        %v1549 = vmax.f32 %v1329, 0.0
        %v1550 = vmax.f32 %v1334, 0.0
        %v1551 = vmax.f32 %v1337, 0.0
        %v1552 = vmax.f32 %v1342, 0.0
        %v1553 = vmax.f32 %v1345, 0.0
        %v1554 = vmax.f32 %v1350, 0.0
        %v1555 = vmax.f32 %v1353, 0.0
        %v1556 = vmax.f32 %v1358, 0.0
        %v1557 = vmax.f32 %v1361, 0.0
        %v1558 = vmax.f32 %v1366, 0.0
        %v1559 = vmax.f32 %v1369, 0.0
        %v1560 = vmax.f32 %v1374, 0.0
        %v1561 = vmax.f32 %v1377, 0.0
        %v1562 = vmax.f32 %v1382, 0.0
        %v1563 = vmax.f32 %v1385, 0.0
        %v1564 = vmax.f32 %v1390, 0.0
        %v1565 = vmax.f32 %v1393, 0.0
        %v1566 = vmax.f32 %v1398, 0.0
        %v1567 = vmax.f32 %v1401, 0.0
        %v1568 = vmax.f32 %v1406, 0.0
        %v1569 = vmax.f32 %v1409, 0.0
        %v1570 = vmax.f32 %v1414, 0.0
        %v1571 = vmax.f32 %v1417, 0.0
        %v1572 = vmax.f32 %v1422, 0.0
        %v1573 = vmax.f32 %v1425, 0.0
        %v1574 = vmax.f32 %v1430, 0.0
        %v1575 = vmax.f32 %v1433, 0.0
        %v1576 = vmax.f32 %v1438, 0.0
        %v1577 = vmax.f32 %v1441, 0.0
        %v1578 = vmax.f32 %v1446, 0.0
        %v1579 = vmax.f32 %v1449, 0.0
        %v1580 = vpack.c.bf16 %v1453, %v1452
        %v1581 = vpack.c.bf16 %v1455, %v1454
        %v1582 = vpack.c.bf16 %v1457, %v1456
        %v1583 = vpack.c.bf16 %v1459, %v1458
        %v1584 = vpack.c.bf16 %v1461, %v1460
        %v1585 = vpack.c.bf16 %v1463, %v1462
        %v1586 = vpack.c.bf16 %v1465, %v1464
        %v1587 = vpack.c.bf16 %v1467, %v1466
        %v1588 = vpack.c.bf16 %v1469, %v1468
        %v1589 = vpack.c.bf16 %v1471, %v1470
        %v1590 = vpack.c.bf16 %v1473, %v1472
        %v1591 = vpack.c.bf16 %v1475, %v1474
        %v1592 = vpack.c.bf16 %v1477, %v1476
        %v1593 = vpack.c.bf16 %v1479, %v1478
        %v1594 = vpack.c.bf16 %v1481, %v1480
        %v1595 = vpack.c.bf16 %v1483, %v1482
        %v1596 = vpack.c.bf16 %v1485, %v1484
        %v1597 = vpack.c.bf16 %v1487, %v1486
        %v1598 = vpack.c.bf16 %v1489, %v1488
        %v1599 = vpack.c.bf16 %v1491, %v1490
        %v1600 = vpack.c.bf16 %v1493, %v1492
        %v1601 = vpack.c.bf16 %v1495, %v1494
        %v1602 = vpack.c.bf16 %v1497, %v1496
        %v1603 = vpack.c.bf16 %v1499, %v1498
        %v1604 = vpack.c.bf16 %v1501, %v1500
        %v1605 = vpack.c.bf16 %v1503, %v1502
        %v1606 = vpack.c.bf16 %v1505, %v1504
        %v1607 = vpack.c.bf16 %v1507, %v1506
        %v1608 = vpack.c.bf16 %v1509, %v1508
        %v1609 = vpack.c.bf16 %v1511, %v1510
        %v1610 = vpack.c.bf16 %v1513, %v1512
        %v1611 = vpack.c.bf16 %v1515, %v1514
        %v1612 = vpack.c.bf16 %v1517, %v1516
        %v1613 = vpack.c.bf16 %v1519, %v1518
        %v1614 = vpack.c.bf16 %v1521, %v1520
        %v1615 = vpack.c.bf16 %v1523, %v1522
        %v1616 = vpack.c.bf16 %v1525, %v1524
        %v1617 = vpack.c.bf16 %v1527, %v1526
        %v1618 = vpack.c.bf16 %v1529, %v1528
        %v1619 = vpack.c.bf16 %v1531, %v1530
        %v1620 = vpack.c.bf16 %v1533, %v1532
        %v1621 = vpack.c.bf16 %v1535, %v1534
        %v1622 = vpack.c.bf16 %v1537, %v1536
        %v1623 = vpack.c.bf16 %v1539, %v1538
        %v1624 = vpack.c.bf16 %v1541, %v1540
        %v1625 = vpack.c.bf16 %v1543, %v1542
        %v1626 = vpack.c.bf16 %v1545, %v1544
        %v1627 = vpack.c.bf16 %v1547, %v1546
        %v1628 = vpack.c.bf16 %v1549, %v1548
        %v1629 = vpack.c.bf16 %v1551, %v1550
        %v1630 = vpack.c.bf16 %v1553, %v1552
        %v1631 = vpack.c.bf16 %v1555, %v1554
        %v1632 = vpack.c.bf16 %v1557, %v1556
        %v1633 = vpack.c.bf16 %v1559, %v1558
        %v1634 = vpack.c.bf16 %v1561, %v1560
        %v1635 = vpack.c.bf16 %v1563, %v1562
        %v1636 = vpack.c.bf16 %v1565, %v1564
        %v1637 = vpack.c.bf16 %v1567, %v1566
        %v1638 = vpack.c.bf16 %v1569, %v1568
        %v1639 = vpack.c.bf16 %v1571, %v1570
        %v1640 = vpack.c.bf16 %v1573, %v1572
        %v1641 = vpack.c.bf16 %v1575, %v1574
        %v1642 = vpack.c.bf16 %v1577, %v1576
        %v1643 = vpack.c.bf16 %v1579, %v1578
        %v1644 = vld [vmem:[%s3] sm:$0xf]
        %v1645 = vld [vmem:[%s3 + $0x4] sm:$0xf]
        %v1646 = vld [vmem:[%s4] sm:$0x1]
        %v1648 = vlaneseq
        %v1649 = vshrl.u32 %v1648, 7
        %v1650 = vsub.s32 0, %v1649
        %v1651 = vrot.slane %v1646, %v1650
        %v1655 = vunpack.c.l.b16 %v1644
        %v1656 = vunpack.c.l.b16 %v1645
        %v1657 = vpack.c.b16 %v1656, %v1655
        %vm1659 = vcmask 130048
        %v1661 = vsel %vm1659, %v1580, 0
        %v1664 = vsel %vm1659, %v1581, 0
        %v1667 = vsel %vm1659, %v1582, 0
        %v1670 = vsel %vm1659, %v1583, 0
        %v1673 = vsel %vm1659, %v1584, 0
        %v1676 = vsel %vm1659, %v1585, 0
        %v1679 = vsel %vm1659, %v1586, 0
        %v1682 = vsel %vm1659, %v1587, 0
        %v1685 = vsel %vm1659, %v1588, 0
        %v1688 = vsel %vm1659, %v1589, 0
        %v1691 = vsel %vm1659, %v1590, 0
        %v1694 = vsel %vm1659, %v1591, 0
        %v1697 = vsel %vm1659, %v1592, 0
        %v1700 = vsel %vm1659, %v1593, 0
        %v1703 = vsel %vm1659, %v1594, 0
        %v1706 = vsel %vm1659, %v1595, 0
        %v1709 = vsel %vm1659, %v1596, 0
        %v1712 = vsel %vm1659, %v1597, 0
        %v1715 = vsel %vm1659, %v1598, 0
        %v1718 = vsel %vm1659, %v1599, 0
        %v1721 = vsel %vm1659, %v1600, 0
        %v1724 = vsel %vm1659, %v1601, 0
        %v1727 = vsel %vm1659, %v1602, 0
        %v1730 = vsel %vm1659, %v1603, 0
        %v1733 = vsel %vm1659, %v1604, 0
        %v1736 = vsel %vm1659, %v1605, 0
        %v1739 = vsel %vm1659, %v1606, 0
        %v1742 = vsel %vm1659, %v1607, 0
        %v1745 = vsel %vm1659, %v1608, 0
        %v1748 = vsel %vm1659, %v1609, 0
        %v1751 = vsel %vm1659, %v1610, 0
        %v1754 = vsel %vm1659, %v1611, 0
        %v1757 = vsel %vm1659, %v1612, 0
        %v1760 = vsel %vm1659, %v1613, 0
        %v1763 = vsel %vm1659, %v1614, 0
        %v1766 = vsel %vm1659, %v1615, 0
        %v1769 = vsel %vm1659, %v1616, 0
        %v1772 = vsel %vm1659, %v1617, 0
        %v1775 = vsel %vm1659, %v1618, 0
        %v1778 = vsel %vm1659, %v1619, 0
        %v1781 = vsel %vm1659, %v1620, 0
        %v1784 = vsel %vm1659, %v1621, 0
        %v1787 = vsel %vm1659, %v1622, 0
        %v1790 = vsel %vm1659, %v1623, 0
        %v1793 = vsel %vm1659, %v1624, 0
        %v1796 = vsel %vm1659, %v1625, 0
        %v1799 = vsel %vm1659, %v1626, 0
        %v1802 = vsel %vm1659, %v1627, 0
        %v1805 = vsel %vm1659, %v1628, 0
        %v1808 = vsel %vm1659, %v1629, 0
        %v1811 = vsel %vm1659, %v1630, 0
        %v1814 = vsel %vm1659, %v1631, 0
        %v1817 = vsel %vm1659, %v1632, 0
        %v1820 = vsel %vm1659, %v1633, 0
        %v1823 = vsel %vm1659, %v1634, 0
        %v1826 = vsel %vm1659, %v1635, 0
        %v1829 = vsel %vm1659, %v1636, 0
        %v1832 = vsel %vm1659, %v1637, 0
        %v1835 = vsel %vm1659, %v1638, 0
        %v1838 = vsel %vm1659, %v1639, 0
        %v1841 = vsel %vm1659, %v1640, 0
        %v1844 = vsel %vm1659, %v1641, 0
        %v1847 = vsel %vm1659, %v1642, 0
        %v1850 = vsel %vm1659, %v1643, 0
        %1852 = vmatprep.subr.bf16.mxu0 0
        %1853 = vmatpush1.bf16.msra.mxu0 %v1657
        %1854 = vmatprep.subr.bf16.mxu0 0
        %1855 = vmatpush1.bf16.msra.mxu0 0
        %1856 = vmatprep.subr.bf16.mxu0 0
        %1857 = vmatpush1.bf16.msra.mxu0 0
        %1858 = vmatprep.subr.bf16.mxu0 0
        %1859 = vmatpush1.bf16.msra.mxu0 0
        %1860 = vmatprep.subr.bf16.mxu0 0
        %1861 = vmatpush1.bf16.msra.mxu0 0
        %1862 = vmatprep.subr.bf16.mxu0 0
        %1863 = vmatpush1.bf16.msra.mxu0 0
        %1864 = vmatprep.subr.bf16.mxu0 0
        %1865 = vmatpush1.bf16.msra.mxu0 0
        %1866 = vmatprep.subr.bf16.mxu0 0
        %1867 = vmatpush1.bf16.msra.mxu0 0
        %1868 = vmatprep.subr.bf16.mxu0 0
        %1869 = vmatpush1.bf16.msra.mxu0 0
        %1870 = vmatprep.subr.bf16.mxu0 0
        %1871 = vmatpush1.bf16.msra.mxu0 0
        %1872 = vmatprep.subr.bf16.mxu0 0
        %1873 = vmatpush1.bf16.msra.mxu0 0
        %1874 = vmatprep.subr.bf16.mxu0 0
        %1875 = vmatpush1.bf16.msra.mxu0 0
        %1876 = vmatprep.subr.bf16.mxu0 0
        %1877 = vmatpush1.bf16.msra.mxu0 0
        %1878 = vmatprep.subr.bf16.mxu0 0
        %1879 = vmatpush1.bf16.msra.mxu0 0
        %1880 = vmatprep.subr.bf16.mxu0 0
        %1881 = vmatpush1.bf16.msra.mxu0 0
        %1882 = vmatprep.subr.bf16.mxu0 0
        %1883 = vmatpush1.bf16.msra.mxu0 0
        %1884 = vmatprep.mubr.bf16.mxu0 0
        %1885 = vmatmul.mubr.bf16.gmra.mrb[0].mxu0 %v1661
        %v1886 = vpop.f32.mrb[0].mxu0
        %v1887 = vadd.f32 %v1651, %v1886
        %v1888 = vpop.f32.mrb[0].mxu0
        %v1889 = vpop.f32.mrb[0].mxu0
        %v1890 = vadd.f32 %v1651, %v1889
        %v1891 = vpop.f32.mrb[0].mxu0
        %1892 = vmatprep.mubr.bf16.mxu0 0
        %1893 = vmatmul.mubr.bf16.gmra.mrb[0].mxu0 %v1664
        %v1894 = vpop.f32.mrb[0].mxu0
        %v1895 = vadd.f32 %v1651, %v1894
        %v1896 = vpop.f32.mrb[0].mxu0
        %v1897 = vpop.f32.mrb[0].mxu0
        %v1898 = vadd.f32 %v1651, %v1897
        %v1899 = vpop.f32.mrb[0].mxu0
        %1900 = vmatprep.mubr.bf16.mxu0 0
        %1901 = vmatmul.mubr.bf16.gmra.mrb[0].mxu0 %v1667
        %v1902 = vpop.f32.mrb[0].mxu0
        %v1903 = vadd.f32 %v1651, %v1902
        %v1904 = vpop.f32.mrb[0].mxu0
        %v1905 = vpop.f32.mrb[0].mxu0
        %v1906 = vadd.f32 %v1651, %v1905
        %v1907 = vpop.f32.mrb[0].mxu0
        %1908 = vmatprep.mubr.bf16.mxu0 0
        %1909 = vmatmul.mubr.bf16.gmra.mrb[0].mxu0 %v1670
        %v1910 = vpop.f32.mrb[0].mxu0
        %v1911 = vadd.f32 %v1651, %v1910
        %v1912 = vpop.f32.mrb[0].mxu0
        %v1913 = vpop.f32.mrb[0].mxu0
        %v1914 = vadd.f32 %v1651, %v1913
        %v1915 = vpop.f32.mrb[0].mxu0
        %1916 = vmatprep.mubr.bf16.mxu0 0
        %1917 = vmatmul.mubr.bf16.gmra.mrb[0].mxu0 %v1673
        %v1918 = vpop.f32.mrb[0].mxu0
        %v1919 = vadd.f32 %v1651, %v1918
        %v1920 = vpop.f32.mrb[0].mxu0
        %v1921 = vpop.f32.mrb[0].mxu0
        %v1922 = vadd.f32 %v1651, %v1921
        %v1923 = vpop.f32.mrb[0].mxu0
        %1924 = vmatprep.mubr.bf16.mxu0 0
        %1925 = vmatmul.mubr.bf16.gmra.mrb[0].mxu0 %v1676
        %v1926 = vpop.f32.mrb[0].mxu0
        %v1927 = vadd.f32 %v1651, %v1926
        %v1928 = vpop.f32.mrb[0].mxu0
        %v1929 = vpop.f32.mrb[0].mxu0
        %v1930 = vadd.f32 %v1651, %v1929
        %v1931 = vpop.f32.mrb[0].mxu0
        %1932 = vmatprep.mubr.bf16.mxu0 0
        %1933 = vmatmul.mubr.bf16.gmra.mrb[0].mxu0 %v1679
        %v1934 = vpop.f32.mrb[0].mxu0
        %v1935 = vadd.f32 %v1651, %v1934
        %v1936 = vpop.f32.mrb[0].mxu0
        %v1937 = vpop.f32.mrb[0].mxu0
        %v1938 = vadd.f32 %v1651, %v1937
        %v1939 = vpop.f32.mrb[0].mxu0
        %1940 = vmatprep.mubr.bf16.mxu0 0
        %1941 = vmatmul.mubr.bf16.gmra.mrb[0].mxu0 %v1682
        %v1942 = vpop.f32.mrb[0].mxu0
        %v1943 = vadd.f32 %v1651, %v1942
        %v1944 = vpop.f32.mrb[0].mxu0
        %v1945 = vpop.f32.mrb[0].mxu0
        %v1946 = vadd.f32 %v1651, %v1945
        %v1947 = vpop.f32.mrb[0].mxu0
        %1948 = vmatprep.mubr.bf16.mxu0 0
        %1949 = vmatmul.mubr.bf16.gmra.mrb[0].mxu0 %v1685
        %v1950 = vpop.f32.mrb[0].mxu0
        %v1951 = vadd.f32 %v1651, %v1950
        %v1952 = vpop.f32.mrb[0].mxu0
        %v1953 = vpop.f32.mrb[0].mxu0
        %v1954 = vadd.f32 %v1651, %v1953
        %v1955 = vpop.f32.mrb[0].mxu0
        %1956 = vmatprep.mubr.bf16.mxu0 0
        %1957 = vmatmul.mubr.bf16.gmra.mrb[0].mxu0 %v1688
        %v1958 = vpop.f32.mrb[0].mxu0
        %v1959 = vadd.f32 %v1651, %v1958
        %v1960 = vpop.f32.mrb[0].mxu0
        %v1961 = vpop.f32.mrb[0].mxu0
        %v1962 = vadd.f32 %v1651, %v1961
        %v1963 = vpop.f32.mrb[0].mxu0
        %1964 = vmatprep.mubr.bf16.mxu0 0
        %1965 = vmatmul.mubr.bf16.gmra.mrb[0].mxu0 %v1691
        %v1966 = vpop.f32.mrb[0].mxu0
        %v1967 = vadd.f32 %v1651, %v1966
        %v1968 = vpop.f32.mrb[0].mxu0
        %v1969 = vpop.f32.mrb[0].mxu0
        %v1970 = vadd.f32 %v1651, %v1969
        %v1971 = vpop.f32.mrb[0].mxu0
        %1972 = vmatprep.mubr.bf16.mxu0 0
        %1973 = vmatmul.mubr.bf16.gmra.mrb[0].mxu0 %v1694
        %v1974 = vpop.f32.mrb[0].mxu0
        %v1975 = vadd.f32 %v1651, %v1974
        %v1976 = vpop.f32.mrb[0].mxu0
        %v1977 = vpop.f32.mrb[0].mxu0
        %v1978 = vadd.f32 %v1651, %v1977
        %v1979 = vpop.f32.mrb[0].mxu0
        %1980 = vmatprep.mubr.bf16.mxu0 0
        %1981 = vmatmul.mubr.bf16.gmra.mrb[0].mxu0 %v1697
        %v1982 = vpop.f32.mrb[0].mxu0
        %v1983 = vadd.f32 %v1651, %v1982
        %v1984 = vpop.f32.mrb[0].mxu0
        %v1985 = vpop.f32.mrb[0].mxu0
        %v1986 = vadd.f32 %v1651, %v1985
        %v1987 = vpop.f32.mrb[0].mxu0
        %1988 = vmatprep.mubr.bf16.mxu0 0
        %1989 = vmatmul.mubr.bf16.gmra.mrb[0].mxu0 %v1700
        %v1990 = vpop.f32.mrb[0].mxu0
        %v1991 = vadd.f32 %v1651, %v1990
        %v1992 = vpop.f32.mrb[0].mxu0
        %v1993 = vpop.f32.mrb[0].mxu0
        %v1994 = vadd.f32 %v1651, %v1993
        %v1995 = vpop.f32.mrb[0].mxu0
        %1996 = vmatprep.mubr.bf16.mxu0 0
        %1997 = vmatmul.mubr.bf16.gmra.mrb[0].mxu0 %v1703
        %v1998 = vpop.f32.mrb[0].mxu0
        %v1999 = vadd.f32 %v1651, %v1998
        %v2000 = vpop.f32.mrb[0].mxu0
        %v2001 = vpop.f32.mrb[0].mxu0
        %v2002 = vadd.f32 %v1651, %v2001
        %v2003 = vpop.f32.mrb[0].mxu0
        %2004 = vmatprep.mubr.bf16.mxu0 0
        %2005 = vmatmul.mubr.bf16.gmra.mrb[0].mxu0 %v1706
        %v2006 = vpop.f32.mrb[0].mxu0
        %v2007 = vadd.f32 %v1651, %v2006
        %v2008 = vpop.f32.mrb[0].mxu0
        %v2009 = vpop.f32.mrb[0].mxu0
        %v2010 = vadd.f32 %v1651, %v2009
        %v2011 = vpop.f32.mrb[0].mxu0
        %2012 = vmatprep.mubr.bf16.mxu0 0
        %2013 = vmatmul.mubr.bf16.gmra.mrb[0].mxu0 %v1709
        %v2014 = vpop.f32.mrb[0].mxu0
        %v2015 = vadd.f32 %v1651, %v2014
        %v2016 = vpop.f32.mrb[0].mxu0
        %v2017 = vpop.f32.mrb[0].mxu0
        %v2018 = vadd.f32 %v1651, %v2017
        %v2019 = vpop.f32.mrb[0].mxu0
        %2020 = vmatprep.mubr.bf16.mxu0 0
        %2021 = vmatmul.mubr.bf16.gmra.mrb[0].mxu0 %v1712
        %v2022 = vpop.f32.mrb[0].mxu0
        %v2023 = vadd.f32 %v1651, %v2022
        %v2024 = vpop.f32.mrb[0].mxu0
        %v2025 = vpop.f32.mrb[0].mxu0
        %v2026 = vadd.f32 %v1651, %v2025
        %v2027 = vpop.f32.mrb[0].mxu0
        %2028 = vmatprep.mubr.bf16.mxu0 0
        %2029 = vmatmul.mubr.bf16.gmra.mrb[0].mxu0 %v1715
        %v2030 = vpop.f32.mrb[0].mxu0
        %v2031 = vadd.f32 %v1651, %v2030
        %v2032 = vpop.f32.mrb[0].mxu0
        %v2033 = vpop.f32.mrb[0].mxu0
        %v2034 = vadd.f32 %v1651, %v2033
        %v2035 = vpop.f32.mrb[0].mxu0
        %2036 = vmatprep.mubr.bf16.mxu0 0
        %2037 = vmatmul.mubr.bf16.gmra.mrb[0].mxu0 %v1718
        %v2038 = vpop.f32.mrb[0].mxu0
        %v2039 = vadd.f32 %v1651, %v2038
        %v2040 = vpop.f32.mrb[0].mxu0
        %v2041 = vpop.f32.mrb[0].mxu0
        %v2042 = vadd.f32 %v1651, %v2041
        %v2043 = vpop.f32.mrb[0].mxu0
        %2044 = vmatprep.mubr.bf16.mxu0 0
        %2045 = vmatmul.mubr.bf16.gmra.mrb[0].mxu0 %v1721
        %v2046 = vpop.f32.mrb[0].mxu0
        %v2047 = vadd.f32 %v1651, %v2046
        %v2048 = vpop.f32.mrb[0].mxu0
        %v2049 = vpop.f32.mrb[0].mxu0
        %v2050 = vadd.f32 %v1651, %v2049
        %v2051 = vpop.f32.mrb[0].mxu0
        %2052 = vmatprep.mubr.bf16.mxu0 0
        %2053 = vmatmul.mubr.bf16.gmra.mrb[0].mxu0 %v1724
        %v2054 = vpop.f32.mrb[0].mxu0
        %v2055 = vadd.f32 %v1651, %v2054
        %v2056 = vpop.f32.mrb[0].mxu0
        %v2057 = vpop.f32.mrb[0].mxu0
        %v2058 = vadd.f32 %v1651, %v2057
        %v2059 = vpop.f32.mrb[0].mxu0
        %2060 = vmatprep.mubr.bf16.mxu0 0
        %2061 = vmatmul.mubr.bf16.gmra.mrb[0].mxu0 %v1727
        %v2062 = vpop.f32.mrb[0].mxu0
        %v2063 = vadd.f32 %v1651, %v2062
        %v2064 = vpop.f32.mrb[0].mxu0
        %v2065 = vpop.f32.mrb[0].mxu0
        %v2066 = vadd.f32 %v1651, %v2065
        %v2067 = vpop.f32.mrb[0].mxu0
        %2068 = vmatprep.mubr.bf16.mxu0 0
        %2069 = vmatmul.mubr.bf16.gmra.mrb[0].mxu0 %v1730
        %v2070 = vpop.f32.mrb[0].mxu0
        %v2071 = vadd.f32 %v1651, %v2070
        %v2072 = vpop.f32.mrb[0].mxu0
        %v2073 = vpop.f32.mrb[0].mxu0
        %v2074 = vadd.f32 %v1651, %v2073
        %v2075 = vpop.f32.mrb[0].mxu0
        %2076 = vmatprep.mubr.bf16.mxu0 0
        %2077 = vmatmul.mubr.bf16.gmra.mrb[0].mxu0 %v1733
        %v2078 = vpop.f32.mrb[0].mxu0
        %v2079 = vadd.f32 %v1651, %v2078
        %v2080 = vpop.f32.mrb[0].mxu0
        %v2081 = vpop.f32.mrb[0].mxu0
        %v2082 = vadd.f32 %v1651, %v2081
        %v2083 = vpop.f32.mrb[0].mxu0
        %2084 = vmatprep.mubr.bf16.mxu0 0
        %2085 = vmatmul.mubr.bf16.gmra.mrb[0].mxu0 %v1736
        %v2086 = vpop.f32.mrb[0].mxu0
        %v2087 = vadd.f32 %v1651, %v2086
        %v2088 = vpop.f32.mrb[0].mxu0
        %v2089 = vpop.f32.mrb[0].mxu0
        %v2090 = vadd.f32 %v1651, %v2089
        %v2091 = vpop.f32.mrb[0].mxu0
        %2092 = vmatprep.mubr.bf16.mxu0 0
        %2093 = vmatmul.mubr.bf16.gmra.mrb[0].mxu0 %v1739
        %v2094 = vpop.f32.mrb[0].mxu0
        %v2095 = vadd.f32 %v1651, %v2094
        %v2096 = vpop.f32.mrb[0].mxu0
        %v2097 = vpop.f32.mrb[0].mxu0
        %v2098 = vadd.f32 %v1651, %v2097
        %v2099 = vpop.f32.mrb[0].mxu0
        %2100 = vmatprep.mubr.bf16.mxu0 0
        %2101 = vmatmul.mubr.bf16.gmra.mrb[0].mxu0 %v1742
        %v2102 = vpop.f32.mrb[0].mxu0
        %v2103 = vadd.f32 %v1651, %v2102
        %v2104 = vpop.f32.mrb[0].mxu0
        %v2105 = vpop.f32.mrb[0].mxu0
        %v2106 = vadd.f32 %v1651, %v2105
        %v2107 = vpop.f32.mrb[0].mxu0
        %2108 = vmatprep.mubr.bf16.mxu0 0
        %2109 = vmatmul.mubr.bf16.gmra.mrb[0].mxu0 %v1745
        %v2110 = vpop.f32.mrb[0].mxu0
        %v2111 = vadd.f32 %v1651, %v2110
        %v2112 = vpop.f32.mrb[0].mxu0
        %v2113 = vpop.f32.mrb[0].mxu0
        %v2114 = vadd.f32 %v1651, %v2113
        %v2115 = vpop.f32.mrb[0].mxu0
        %2116 = vmatprep.mubr.bf16.mxu0 0
        %2117 = vmatmul.mubr.bf16.gmra.mrb[0].mxu0 %v1748
        %v2118 = vpop.f32.mrb[0].mxu0
        %v2119 = vadd.f32 %v1651, %v2118
        %v2120 = vpop.f32.mrb[0].mxu0
        %v2121 = vpop.f32.mrb[0].mxu0
        %v2122 = vadd.f32 %v1651, %v2121
        %v2123 = vpop.f32.mrb[0].mxu0
        %2124 = vmatprep.mubr.bf16.mxu0 0
        %2125 = vmatmul.mubr.bf16.gmra.mrb[0].mxu0 %v1751
        %v2126 = vpop.f32.mrb[0].mxu0
        %v2127 = vadd.f32 %v1651, %v2126
        %v2128 = vpop.f32.mrb[0].mxu0
        %v2129 = vpop.f32.mrb[0].mxu0
        %v2130 = vadd.f32 %v1651, %v2129
        %v2131 = vpop.f32.mrb[0].mxu0
        %2132 = vmatprep.mubr.bf16.mxu0 0
        %2133 = vmatmul.mubr.bf16.gmra.mrb[0].mxu0 %v1754
        %v2134 = vpop.f32.mrb[0].mxu0
        %v2135 = vadd.f32 %v1651, %v2134
        %v2136 = vpop.f32.mrb[0].mxu0
        %v2137 = vpop.f32.mrb[0].mxu0
        %v2138 = vadd.f32 %v1651, %v2137
        %v2139 = vpop.f32.mrb[0].mxu0
        %2140 = vmatprep.mubr.bf16.mxu0 0
        %2141 = vmatmul.mubr.bf16.gmra.mrb[0].mxu0 %v1757
        %v2142 = vpop.f32.mrb[0].mxu0
        %v2143 = vadd.f32 %v1651, %v2142
        %v2144 = vpop.f32.mrb[0].mxu0
        %v2145 = vpop.f32.mrb[0].mxu0
        %v2146 = vadd.f32 %v1651, %v2145
        %v2147 = vpop.f32.mrb[0].mxu0
        %2148 = vmatprep.mubr.bf16.mxu0 0
        %2149 = vmatmul.mubr.bf16.gmra.mrb[0].mxu0 %v1760
        %v2150 = vpop.f32.mrb[0].mxu0
        %v2151 = vadd.f32 %v1651, %v2150
        %v2152 = vpop.f32.mrb[0].mxu0
        %v2153 = vpop.f32.mrb[0].mxu0
        %v2154 = vadd.f32 %v1651, %v2153
        %v2155 = vpop.f32.mrb[0].mxu0
        %2156 = vmatprep.mubr.bf16.mxu0 0
        %2157 = vmatmul.mubr.bf16.gmra.mrb[0].mxu0 %v1763
        %v2158 = vpop.f32.mrb[0].mxu0
        %v2159 = vadd.f32 %v1651, %v2158
        %v2160 = vpop.f32.mrb[0].mxu0
        %v2161 = vpop.f32.mrb[0].mxu0
        %v2162 = vadd.f32 %v1651, %v2161
        %v2163 = vpop.f32.mrb[0].mxu0
        %2164 = vmatprep.mubr.bf16.mxu0 0
        %2165 = vmatmul.mubr.bf16.gmra.mrb[0].mxu0 %v1766
        %v2166 = vpop.f32.mrb[0].mxu0
        %v2167 = vadd.f32 %v1651, %v2166
        %v2168 = vpop.f32.mrb[0].mxu0
        %v2169 = vpop.f32.mrb[0].mxu0
        %v2170 = vadd.f32 %v1651, %v2169
        %v2171 = vpop.f32.mrb[0].mxu0
        %2172 = vmatprep.mubr.bf16.mxu0 0
        %2173 = vmatmul.mubr.bf16.gmra.mrb[0].mxu0 %v1769
        %v2174 = vpop.f32.mrb[0].mxu0
        %v2175 = vadd.f32 %v1651, %v2174
        %v2176 = vpop.f32.mrb[0].mxu0
        %v2177 = vpop.f32.mrb[0].mxu0
        %v2178 = vadd.f32 %v1651, %v2177
        %v2179 = vpop.f32.mrb[0].mxu0
        %2180 = vmatprep.mubr.bf16.mxu0 0
        %2181 = vmatmul.mubr.bf16.gmra.mrb[0].mxu0 %v1772
        %v2182 = vpop.f32.mrb[0].mxu0
        %v2183 = vadd.f32 %v1651, %v2182
        %v2184 = vpop.f32.mrb[0].mxu0
        %v2185 = vpop.f32.mrb[0].mxu0
        %v2186 = vadd.f32 %v1651, %v2185
        %v2187 = vpop.f32.mrb[0].mxu0
        %2188 = vmatprep.mubr.bf16.mxu0 0
        %2189 = vmatmul.mubr.bf16.gmra.mrb[0].mxu0 %v1775
        %v2190 = vpop.f32.mrb[0].mxu0
        %v2191 = vadd.f32 %v1651, %v2190
        %v2192 = vpop.f32.mrb[0].mxu0
        %v2193 = vpop.f32.mrb[0].mxu0
        %v2194 = vadd.f32 %v1651, %v2193
        %v2195 = vpop.f32.mrb[0].mxu0
        %2196 = vmatprep.mubr.bf16.mxu0 0
        %2197 = vmatmul.mubr.bf16.gmra.mrb[0].mxu0 %v1778
        %v2198 = vpop.f32.mrb[0].mxu0
        %v2199 = vadd.f32 %v1651, %v2198
        %v2200 = vpop.f32.mrb[0].mxu0
        %v2201 = vpop.f32.mrb[0].mxu0
        %v2202 = vadd.f32 %v1651, %v2201
        %v2203 = vpop.f32.mrb[0].mxu0
        %2204 = vmatprep.mubr.bf16.mxu0 0
        %2205 = vmatmul.mubr.bf16.gmra.mrb[0].mxu0 %v1781
        %v2206 = vpop.f32.mrb[0].mxu0
        %v2207 = vadd.f32 %v1651, %v2206
        %v2208 = vpop.f32.mrb[0].mxu0
        %v2209 = vpop.f32.mrb[0].mxu0
        %v2210 = vadd.f32 %v1651, %v2209
        %v2211 = vpop.f32.mrb[0].mxu0
        %2212 = vmatprep.mubr.bf16.mxu0 0
        %2213 = vmatmul.mubr.bf16.gmra.mrb[0].mxu0 %v1784
        %v2214 = vpop.f32.mrb[0].mxu0
        %v2215 = vadd.f32 %v1651, %v2214
        %v2216 = vpop.f32.mrb[0].mxu0
        %v2217 = vpop.f32.mrb[0].mxu0
        %v2218 = vadd.f32 %v1651, %v2217
        %v2219 = vpop.f32.mrb[0].mxu0
        %2220 = vmatprep.mubr.bf16.mxu0 0
        %2221 = vmatmul.mubr.bf16.gmra.mrb[0].mxu0 %v1787
        %v2222 = vpop.f32.mrb[0].mxu0
        %v2223 = vadd.f32 %v1651, %v2222
        %v2224 = vpop.f32.mrb[0].mxu0
        %v2225 = vpop.f32.mrb[0].mxu0
        %v2226 = vadd.f32 %v1651, %v2225
        %v2227 = vpop.f32.mrb[0].mxu0
        %2228 = vmatprep.mubr.bf16.mxu0 0
        %2229 = vmatmul.mubr.bf16.gmra.mrb[0].mxu0 %v1790
        %v2230 = vpop.f32.mrb[0].mxu0
        %v2231 = vadd.f32 %v1651, %v2230
        %v2232 = vpop.f32.mrb[0].mxu0
        %v2233 = vpop.f32.mrb[0].mxu0
        %v2234 = vadd.f32 %v1651, %v2233
        %v2235 = vpop.f32.mrb[0].mxu0
        %2236 = vmatprep.mubr.bf16.mxu0 0
        %2237 = vmatmul.mubr.bf16.gmra.mrb[0].mxu0 %v1793
        %v2238 = vpop.f32.mrb[0].mxu0
        %v2239 = vadd.f32 %v1651, %v2238
        %v2240 = vpop.f32.mrb[0].mxu0
        %v2241 = vpop.f32.mrb[0].mxu0
        %v2242 = vadd.f32 %v1651, %v2241
        %v2243 = vpop.f32.mrb[0].mxu0
        %2244 = vmatprep.mubr.bf16.mxu0 0
        %2245 = vmatmul.mubr.bf16.gmra.mrb[0].mxu0 %v1796
        %v2246 = vpop.f32.mrb[0].mxu0
        %v2247 = vadd.f32 %v1651, %v2246
        %v2248 = vpop.f32.mrb[0].mxu0
        %v2249 = vpop.f32.mrb[0].mxu0
        %v2250 = vadd.f32 %v1651, %v2249
        %v2251 = vpop.f32.mrb[0].mxu0
        %2252 = vmatprep.mubr.bf16.mxu0 0
        %2253 = vmatmul.mubr.bf16.gmra.mrb[0].mxu0 %v1799
        %v2254 = vpop.f32.mrb[0].mxu0
        %v2255 = vadd.f32 %v1651, %v2254
        %v2256 = vpop.f32.mrb[0].mxu0
        %v2257 = vpop.f32.mrb[0].mxu0
        %v2258 = vadd.f32 %v1651, %v2257
        %v2259 = vpop.f32.mrb[0].mxu0
        %2260 = vmatprep.mubr.bf16.mxu0 0
        %2261 = vmatmul.mubr.bf16.gmra.mrb[0].mxu0 %v1802
        %v2262 = vpop.f32.mrb[0].mxu0
        %v2263 = vadd.f32 %v1651, %v2262
        %v2264 = vpop.f32.mrb[0].mxu0
        %v2265 = vpop.f32.mrb[0].mxu0
        %v2266 = vadd.f32 %v1651, %v2265
        %v2267 = vpop.f32.mrb[0].mxu0
        %2268 = vmatprep.mubr.bf16.mxu0 0
        %2269 = vmatmul.mubr.bf16.gmra.mrb[0].mxu0 %v1805
        %v2270 = vpop.f32.mrb[0].mxu0
        %v2271 = vadd.f32 %v1651, %v2270
        %v2272 = vpop.f32.mrb[0].mxu0
        %v2273 = vpop.f32.mrb[0].mxu0
        %v2274 = vadd.f32 %v1651, %v2273
        %v2275 = vpop.f32.mrb[0].mxu0
        %2276 = vmatprep.mubr.bf16.mxu0 0
        %2277 = vmatmul.mubr.bf16.gmra.mrb[0].mxu0 %v1808
        %v2278 = vpop.f32.mrb[0].mxu0
        %v2279 = vadd.f32 %v1651, %v2278
        %v2280 = vpop.f32.mrb[0].mxu0
        %v2281 = vpop.f32.mrb[0].mxu0
        %v2282 = vadd.f32 %v1651, %v2281
        %v2283 = vpop.f32.mrb[0].mxu0
        %2284 = vmatprep.mubr.bf16.mxu0 0
        %2285 = vmatmul.mubr.bf16.gmra.mrb[0].mxu0 %v1811
        %v2286 = vpop.f32.mrb[0].mxu0
        %v2287 = vadd.f32 %v1651, %v2286
        %v2288 = vpop.f32.mrb[0].mxu0
        %v2289 = vpop.f32.mrb[0].mxu0
        %v2290 = vadd.f32 %v1651, %v2289
        %v2291 = vpop.f32.mrb[0].mxu0
        %2292 = vmatprep.mubr.bf16.mxu0 0
        %2293 = vmatmul.mubr.bf16.gmra.mrb[0].mxu0 %v1814
        %v2294 = vpop.f32.mrb[0].mxu0
        %v2295 = vadd.f32 %v1651, %v2294
        %v2296 = vpop.f32.mrb[0].mxu0
        %v2297 = vpop.f32.mrb[0].mxu0
        %v2298 = vadd.f32 %v1651, %v2297
        %v2299 = vpop.f32.mrb[0].mxu0
        %2300 = vmatprep.mubr.bf16.mxu0 0
        %2301 = vmatmul.mubr.bf16.gmra.mrb[0].mxu0 %v1817
        %v2302 = vpop.f32.mrb[0].mxu0
        %v2303 = vadd.f32 %v1651, %v2302
        %v2304 = vpop.f32.mrb[0].mxu0
        %v2305 = vpop.f32.mrb[0].mxu0
        %v2306 = vadd.f32 %v1651, %v2305
        %v2307 = vpop.f32.mrb[0].mxu0
        %2308 = vmatprep.mubr.bf16.mxu0 0
        %2309 = vmatmul.mubr.bf16.gmra.mrb[0].mxu0 %v1820
        %v2310 = vpop.f32.mrb[0].mxu0
        %v2311 = vadd.f32 %v1651, %v2310
        %v2312 = vpop.f32.mrb[0].mxu0
        %v2313 = vpop.f32.mrb[0].mxu0
        %v2314 = vadd.f32 %v1651, %v2313
        %v2315 = vpop.f32.mrb[0].mxu0
        %2316 = vmatprep.mubr.bf16.mxu0 0
        %2317 = vmatmul.mubr.bf16.gmra.mrb[0].mxu0 %v1823
        %v2318 = vpop.f32.mrb[0].mxu0
        %v2319 = vadd.f32 %v1651, %v2318
        %v2320 = vpop.f32.mrb[0].mxu0
        %v2321 = vpop.f32.mrb[0].mxu0
        %v2322 = vadd.f32 %v1651, %v2321
        %v2323 = vpop.f32.mrb[0].mxu0
        %2324 = vmatprep.mubr.bf16.mxu0 0
        %2325 = vmatmul.mubr.bf16.gmra.mrb[0].mxu0 %v1826
        %v2326 = vpop.f32.mrb[0].mxu0
        %v2327 = vadd.f32 %v1651, %v2326
        %v2328 = vpop.f32.mrb[0].mxu0
        %v2329 = vpop.f32.mrb[0].mxu0
        %v2330 = vadd.f32 %v1651, %v2329
        %v2331 = vpop.f32.mrb[0].mxu0
        %2332 = vmatprep.mubr.bf16.mxu0 0
        %2333 = vmatmul.mubr.bf16.gmra.mrb[0].mxu0 %v1829
        %v2334 = vpop.f32.mrb[0].mxu0
        %v2335 = vadd.f32 %v1651, %v2334
        %v2336 = vpop.f32.mrb[0].mxu0
        %v2337 = vpop.f32.mrb[0].mxu0
        %v2338 = vadd.f32 %v1651, %v2337
        %v2339 = vpop.f32.mrb[0].mxu0
        %2340 = vmatprep.mubr.bf16.mxu0 0
        %2341 = vmatmul.mubr.bf16.gmra.mrb[0].mxu0 %v1832
        %v2342 = vpop.f32.mrb[0].mxu0
        %v2343 = vadd.f32 %v1651, %v2342
        %v2344 = vpop.f32.mrb[0].mxu0
        %v2345 = vpop.f32.mrb[0].mxu0
        %v2346 = vadd.f32 %v1651, %v2345
        %v2347 = vpop.f32.mrb[0].mxu0
        %2348 = vmatprep.mubr.bf16.mxu0 0
        %2349 = vmatmul.mubr.bf16.gmra.mrb[0].mxu0 %v1835
        %v2350 = vpop.f32.mrb[0].mxu0
        %v2351 = vadd.f32 %v1651, %v2350
        %v2352 = vpop.f32.mrb[0].mxu0
        %v2353 = vpop.f32.mrb[0].mxu0
        %v2354 = vadd.f32 %v1651, %v2353
        %v2355 = vpop.f32.mrb[0].mxu0
        %2356 = vmatprep.mubr.bf16.mxu0 0
        %2357 = vmatmul.mubr.bf16.gmra.mrb[0].mxu0 %v1838
        %v2358 = vpop.f32.mrb[0].mxu0
        %v2359 = vadd.f32 %v1651, %v2358
        %v2360 = vpop.f32.mrb[0].mxu0
        %v2361 = vpop.f32.mrb[0].mxu0
        %v2362 = vadd.f32 %v1651, %v2361
        %v2363 = vpop.f32.mrb[0].mxu0
        %2364 = vmatprep.mubr.bf16.mxu0 0
        %2365 = vmatmul.mubr.bf16.gmra.mrb[0].mxu0 %v1841
        %v2366 = vpop.f32.mrb[0].mxu0
        %v2367 = vadd.f32 %v1651, %v2366
        %v2368 = vpop.f32.mrb[0].mxu0
        %v2369 = vpop.f32.mrb[0].mxu0
        %v2370 = vadd.f32 %v1651, %v2369
        %v2371 = vpop.f32.mrb[0].mxu0
        %2372 = vmatprep.mubr.bf16.mxu0 0
        %2373 = vmatmul.mubr.bf16.gmra.mrb[0].mxu0 %v1844
        %v2374 = vpop.f32.mrb[0].mxu0
        %v2375 = vadd.f32 %v1651, %v2374
        %v2376 = vpop.f32.mrb[0].mxu0
        %v2377 = vpop.f32.mrb[0].mxu0
        %v2378 = vadd.f32 %v1651, %v2377
        %v2379 = vpop.f32.mrb[0].mxu0
        %2380 = vmatprep.mubr.bf16.mxu0 0
        %2381 = vmatmul.mubr.bf16.gmra.mrb[0].mxu0 %v1847
        %v2382 = vpop.f32.mrb[0].mxu0
        %v2383 = vadd.f32 %v1651, %v2382
        %v2384 = vpop.f32.mrb[0].mxu0
        %v2385 = vpop.f32.mrb[0].mxu0
        %v2386 = vadd.f32 %v1651, %v2385
        %v2387 = vpop.f32.mrb[0].mxu0
        %2388 = vmatprep.mubr.bf16.mxu0 0
        %2389 = vmatmul.mubr.bf16.gmra.mrb[0].mxu0 %v1850
        %v2390 = vpop.f32.mrb[0].mxu0
        %v2391 = vadd.f32 %v1651, %v2390
        %v2392 = vpop.f32.mrb[0].mxu0
        %v2393 = vpop.f32.mrb[0].mxu0
        %v2394 = vadd.f32 %v1651, %v2393
        %v2395 = vpop.f32.mrb[0].mxu0
        %2396 = vdwg.mxu0
        %v2397 = vmax.f32 %v1887, 0.0
        %v2398 = vmax.f32 %v1890, 0.0
        %v2399 = vmax.f32 %v1895, 0.0
        %v2400 = vmax.f32 %v1898, 0.0
        %v2401 = vmax.f32 %v1903, 0.0
        %v2402 = vmax.f32 %v1906, 0.0
        %v2403 = vmax.f32 %v1911, 0.0
        %v2404 = vmax.f32 %v1914, 0.0
        %v2405 = vmax.f32 %v1919, 0.0
        %v2406 = vmax.f32 %v1922, 0.0
        %v2407 = vmax.f32 %v1927, 0.0
        %v2408 = vmax.f32 %v1930, 0.0
        %v2409 = vmax.f32 %v1935, 0.0
        %v2410 = vmax.f32 %v1938, 0.0
        %v2411 = vmax.f32 %v1943, 0.0
        %v2412 = vmax.f32 %v1946, 0.0
        %v2413 = vmax.f32 %v1951, 0.0
        %v2414 = vmax.f32 %v1954, 0.0
        %v2415 = vmax.f32 %v1959, 0.0
        %v2416 = vmax.f32 %v1962, 0.0
        %v2417 = vmax.f32 %v1967, 0.0
        %v2418 = vmax.f32 %v1970, 0.0
        %v2419 = vmax.f32 %v1975, 0.0
        %v2420 = vmax.f32 %v1978, 0.0
        %v2421 = vmax.f32 %v1983, 0.0
        %v2422 = vmax.f32 %v1986, 0.0
        %v2423 = vmax.f32 %v1991, 0.0
        %v2424 = vmax.f32 %v1994, 0.0
        %v2425 = vmax.f32 %v1999, 0.0
        %v2426 = vmax.f32 %v2002, 0.0
        %v2427 = vmax.f32 %v2007, 0.0
        %v2428 = vmax.f32 %v2010, 0.0
        %v2429 = vmax.f32 %v2015, 0.0
        %v2430 = vmax.f32 %v2018, 0.0
        %v2431 = vmax.f32 %v2023, 0.0
        %v2432 = vmax.f32 %v2026, 0.0
        %v2433 = vmax.f32 %v2031, 0.0
        %v2434 = vmax.f32 %v2034, 0.0
        %v2435 = vmax.f32 %v2039, 0.0
        %v2436 = vmax.f32 %v2042, 0.0
        %v2437 = vmax.f32 %v2047, 0.0
        %v2438 = vmax.f32 %v2050, 0.0
        %v2439 = vmax.f32 %v2055, 0.0
        %v2440 = vmax.f32 %v2058, 0.0
        %v2441 = vmax.f32 %v2063, 0.0
        %v2442 = vmax.f32 %v2066, 0.0
        %v2443 = vmax.f32 %v2071, 0.0
        %v2444 = vmax.f32 %v2074, 0.0
        %v2445 = vmax.f32 %v2079, 0.0
        %v2446 = vmax.f32 %v2082, 0.0
        %v2447 = vmax.f32 %v2087, 0.0
        %v2448 = vmax.f32 %v2090, 0.0
        %v2449 = vmax.f32 %v2095, 0.0
        %v2450 = vmax.f32 %v2098, 0.0
        %v2451 = vmax.f32 %v2103, 0.0
        %v2452 = vmax.f32 %v2106, 0.0
        %v2453 = vmax.f32 %v2111, 0.0
        %v2454 = vmax.f32 %v2114, 0.0
        %v2455 = vmax.f32 %v2119, 0.0
        %v2456 = vmax.f32 %v2122, 0.0
        %v2457 = vmax.f32 %v2127, 0.0
        %v2458 = vmax.f32 %v2130, 0.0
        %v2459 = vmax.f32 %v2135, 0.0
        %v2460 = vmax.f32 %v2138, 0.0
        %v2461 = vmax.f32 %v2143, 0.0
        %v2462 = vmax.f32 %v2146, 0.0
        %v2463 = vmax.f32 %v2151, 0.0
        %v2464 = vmax.f32 %v2154, 0.0
        %v2465 = vmax.f32 %v2159, 0.0
        %v2466 = vmax.f32 %v2162, 0.0
        %v2467 = vmax.f32 %v2167, 0.0
        %v2468 = vmax.f32 %v2170, 0.0
        %v2469 = vmax.f32 %v2175, 0.0
        %v2470 = vmax.f32 %v2178, 0.0
        %v2471 = vmax.f32 %v2183, 0.0
        %v2472 = vmax.f32 %v2186, 0.0
        %v2473 = vmax.f32 %v2191, 0.0
        %v2474 = vmax.f32 %v2194, 0.0
        %v2475 = vmax.f32 %v2199, 0.0
        %v2476 = vmax.f32 %v2202, 0.0
        %v2477 = vmax.f32 %v2207, 0.0
        %v2478 = vmax.f32 %v2210, 0.0
        %v2479 = vmax.f32 %v2215, 0.0
        %v2480 = vmax.f32 %v2218, 0.0
        %v2481 = vmax.f32 %v2223, 0.0
        %v2482 = vmax.f32 %v2226, 0.0
        %v2483 = vmax.f32 %v2231, 0.0
        %v2484 = vmax.f32 %v2234, 0.0
        %v2485 = vmax.f32 %v2239, 0.0
        %v2486 = vmax.f32 %v2242, 0.0
        %v2487 = vmax.f32 %v2247, 0.0
        %v2488 = vmax.f32 %v2250, 0.0
        %v2489 = vmax.f32 %v2255, 0.0
        %v2490 = vmax.f32 %v2258, 0.0
        %v2491 = vmax.f32 %v2263, 0.0
        %v2492 = vmax.f32 %v2266, 0.0
        %v2493 = vmax.f32 %v2271, 0.0
        %v2494 = vmax.f32 %v2274, 0.0
        %v2495 = vmax.f32 %v2279, 0.0
        %v2496 = vmax.f32 %v2282, 0.0
        %v2497 = vmax.f32 %v2287, 0.0
        %v2498 = vmax.f32 %v2290, 0.0
        %v2499 = vmax.f32 %v2295, 0.0
        %v2500 = vmax.f32 %v2298, 0.0
        %v2501 = vmax.f32 %v2303, 0.0
        %v2502 = vmax.f32 %v2306, 0.0
        %v2503 = vmax.f32 %v2311, 0.0
        %v2504 = vmax.f32 %v2314, 0.0
        %v2505 = vmax.f32 %v2319, 0.0
        %v2506 = vmax.f32 %v2322, 0.0
        %v2507 = vmax.f32 %v2327, 0.0
        %v2508 = vmax.f32 %v2330, 0.0
        %v2509 = vmax.f32 %v2335, 0.0
        %v2510 = vmax.f32 %v2338, 0.0
        %v2511 = vmax.f32 %v2343, 0.0
        %v2512 = vmax.f32 %v2346, 0.0
        %v2513 = vmax.f32 %v2351, 0.0
        %v2514 = vmax.f32 %v2354, 0.0
        %v2515 = vmax.f32 %v2359, 0.0
        %v2516 = vmax.f32 %v2362, 0.0
        %v2517 = vmax.f32 %v2367, 0.0
        %v2518 = vmax.f32 %v2370, 0.0
        %v2519 = vmax.f32 %v2375, 0.0
        %v2520 = vmax.f32 %v2378, 0.0
        %v2521 = vmax.f32 %v2383, 0.0
        %v2522 = vmax.f32 %v2386, 0.0
        %v2523 = vmax.f32 %v2391, 0.0
        %v2524 = vmax.f32 %v2394, 0.0
        %vm2525 = vcmask 261120
        %v2526 = vsel %vm2525, %v2397, -inf
        %v2527 = vrot.slane %v2526, 4
        %v2528 = vmax.f32 %v2526, %v2527
        %v2529 = vrot.slane %v2528, 2
        %v2530 = vmax.f32 %v2528, %v2529
        %v2531 = vrot.slane %v2530, 1
        %v2532 = vmax.f32 %v2530, %v2531
        %v2533 = vsel %vm2525, %v2398, -inf
        %v2534 = vrot.slane %v2533, 4
        %v2535 = vmax.f32 %v2533, %v2534
        %v2536 = vrot.slane %v2535, 2
        %v2537 = vmax.f32 %v2535, %v2536
        %v2538 = vrot.slane %v2537, 1
        %v2539 = vmax.f32 %v2537, %v2538
        %v2540 = vsel %vm2525, %v2399, -inf
        %v2541 = vrot.slane %v2540, 4
        %v2542 = vmax.f32 %v2540, %v2541
        %v2543 = vrot.slane %v2542, 2
        %v2544 = vmax.f32 %v2542, %v2543
        %v2545 = vrot.slane %v2544, 1
        %v2546 = vmax.f32 %v2544, %v2545
        %v2547 = vsel %vm2525, %v2400, -inf
        %v2548 = vrot.slane %v2547, 4
        %v2549 = vmax.f32 %v2547, %v2548
        %v2550 = vrot.slane %v2549, 2
        %v2551 = vmax.f32 %v2549, %v2550
        %v2552 = vrot.slane %v2551, 1
        %v2553 = vmax.f32 %v2551, %v2552
        %v2554 = vsel %vm2525, %v2401, -inf
        %v2555 = vrot.slane %v2554, 4
        %v2556 = vmax.f32 %v2554, %v2555
        %v2557 = vrot.slane %v2556, 2
        %v2558 = vmax.f32 %v2556, %v2557
        %v2559 = vrot.slane %v2558, 1
        %v2560 = vmax.f32 %v2558, %v2559
        %v2561 = vsel %vm2525, %v2402, -inf
        %v2562 = vrot.slane %v2561, 4
        %v2563 = vmax.f32 %v2561, %v2562
        %v2564 = vrot.slane %v2563, 2
        %v2565 = vmax.f32 %v2563, %v2564
        %v2566 = vrot.slane %v2565, 1
        %v2567 = vmax.f32 %v2565, %v2566
        %v2568 = vsel %vm2525, %v2403, -inf
        %v2569 = vrot.slane %v2568, 4
        %v2570 = vmax.f32 %v2568, %v2569
        %v2571 = vrot.slane %v2570, 2
        %v2572 = vmax.f32 %v2570, %v2571
        %v2573 = vrot.slane %v2572, 1
        %v2574 = vmax.f32 %v2572, %v2573
        %v2575 = vsel %vm2525, %v2404, -inf
        %v2576 = vrot.slane %v2575, 4
        %v2577 = vmax.f32 %v2575, %v2576
        %v2578 = vrot.slane %v2577, 2
        %v2579 = vmax.f32 %v2577, %v2578
        %v2580 = vrot.slane %v2579, 1
        %v2581 = vmax.f32 %v2579, %v2580
        %v2582 = vsel %vm2525, %v2405, -inf
        %v2583 = vrot.slane %v2582, 4
        %v2584 = vmax.f32 %v2582, %v2583
        %v2585 = vrot.slane %v2584, 2
        %v2586 = vmax.f32 %v2584, %v2585
        %v2587 = vrot.slane %v2586, 1
        %v2588 = vmax.f32 %v2586, %v2587
        %v2589 = vsel %vm2525, %v2406, -inf
        %v2590 = vrot.slane %v2589, 4
        %v2591 = vmax.f32 %v2589, %v2590
        %v2592 = vrot.slane %v2591, 2
        %v2593 = vmax.f32 %v2591, %v2592
        %v2594 = vrot.slane %v2593, 1
        %v2595 = vmax.f32 %v2593, %v2594
        %v2596 = vsel %vm2525, %v2407, -inf
        %v2597 = vrot.slane %v2596, 4
        %v2598 = vmax.f32 %v2596, %v2597
        %v2599 = vrot.slane %v2598, 2
        %v2600 = vmax.f32 %v2598, %v2599
        %v2601 = vrot.slane %v2600, 1
        %v2602 = vmax.f32 %v2600, %v2601
        %v2603 = vsel %vm2525, %v2408, -inf
        %v2604 = vrot.slane %v2603, 4
        %v2605 = vmax.f32 %v2603, %v2604
        %v2606 = vrot.slane %v2605, 2
        %v2607 = vmax.f32 %v2605, %v2606
        %v2608 = vrot.slane %v2607, 1
        %v2609 = vmax.f32 %v2607, %v2608
        %v2610 = vsel %vm2525, %v2409, -inf
        %v2611 = vrot.slane %v2610, 4
        %v2612 = vmax.f32 %v2610, %v2611
        %v2613 = vrot.slane %v2612, 2
        %v2614 = vmax.f32 %v2612, %v2613
        %v2615 = vrot.slane %v2614, 1
        %v2616 = vmax.f32 %v2614, %v2615
        %v2617 = vsel %vm2525, %v2410, -inf
        %v2618 = vrot.slane %v2617, 4
        %v2619 = vmax.f32 %v2617, %v2618
        %v2620 = vrot.slane %v2619, 2
        %v2621 = vmax.f32 %v2619, %v2620
        %v2622 = vrot.slane %v2621, 1
        %v2623 = vmax.f32 %v2621, %v2622
        %v2624 = vsel %vm2525, %v2411, -inf
        %v2625 = vrot.slane %v2624, 4
        %v2626 = vmax.f32 %v2624, %v2625
        %v2627 = vrot.slane %v2626, 2
        %v2628 = vmax.f32 %v2626, %v2627
        %v2629 = vrot.slane %v2628, 1
        %v2630 = vmax.f32 %v2628, %v2629
        %v2631 = vsel %vm2525, %v2412, -inf
        %v2632 = vrot.slane %v2631, 4
        %v2633 = vmax.f32 %v2631, %v2632
        %v2634 = vrot.slane %v2633, 2
        %v2635 = vmax.f32 %v2633, %v2634
        %v2636 = vrot.slane %v2635, 1
        %v2637 = vmax.f32 %v2635, %v2636
        %v2638 = vsel %vm2525, %v2413, -inf
        %v2639 = vrot.slane %v2638, 4
        %v2640 = vmax.f32 %v2638, %v2639
        %v2641 = vrot.slane %v2640, 2
        %v2642 = vmax.f32 %v2640, %v2641
        %v2643 = vrot.slane %v2642, 1
        %v2644 = vmax.f32 %v2642, %v2643
        %v2645 = vsel %vm2525, %v2414, -inf
        %v2646 = vrot.slane %v2645, 4
        %v2647 = vmax.f32 %v2645, %v2646
        %v2648 = vrot.slane %v2647, 2
        %v2649 = vmax.f32 %v2647, %v2648
        %v2650 = vrot.slane %v2649, 1
        %v2651 = vmax.f32 %v2649, %v2650
        %v2652 = vsel %vm2525, %v2415, -inf
        %v2653 = vrot.slane %v2652, 4
        %v2654 = vmax.f32 %v2652, %v2653
        %v2655 = vrot.slane %v2654, 2
        %v2656 = vmax.f32 %v2654, %v2655
        %v2657 = vrot.slane %v2656, 1
        %v2658 = vmax.f32 %v2656, %v2657
        %v2659 = vsel %vm2525, %v2416, -inf
        %v2660 = vrot.slane %v2659, 4
        %v2661 = vmax.f32 %v2659, %v2660
        %v2662 = vrot.slane %v2661, 2
        %v2663 = vmax.f32 %v2661, %v2662
        %v2664 = vrot.slane %v2663, 1
        %v2665 = vmax.f32 %v2663, %v2664
        %v2666 = vsel %vm2525, %v2417, -inf
        %v2667 = vrot.slane %v2666, 4
        %v2668 = vmax.f32 %v2666, %v2667
        %v2669 = vrot.slane %v2668, 2
        %v2670 = vmax.f32 %v2668, %v2669
        %v2671 = vrot.slane %v2670, 1
        %v2672 = vmax.f32 %v2670, %v2671
        %v2673 = vsel %vm2525, %v2418, -inf
        %v2674 = vrot.slane %v2673, 4
        %v2675 = vmax.f32 %v2673, %v2674
        %v2676 = vrot.slane %v2675, 2
        %v2677 = vmax.f32 %v2675, %v2676
        %v2678 = vrot.slane %v2677, 1
        %v2679 = vmax.f32 %v2677, %v2678
        %v2680 = vsel %vm2525, %v2419, -inf
        %v2681 = vrot.slane %v2680, 4
        %v2682 = vmax.f32 %v2680, %v2681
        %v2683 = vrot.slane %v2682, 2
        %v2684 = vmax.f32 %v2682, %v2683
        %v2685 = vrot.slane %v2684, 1
        %v2686 = vmax.f32 %v2684, %v2685
        %v2687 = vsel %vm2525, %v2420, -inf
        %v2688 = vrot.slane %v2687, 4
        %v2689 = vmax.f32 %v2687, %v2688
        %v2690 = vrot.slane %v2689, 2
        %v2691 = vmax.f32 %v2689, %v2690
        %v2692 = vrot.slane %v2691, 1
        %v2693 = vmax.f32 %v2691, %v2692
        %v2694 = vsel %vm2525, %v2421, -inf
        %v2695 = vrot.slane %v2694, 4
        %v2696 = vmax.f32 %v2694, %v2695
        %v2697 = vrot.slane %v2696, 2
        %v2698 = vmax.f32 %v2696, %v2697
        %v2699 = vrot.slane %v2698, 1
        %v2700 = vmax.f32 %v2698, %v2699
        %v2701 = vsel %vm2525, %v2422, -inf
        %v2702 = vrot.slane %v2701, 4
        %v2703 = vmax.f32 %v2701, %v2702
        %v2704 = vrot.slane %v2703, 2
        %v2705 = vmax.f32 %v2703, %v2704
        %v2706 = vrot.slane %v2705, 1
        %v2707 = vmax.f32 %v2705, %v2706
        %v2708 = vsel %vm2525, %v2423, -inf
        %v2709 = vrot.slane %v2708, 4
        %v2710 = vmax.f32 %v2708, %v2709
        %v2711 = vrot.slane %v2710, 2
        %v2712 = vmax.f32 %v2710, %v2711
        %v2713 = vrot.slane %v2712, 1
        %v2714 = vmax.f32 %v2712, %v2713
        %v2715 = vsel %vm2525, %v2424, -inf
        %v2716 = vrot.slane %v2715, 4
        %v2717 = vmax.f32 %v2715, %v2716
        %v2718 = vrot.slane %v2717, 2
        %v2719 = vmax.f32 %v2717, %v2718
        %v2720 = vrot.slane %v2719, 1
        %v2721 = vmax.f32 %v2719, %v2720
        %v2722 = vsel %vm2525, %v2425, -inf
        %v2723 = vrot.slane %v2722, 4
        %v2724 = vmax.f32 %v2722, %v2723
        %v2725 = vrot.slane %v2724, 2
        %v2726 = vmax.f32 %v2724, %v2725
        %v2727 = vrot.slane %v2726, 1
        %v2728 = vmax.f32 %v2726, %v2727
        %v2729 = vsel %vm2525, %v2426, -inf
        %v2730 = vrot.slane %v2729, 4
        %v2731 = vmax.f32 %v2729, %v2730
        %v2732 = vrot.slane %v2731, 2
        %v2733 = vmax.f32 %v2731, %v2732
        %v2734 = vrot.slane %v2733, 1
        %v2735 = vmax.f32 %v2733, %v2734
        %v2736 = vsel %vm2525, %v2427, -inf
        %v2737 = vrot.slane %v2736, 4
        %v2738 = vmax.f32 %v2736, %v2737
        %v2739 = vrot.slane %v2738, 2
        %v2740 = vmax.f32 %v2738, %v2739
        %v2741 = vrot.slane %v2740, 1
        %v2742 = vmax.f32 %v2740, %v2741
        %v2743 = vsel %vm2525, %v2428, -inf
        %v2744 = vrot.slane %v2743, 4
        %v2745 = vmax.f32 %v2743, %v2744
        %v2746 = vrot.slane %v2745, 2
        %v2747 = vmax.f32 %v2745, %v2746
        %v2748 = vrot.slane %v2747, 1
        %v2749 = vmax.f32 %v2747, %v2748
        %v2750 = vsel %vm2525, %v2429, -inf
        %v2751 = vrot.slane %v2750, 4
        %v2752 = vmax.f32 %v2750, %v2751
        %v2753 = vrot.slane %v2752, 2
        %v2754 = vmax.f32 %v2752, %v2753
        %v2755 = vrot.slane %v2754, 1
        %v2756 = vmax.f32 %v2754, %v2755
        %v2757 = vsel %vm2525, %v2430, -inf
        %v2758 = vrot.slane %v2757, 4
        %v2759 = vmax.f32 %v2757, %v2758
        %v2760 = vrot.slane %v2759, 2
        %v2761 = vmax.f32 %v2759, %v2760
        %v2762 = vrot.slane %v2761, 1
        %v2763 = vmax.f32 %v2761, %v2762
        %v2764 = vsel %vm2525, %v2431, -inf
        %v2765 = vrot.slane %v2764, 4
        %v2766 = vmax.f32 %v2764, %v2765
        %v2767 = vrot.slane %v2766, 2
        %v2768 = vmax.f32 %v2766, %v2767
        %v2769 = vrot.slane %v2768, 1
        %v2770 = vmax.f32 %v2768, %v2769
        %v2771 = vsel %vm2525, %v2432, -inf
        %v2772 = vrot.slane %v2771, 4
        %v2773 = vmax.f32 %v2771, %v2772
        %v2774 = vrot.slane %v2773, 2
        %v2775 = vmax.f32 %v2773, %v2774
        %v2776 = vrot.slane %v2775, 1
        %v2777 = vmax.f32 %v2775, %v2776
        %v2778 = vsel %vm2525, %v2433, -inf
        %v2779 = vrot.slane %v2778, 4
        %v2780 = vmax.f32 %v2778, %v2779
        %v2781 = vrot.slane %v2780, 2
        %v2782 = vmax.f32 %v2780, %v2781
        %v2783 = vrot.slane %v2782, 1
        %v2784 = vmax.f32 %v2782, %v2783
        %v2785 = vsel %vm2525, %v2434, -inf
        %v2786 = vrot.slane %v2785, 4
        %v2787 = vmax.f32 %v2785, %v2786
        %v2788 = vrot.slane %v2787, 2
        %v2789 = vmax.f32 %v2787, %v2788
        %v2790 = vrot.slane %v2789, 1
        %v2791 = vmax.f32 %v2789, %v2790
        %v2792 = vsel %vm2525, %v2435, -inf
        %v2793 = vrot.slane %v2792, 4
        %v2794 = vmax.f32 %v2792, %v2793
        %v2795 = vrot.slane %v2794, 2
        %v2796 = vmax.f32 %v2794, %v2795
        %v2797 = vrot.slane %v2796, 1
        %v2798 = vmax.f32 %v2796, %v2797
        %v2799 = vsel %vm2525, %v2436, -inf
        %v2800 = vrot.slane %v2799, 4
        %v2801 = vmax.f32 %v2799, %v2800
        %v2802 = vrot.slane %v2801, 2
        %v2803 = vmax.f32 %v2801, %v2802
        %v2804 = vrot.slane %v2803, 1
        %v2805 = vmax.f32 %v2803, %v2804
        %v2806 = vsel %vm2525, %v2437, -inf
        %v2807 = vrot.slane %v2806, 4
        %v2808 = vmax.f32 %v2806, %v2807
        %v2809 = vrot.slane %v2808, 2
        %v2810 = vmax.f32 %v2808, %v2809
        %v2811 = vrot.slane %v2810, 1
        %v2812 = vmax.f32 %v2810, %v2811
        %v2813 = vsel %vm2525, %v2438, -inf
        %v2814 = vrot.slane %v2813, 4
        %v2815 = vmax.f32 %v2813, %v2814
        %v2816 = vrot.slane %v2815, 2
        %v2817 = vmax.f32 %v2815, %v2816
        %v2818 = vrot.slane %v2817, 1
        %v2819 = vmax.f32 %v2817, %v2818
        %v2820 = vsel %vm2525, %v2439, -inf
        %v2821 = vrot.slane %v2820, 4
        %v2822 = vmax.f32 %v2820, %v2821
        %v2823 = vrot.slane %v2822, 2
        %v2824 = vmax.f32 %v2822, %v2823
        %v2825 = vrot.slane %v2824, 1
        %v2826 = vmax.f32 %v2824, %v2825
        %v2827 = vsel %vm2525, %v2440, -inf
        %v2828 = vrot.slane %v2827, 4
        %v2829 = vmax.f32 %v2827, %v2828
        %v2830 = vrot.slane %v2829, 2
        %v2831 = vmax.f32 %v2829, %v2830
        %v2832 = vrot.slane %v2831, 1
        %v2833 = vmax.f32 %v2831, %v2832
        %v2834 = vsel %vm2525, %v2441, -inf
        %v2835 = vrot.slane %v2834, 4
        %v2836 = vmax.f32 %v2834, %v2835
        %v2837 = vrot.slane %v2836, 2
        %v2838 = vmax.f32 %v2836, %v2837
        %v2839 = vrot.slane %v2838, 1
        %v2840 = vmax.f32 %v2838, %v2839
        %v2841 = vsel %vm2525, %v2442, -inf
        %v2842 = vrot.slane %v2841, 4
        %v2843 = vmax.f32 %v2841, %v2842
        %v2844 = vrot.slane %v2843, 2
        %v2845 = vmax.f32 %v2843, %v2844
        %v2846 = vrot.slane %v2845, 1
        %v2847 = vmax.f32 %v2845, %v2846
        %v2848 = vsel %vm2525, %v2443, -inf
        %v2849 = vrot.slane %v2848, 4
        %v2850 = vmax.f32 %v2848, %v2849
        %v2851 = vrot.slane %v2850, 2
        %v2852 = vmax.f32 %v2850, %v2851
        %v2853 = vrot.slane %v2852, 1
        %v2854 = vmax.f32 %v2852, %v2853
        %v2855 = vsel %vm2525, %v2444, -inf
        %v2856 = vrot.slane %v2855, 4
        %v2857 = vmax.f32 %v2855, %v2856
        %v2858 = vrot.slane %v2857, 2
        %v2859 = vmax.f32 %v2857, %v2858
        %v2860 = vrot.slane %v2859, 1
        %v2861 = vmax.f32 %v2859, %v2860
        %v2862 = vsel %vm2525, %v2445, -inf
        %v2863 = vrot.slane %v2862, 4
        %v2864 = vmax.f32 %v2862, %v2863
        %v2865 = vrot.slane %v2864, 2
        %v2866 = vmax.f32 %v2864, %v2865
        %v2867 = vrot.slane %v2866, 1
        %v2868 = vmax.f32 %v2866, %v2867
        %v2869 = vsel %vm2525, %v2446, -inf
        %v2870 = vrot.slane %v2869, 4
        %v2871 = vmax.f32 %v2869, %v2870
        %v2872 = vrot.slane %v2871, 2
        %v2873 = vmax.f32 %v2871, %v2872
        %v2874 = vrot.slane %v2873, 1
        %v2875 = vmax.f32 %v2873, %v2874
        %v2876 = vsel %vm2525, %v2447, -inf
        %v2877 = vrot.slane %v2876, 4
        %v2878 = vmax.f32 %v2876, %v2877
        %v2879 = vrot.slane %v2878, 2
        %v2880 = vmax.f32 %v2878, %v2879
        %v2881 = vrot.slane %v2880, 1
        %v2882 = vmax.f32 %v2880, %v2881
        %v2883 = vsel %vm2525, %v2448, -inf
        %v2884 = vrot.slane %v2883, 4
        %v2885 = vmax.f32 %v2883, %v2884
        %v2886 = vrot.slane %v2885, 2
        %v2887 = vmax.f32 %v2885, %v2886
        %v2888 = vrot.slane %v2887, 1
        %v2889 = vmax.f32 %v2887, %v2888
        %v2890 = vsel %vm2525, %v2449, -inf
        %v2891 = vrot.slane %v2890, 4
        %v2892 = vmax.f32 %v2890, %v2891
        %v2893 = vrot.slane %v2892, 2
        %v2894 = vmax.f32 %v2892, %v2893
        %v2895 = vrot.slane %v2894, 1
        %v2896 = vmax.f32 %v2894, %v2895
        %v2897 = vsel %vm2525, %v2450, -inf
        %v2898 = vrot.slane %v2897, 4
        %v2899 = vmax.f32 %v2897, %v2898
        %v2900 = vrot.slane %v2899, 2
        %v2901 = vmax.f32 %v2899, %v2900
        %v2902 = vrot.slane %v2901, 1
        %v2903 = vmax.f32 %v2901, %v2902
        %v2904 = vsel %vm2525, %v2451, -inf
        %v2905 = vrot.slane %v2904, 4
        %v2906 = vmax.f32 %v2904, %v2905
        %v2907 = vrot.slane %v2906, 2
        %v2908 = vmax.f32 %v2906, %v2907
        %v2909 = vrot.slane %v2908, 1
        %v2910 = vmax.f32 %v2908, %v2909
        %v2911 = vsel %vm2525, %v2452, -inf
        %v2912 = vrot.slane %v2911, 4
        %v2913 = vmax.f32 %v2911, %v2912
        %v2914 = vrot.slane %v2913, 2
        %v2915 = vmax.f32 %v2913, %v2914
        %v2916 = vrot.slane %v2915, 1
        %v2917 = vmax.f32 %v2915, %v2916
        %v2918 = vsel %vm2525, %v2453, -inf
        %v2919 = vrot.slane %v2918, 4
        %v2920 = vmax.f32 %v2918, %v2919
        %v2921 = vrot.slane %v2920, 2
        %v2922 = vmax.f32 %v2920, %v2921
        %v2923 = vrot.slane %v2922, 1
        %v2924 = vmax.f32 %v2922, %v2923
        %v2925 = vsel %vm2525, %v2454, -inf
        %v2926 = vrot.slane %v2925, 4
        %v2927 = vmax.f32 %v2925, %v2926
        %v2928 = vrot.slane %v2927, 2
        %v2929 = vmax.f32 %v2927, %v2928
        %v2930 = vrot.slane %v2929, 1
        %v2931 = vmax.f32 %v2929, %v2930
        %v2932 = vsel %vm2525, %v2455, -inf
        %v2933 = vrot.slane %v2932, 4
        %v2934 = vmax.f32 %v2932, %v2933
        %v2935 = vrot.slane %v2934, 2
        %v2936 = vmax.f32 %v2934, %v2935
        %v2937 = vrot.slane %v2936, 1
        %v2938 = vmax.f32 %v2936, %v2937
        %v2939 = vsel %vm2525, %v2456, -inf
        %v2940 = vrot.slane %v2939, 4
        %v2941 = vmax.f32 %v2939, %v2940
        %v2942 = vrot.slane %v2941, 2
        %v2943 = vmax.f32 %v2941, %v2942
        %v2944 = vrot.slane %v2943, 1
        %v2945 = vmax.f32 %v2943, %v2944
        %v2946 = vsel %vm2525, %v2457, -inf
        %v2947 = vrot.slane %v2946, 4
        %v2948 = vmax.f32 %v2946, %v2947
        %v2949 = vrot.slane %v2948, 2
        %v2950 = vmax.f32 %v2948, %v2949
        %v2951 = vrot.slane %v2950, 1
        %v2952 = vmax.f32 %v2950, %v2951
        %v2953 = vsel %vm2525, %v2458, -inf
        %v2954 = vrot.slane %v2953, 4
        %v2955 = vmax.f32 %v2953, %v2954
        %v2956 = vrot.slane %v2955, 2
        %v2957 = vmax.f32 %v2955, %v2956
        %v2958 = vrot.slane %v2957, 1
        %v2959 = vmax.f32 %v2957, %v2958
        %v2960 = vsel %vm2525, %v2459, -inf
        %v2961 = vrot.slane %v2960, 4
        %v2962 = vmax.f32 %v2960, %v2961
        %v2963 = vrot.slane %v2962, 2
        %v2964 = vmax.f32 %v2962, %v2963
        %v2965 = vrot.slane %v2964, 1
        %v2966 = vmax.f32 %v2964, %v2965
        %v2967 = vsel %vm2525, %v2460, -inf
        %v2968 = vrot.slane %v2967, 4
        %v2969 = vmax.f32 %v2967, %v2968
        %v2970 = vrot.slane %v2969, 2
        %v2971 = vmax.f32 %v2969, %v2970
        %v2972 = vrot.slane %v2971, 1
        %v2973 = vmax.f32 %v2971, %v2972
        %v2974 = vsel %vm2525, %v2461, -inf
        %v2975 = vrot.slane %v2974, 4
        %v2976 = vmax.f32 %v2974, %v2975
        %v2977 = vrot.slane %v2976, 2
        %v2978 = vmax.f32 %v2976, %v2977
        %v2979 = vrot.slane %v2978, 1
        %v2980 = vmax.f32 %v2978, %v2979
        %v2981 = vsel %vm2525, %v2462, -inf
        %v2982 = vrot.slane %v2981, 4
        %v2983 = vmax.f32 %v2981, %v2982
        %v2984 = vrot.slane %v2983, 2
        %v2985 = vmax.f32 %v2983, %v2984
        %v2986 = vrot.slane %v2985, 1
        %v2987 = vmax.f32 %v2985, %v2986
        %v2988 = vsel %vm2525, %v2463, -inf
        %v2989 = vrot.slane %v2988, 4
        %v2990 = vmax.f32 %v2988, %v2989
        %v2991 = vrot.slane %v2990, 2
        %v2992 = vmax.f32 %v2990, %v2991
        %v2993 = vrot.slane %v2992, 1
        %v2994 = vmax.f32 %v2992, %v2993
        %v2995 = vsel %vm2525, %v2464, -inf
        %v2996 = vrot.slane %v2995, 4
        %v2997 = vmax.f32 %v2995, %v2996
        %v2998 = vrot.slane %v2997, 2
        %v2999 = vmax.f32 %v2997, %v2998
        %v3000 = vrot.slane %v2999, 1
        %v3001 = vmax.f32 %v2999, %v3000
        %v3002 = vsel %vm2525, %v2465, -inf
        %v3003 = vrot.slane %v3002, 4
        %v3004 = vmax.f32 %v3002, %v3003
        %v3005 = vrot.slane %v3004, 2
        %v3006 = vmax.f32 %v3004, %v3005
        %v3007 = vrot.slane %v3006, 1
        %v3008 = vmax.f32 %v3006, %v3007
        %v3009 = vsel %vm2525, %v2466, -inf
        %v3010 = vrot.slane %v3009, 4
        %v3011 = vmax.f32 %v3009, %v3010
        %v3012 = vrot.slane %v3011, 2
        %v3013 = vmax.f32 %v3011, %v3012
        %v3014 = vrot.slane %v3013, 1
        %v3015 = vmax.f32 %v3013, %v3014
        %v3016 = vsel %vm2525, %v2467, -inf
        %v3017 = vrot.slane %v3016, 4
        %v3018 = vmax.f32 %v3016, %v3017
        %v3019 = vrot.slane %v3018, 2
        %v3020 = vmax.f32 %v3018, %v3019
        %v3021 = vrot.slane %v3020, 1
        %v3022 = vmax.f32 %v3020, %v3021
        %v3023 = vsel %vm2525, %v2468, -inf
        %v3024 = vrot.slane %v3023, 4
        %v3025 = vmax.f32 %v3023, %v3024
        %v3026 = vrot.slane %v3025, 2
        %v3027 = vmax.f32 %v3025, %v3026
        %v3028 = vrot.slane %v3027, 1
        %v3029 = vmax.f32 %v3027, %v3028
        %v3030 = vsel %vm2525, %v2469, -inf
        %v3031 = vrot.slane %v3030, 4
        %v3032 = vmax.f32 %v3030, %v3031
        %v3033 = vrot.slane %v3032, 2
        %v3034 = vmax.f32 %v3032, %v3033
        %v3035 = vrot.slane %v3034, 1
        %v3036 = vmax.f32 %v3034, %v3035
        %v3037 = vsel %vm2525, %v2470, -inf
        %v3038 = vrot.slane %v3037, 4
        %v3039 = vmax.f32 %v3037, %v3038
        %v3040 = vrot.slane %v3039, 2
        %v3041 = vmax.f32 %v3039, %v3040
        %v3042 = vrot.slane %v3041, 1
        %v3043 = vmax.f32 %v3041, %v3042
        %v3044 = vsel %vm2525, %v2471, -inf
        %v3045 = vrot.slane %v3044, 4
        %v3046 = vmax.f32 %v3044, %v3045
        %v3047 = vrot.slane %v3046, 2
        %v3048 = vmax.f32 %v3046, %v3047
        %v3049 = vrot.slane %v3048, 1
        %v3050 = vmax.f32 %v3048, %v3049
        %v3051 = vsel %vm2525, %v2472, -inf
        %v3052 = vrot.slane %v3051, 4
        %v3053 = vmax.f32 %v3051, %v3052
        %v3054 = vrot.slane %v3053, 2
        %v3055 = vmax.f32 %v3053, %v3054
        %v3056 = vrot.slane %v3055, 1
        %v3057 = vmax.f32 %v3055, %v3056
        %v3058 = vsel %vm2525, %v2473, -inf
        %v3059 = vrot.slane %v3058, 4
        %v3060 = vmax.f32 %v3058, %v3059
        %v3061 = vrot.slane %v3060, 2
        %v3062 = vmax.f32 %v3060, %v3061
        %v3063 = vrot.slane %v3062, 1
        %v3064 = vmax.f32 %v3062, %v3063
        %v3065 = vsel %vm2525, %v2474, -inf
        %v3066 = vrot.slane %v3065, 4
        %v3067 = vmax.f32 %v3065, %v3066
        %v3068 = vrot.slane %v3067, 2
        %v3069 = vmax.f32 %v3067, %v3068
        %v3070 = vrot.slane %v3069, 1
        %v3071 = vmax.f32 %v3069, %v3070
        %v3072 = vsel %vm2525, %v2475, -inf
        %v3073 = vrot.slane %v3072, 4
        %v3074 = vmax.f32 %v3072, %v3073
        %v3075 = vrot.slane %v3074, 2
        %v3076 = vmax.f32 %v3074, %v3075
        %v3077 = vrot.slane %v3076, 1
        %v3078 = vmax.f32 %v3076, %v3077
        %v3079 = vsel %vm2525, %v2476, -inf
        %v3080 = vrot.slane %v3079, 4
        %v3081 = vmax.f32 %v3079, %v3080
        %v3082 = vrot.slane %v3081, 2
        %v3083 = vmax.f32 %v3081, %v3082
        %v3084 = vrot.slane %v3083, 1
        %v3085 = vmax.f32 %v3083, %v3084
        %v3086 = vsel %vm2525, %v2477, -inf
        %v3087 = vrot.slane %v3086, 4
        %v3088 = vmax.f32 %v3086, %v3087
        %v3089 = vrot.slane %v3088, 2
        %v3090 = vmax.f32 %v3088, %v3089
        %v3091 = vrot.slane %v3090, 1
        %v3092 = vmax.f32 %v3090, %v3091
        %v3093 = vsel %vm2525, %v2478, -inf
        %v3094 = vrot.slane %v3093, 4
        %v3095 = vmax.f32 %v3093, %v3094
        %v3096 = vrot.slane %v3095, 2
        %v3097 = vmax.f32 %v3095, %v3096
        %v3098 = vrot.slane %v3097, 1
        %v3099 = vmax.f32 %v3097, %v3098
        %v3100 = vsel %vm2525, %v2479, -inf
        %v3101 = vrot.slane %v3100, 4
        %v3102 = vmax.f32 %v3100, %v3101
        %v3103 = vrot.slane %v3102, 2
        %v3104 = vmax.f32 %v3102, %v3103
        %v3105 = vrot.slane %v3104, 1
        %v3106 = vmax.f32 %v3104, %v3105
        %v3107 = vsel %vm2525, %v2480, -inf
        %v3108 = vrot.slane %v3107, 4
        %v3109 = vmax.f32 %v3107, %v3108
        %v3110 = vrot.slane %v3109, 2
        %v3111 = vmax.f32 %v3109, %v3110
        %v3112 = vrot.slane %v3111, 1
        %v3113 = vmax.f32 %v3111, %v3112
        %v3114 = vsel %vm2525, %v2481, -inf
        %v3115 = vrot.slane %v3114, 4
        %v3116 = vmax.f32 %v3114, %v3115
        %v3117 = vrot.slane %v3116, 2
        %v3118 = vmax.f32 %v3116, %v3117
        %v3119 = vrot.slane %v3118, 1
        %v3120 = vmax.f32 %v3118, %v3119
        %v3121 = vsel %vm2525, %v2482, -inf
        %v3122 = vrot.slane %v3121, 4
        %v3123 = vmax.f32 %v3121, %v3122
        %v3124 = vrot.slane %v3123, 2
        %v3125 = vmax.f32 %v3123, %v3124
        %v3126 = vrot.slane %v3125, 1
        %v3127 = vmax.f32 %v3125, %v3126
        %v3128 = vsel %vm2525, %v2483, -inf
        %v3129 = vrot.slane %v3128, 4
        %v3130 = vmax.f32 %v3128, %v3129
        %v3131 = vrot.slane %v3130, 2
        %v3132 = vmax.f32 %v3130, %v3131
        %v3133 = vrot.slane %v3132, 1
        %v3134 = vmax.f32 %v3132, %v3133
        %v3135 = vsel %vm2525, %v2484, -inf
        %v3136 = vrot.slane %v3135, 4
        %v3137 = vmax.f32 %v3135, %v3136
        %v3138 = vrot.slane %v3137, 2
        %v3139 = vmax.f32 %v3137, %v3138
        %v3140 = vrot.slane %v3139, 1
        %v3141 = vmax.f32 %v3139, %v3140
        %v3142 = vsel %vm2525, %v2485, -inf
        %v3143 = vrot.slane %v3142, 4
        %v3144 = vmax.f32 %v3142, %v3143
        %v3145 = vrot.slane %v3144, 2
        %v3146 = vmax.f32 %v3144, %v3145
        %v3147 = vrot.slane %v3146, 1
        %v3148 = vmax.f32 %v3146, %v3147
        %v3149 = vsel %vm2525, %v2486, -inf
        %v3150 = vrot.slane %v3149, 4
        %v3151 = vmax.f32 %v3149, %v3150
        %v3152 = vrot.slane %v3151, 2
        %v3153 = vmax.f32 %v3151, %v3152
        %v3154 = vrot.slane %v3153, 1
        %v3155 = vmax.f32 %v3153, %v3154
        %v3156 = vsel %vm2525, %v2487, -inf
        %v3157 = vrot.slane %v3156, 4
        %v3158 = vmax.f32 %v3156, %v3157
        %v3159 = vrot.slane %v3158, 2
        %v3160 = vmax.f32 %v3158, %v3159
        %v3161 = vrot.slane %v3160, 1
        %v3162 = vmax.f32 %v3160, %v3161
        %v3163 = vsel %vm2525, %v2488, -inf
        %v3164 = vrot.slane %v3163, 4
        %v3165 = vmax.f32 %v3163, %v3164
        %v3166 = vrot.slane %v3165, 2
        %v3167 = vmax.f32 %v3165, %v3166
        %v3168 = vrot.slane %v3167, 1
        %v3169 = vmax.f32 %v3167, %v3168
        %v3170 = vsel %vm2525, %v2489, -inf
        %v3171 = vrot.slane %v3170, 4
        %v3172 = vmax.f32 %v3170, %v3171
        %v3173 = vrot.slane %v3172, 2
        %v3174 = vmax.f32 %v3172, %v3173
        %v3175 = vrot.slane %v3174, 1
        %v3176 = vmax.f32 %v3174, %v3175
        %v3177 = vsel %vm2525, %v2490, -inf
        %v3178 = vrot.slane %v3177, 4
        %v3179 = vmax.f32 %v3177, %v3178
        %v3180 = vrot.slane %v3179, 2
        %v3181 = vmax.f32 %v3179, %v3180
        %v3182 = vrot.slane %v3181, 1
        %v3183 = vmax.f32 %v3181, %v3182
        %v3184 = vsel %vm2525, %v2491, -inf
        %v3185 = vrot.slane %v3184, 4
        %v3186 = vmax.f32 %v3184, %v3185
        %v3187 = vrot.slane %v3186, 2
        %v3188 = vmax.f32 %v3186, %v3187
        %v3189 = vrot.slane %v3188, 1
        %v3190 = vmax.f32 %v3188, %v3189
        %v3191 = vsel %vm2525, %v2492, -inf
        %v3192 = vrot.slane %v3191, 4
        %v3193 = vmax.f32 %v3191, %v3192
        %v3194 = vrot.slane %v3193, 2
        %v3195 = vmax.f32 %v3193, %v3194
        %v3196 = vrot.slane %v3195, 1
        %v3197 = vmax.f32 %v3195, %v3196
        %v3198 = vsel %vm2525, %v2493, -inf
        %v3199 = vrot.slane %v3198, 4
        %v3200 = vmax.f32 %v3198, %v3199
        %v3201 = vrot.slane %v3200, 2
        %v3202 = vmax.f32 %v3200, %v3201
        %v3203 = vrot.slane %v3202, 1
        %v3204 = vmax.f32 %v3202, %v3203
        %v3205 = vsel %vm2525, %v2494, -inf
        %v3206 = vrot.slane %v3205, 4
        %v3207 = vmax.f32 %v3205, %v3206
        %v3208 = vrot.slane %v3207, 2
        %v3209 = vmax.f32 %v3207, %v3208
        %v3210 = vrot.slane %v3209, 1
        %v3211 = vmax.f32 %v3209, %v3210
        %v3212 = vsel %vm2525, %v2495, -inf
        %v3213 = vrot.slane %v3212, 4
        %v3214 = vmax.f32 %v3212, %v3213
        %v3215 = vrot.slane %v3214, 2
        %v3216 = vmax.f32 %v3214, %v3215
        %v3217 = vrot.slane %v3216, 1
        %v3218 = vmax.f32 %v3216, %v3217
        %v3219 = vsel %vm2525, %v2496, -inf
        %v3220 = vrot.slane %v3219, 4
        %v3221 = vmax.f32 %v3219, %v3220
        %v3222 = vrot.slane %v3221, 2
        %v3223 = vmax.f32 %v3221, %v3222
        %v3224 = vrot.slane %v3223, 1
        %v3225 = vmax.f32 %v3223, %v3224
        %v3226 = vsel %vm2525, %v2497, -inf
        %v3227 = vrot.slane %v3226, 4
        %v3228 = vmax.f32 %v3226, %v3227
        %v3229 = vrot.slane %v3228, 2
        %v3230 = vmax.f32 %v3228, %v3229
        %v3231 = vrot.slane %v3230, 1
        %v3232 = vmax.f32 %v3230, %v3231
        %v3233 = vsel %vm2525, %v2498, -inf
        %v3234 = vrot.slane %v3233, 4
        %v3235 = vmax.f32 %v3233, %v3234
        %v3236 = vrot.slane %v3235, 2
        %v3237 = vmax.f32 %v3235, %v3236
        %v3238 = vrot.slane %v3237, 1
        %v3239 = vmax.f32 %v3237, %v3238
        %v3240 = vsel %vm2525, %v2499, -inf
        %v3241 = vrot.slane %v3240, 4
        %v3242 = vmax.f32 %v3240, %v3241
        %v3243 = vrot.slane %v3242, 2
        %v3244 = vmax.f32 %v3242, %v3243
        %v3245 = vrot.slane %v3244, 1
        %v3246 = vmax.f32 %v3244, %v3245
        %v3247 = vsel %vm2525, %v2500, -inf
        %v3248 = vrot.slane %v3247, 4
        %v3249 = vmax.f32 %v3247, %v3248
        %v3250 = vrot.slane %v3249, 2
        %v3251 = vmax.f32 %v3249, %v3250
        %v3252 = vrot.slane %v3251, 1
        %v3253 = vmax.f32 %v3251, %v3252
        %v3254 = vsel %vm2525, %v2501, -inf
        %v3255 = vrot.slane %v3254, 4
        %v3256 = vmax.f32 %v3254, %v3255
        %v3257 = vrot.slane %v3256, 2
        %v3258 = vmax.f32 %v3256, %v3257
        %v3259 = vrot.slane %v3258, 1
        %v3260 = vmax.f32 %v3258, %v3259
        %v3261 = vsel %vm2525, %v2502, -inf
        %v3262 = vrot.slane %v3261, 4
        %v3263 = vmax.f32 %v3261, %v3262
        %v3264 = vrot.slane %v3263, 2
        %v3265 = vmax.f32 %v3263, %v3264
        %v3266 = vrot.slane %v3265, 1
        %v3267 = vmax.f32 %v3265, %v3266
        %v3268 = vsel %vm2525, %v2503, -inf
        %v3269 = vrot.slane %v3268, 4
        %v3270 = vmax.f32 %v3268, %v3269
        %v3271 = vrot.slane %v3270, 2
        %v3272 = vmax.f32 %v3270, %v3271
        %v3273 = vrot.slane %v3272, 1
        %v3274 = vmax.f32 %v3272, %v3273
        %v3275 = vsel %vm2525, %v2504, -inf
        %v3276 = vrot.slane %v3275, 4
        %v3277 = vmax.f32 %v3275, %v3276
        %v3278 = vrot.slane %v3277, 2
        %v3279 = vmax.f32 %v3277, %v3278
        %v3280 = vrot.slane %v3279, 1
        %v3281 = vmax.f32 %v3279, %v3280
        %v3282 = vsel %vm2525, %v2505, -inf
        %v3283 = vrot.slane %v3282, 4
        %v3284 = vmax.f32 %v3282, %v3283
        %v3285 = vrot.slane %v3284, 2
        %v3286 = vmax.f32 %v3284, %v3285
        %v3287 = vrot.slane %v3286, 1
        %v3288 = vmax.f32 %v3286, %v3287
        %v3289 = vsel %vm2525, %v2506, -inf
        %v3290 = vrot.slane %v3289, 4
        %v3291 = vmax.f32 %v3289, %v3290
        %v3292 = vrot.slane %v3291, 2
        %v3293 = vmax.f32 %v3291, %v3292
        %v3294 = vrot.slane %v3293, 1
        %v3295 = vmax.f32 %v3293, %v3294
        %v3296 = vsel %vm2525, %v2507, -inf
        %v3297 = vrot.slane %v3296, 4
        %v3298 = vmax.f32 %v3296, %v3297
        %v3299 = vrot.slane %v3298, 2
        %v3300 = vmax.f32 %v3298, %v3299
        %v3301 = vrot.slane %v3300, 1
        %v3302 = vmax.f32 %v3300, %v3301
        %v3303 = vsel %vm2525, %v2508, -inf
        %v3304 = vrot.slane %v3303, 4
        %v3305 = vmax.f32 %v3303, %v3304
        %v3306 = vrot.slane %v3305, 2
        %v3307 = vmax.f32 %v3305, %v3306
        %v3308 = vrot.slane %v3307, 1
        %v3309 = vmax.f32 %v3307, %v3308
        %v3310 = vsel %vm2525, %v2509, -inf
        %v3311 = vrot.slane %v3310, 4
        %v3312 = vmax.f32 %v3310, %v3311
        %v3313 = vrot.slane %v3312, 2
        %v3314 = vmax.f32 %v3312, %v3313
        %v3315 = vrot.slane %v3314, 1
        %v3316 = vmax.f32 %v3314, %v3315
        %v3317 = vsel %vm2525, %v2510, -inf
        %v3318 = vrot.slane %v3317, 4
        %v3319 = vmax.f32 %v3317, %v3318
        %v3320 = vrot.slane %v3319, 2
        %v3321 = vmax.f32 %v3319, %v3320
        %v3322 = vrot.slane %v3321, 1
        %v3323 = vmax.f32 %v3321, %v3322
        %v3324 = vsel %vm2525, %v2511, -inf
        %v3325 = vrot.slane %v3324, 4
        %v3326 = vmax.f32 %v3324, %v3325
        %v3327 = vrot.slane %v3326, 2
        %v3328 = vmax.f32 %v3326, %v3327
        %v3329 = vrot.slane %v3328, 1
        %v3330 = vmax.f32 %v3328, %v3329
        %v3331 = vsel %vm2525, %v2512, -inf
        %v3332 = vrot.slane %v3331, 4
        %v3333 = vmax.f32 %v3331, %v3332
        %v3334 = vrot.slane %v3333, 2
        %v3335 = vmax.f32 %v3333, %v3334
        %v3336 = vrot.slane %v3335, 1
        %v3337 = vmax.f32 %v3335, %v3336
        %v3338 = vsel %vm2525, %v2513, -inf
        %v3339 = vrot.slane %v3338, 4
        %v3340 = vmax.f32 %v3338, %v3339
        %v3341 = vrot.slane %v3340, 2
        %v3342 = vmax.f32 %v3340, %v3341
        %v3343 = vrot.slane %v3342, 1
        %v3344 = vmax.f32 %v3342, %v3343
        %v3345 = vsel %vm2525, %v2514, -inf
        %v3346 = vrot.slane %v3345, 4
        %v3347 = vmax.f32 %v3345, %v3346
        %v3348 = vrot.slane %v3347, 2
        %v3349 = vmax.f32 %v3347, %v3348
        %v3350 = vrot.slane %v3349, 1
        %v3351 = vmax.f32 %v3349, %v3350
        %v3352 = vsel %vm2525, %v2515, -inf
        %v3353 = vrot.slane %v3352, 4
        %v3354 = vmax.f32 %v3352, %v3353
        %v3355 = vrot.slane %v3354, 2
        %v3356 = vmax.f32 %v3354, %v3355
        %v3357 = vrot.slane %v3356, 1
        %v3358 = vmax.f32 %v3356, %v3357
        %v3359 = vsel %vm2525, %v2516, -inf
        %v3360 = vrot.slane %v3359, 4
        %v3361 = vmax.f32 %v3359, %v3360
        %v3362 = vrot.slane %v3361, 2
        %v3363 = vmax.f32 %v3361, %v3362
        %v3364 = vrot.slane %v3363, 1
        %v3365 = vmax.f32 %v3363, %v3364
        %v3366 = vsel %vm2525, %v2517, -inf
        %v3367 = vrot.slane %v3366, 4
        %v3368 = vmax.f32 %v3366, %v3367
        %v3369 = vrot.slane %v3368, 2
        %v3370 = vmax.f32 %v3368, %v3369
        %v3371 = vrot.slane %v3370, 1
        %v3372 = vmax.f32 %v3370, %v3371
        %v3373 = vsel %vm2525, %v2518, -inf
        %v3374 = vrot.slane %v3373, 4
        %v3375 = vmax.f32 %v3373, %v3374
        %v3376 = vrot.slane %v3375, 2
        %v3377 = vmax.f32 %v3375, %v3376
        %v3378 = vrot.slane %v3377, 1
        %v3379 = vmax.f32 %v3377, %v3378
        %v3380 = vsel %vm2525, %v2519, -inf
        %v3381 = vrot.slane %v3380, 4
        %v3382 = vmax.f32 %v3380, %v3381
        %v3383 = vrot.slane %v3382, 2
        %v3384 = vmax.f32 %v3382, %v3383
        %v3385 = vrot.slane %v3384, 1
        %v3386 = vmax.f32 %v3384, %v3385
        %v3387 = vsel %vm2525, %v2520, -inf
        %v3388 = vrot.slane %v3387, 4
        %v3389 = vmax.f32 %v3387, %v3388
        %v3390 = vrot.slane %v3389, 2
        %v3391 = vmax.f32 %v3389, %v3390
        %v3392 = vrot.slane %v3391, 1
        %v3393 = vmax.f32 %v3391, %v3392
        %v3394 = vsel %vm2525, %v2521, -inf
        %v3395 = vrot.slane %v3394, 4
        %v3396 = vmax.f32 %v3394, %v3395
        %v3397 = vrot.slane %v3396, 2
        %v3398 = vmax.f32 %v3396, %v3397
        %v3399 = vrot.slane %v3398, 1
        %v3400 = vmax.f32 %v3398, %v3399
        %v3401 = vsel %vm2525, %v2522, -inf
        %v3402 = vrot.slane %v3401, 4
        %v3403 = vmax.f32 %v3401, %v3402
        %v3404 = vrot.slane %v3403, 2
        %v3405 = vmax.f32 %v3403, %v3404
        %v3406 = vrot.slane %v3405, 1
        %v3407 = vmax.f32 %v3405, %v3406
        %v3408 = vsel %vm2525, %v2523, -inf
        %v3409 = vrot.slane %v3408, 4
        %v3410 = vmax.f32 %v3408, %v3409
        %v3411 = vrot.slane %v3410, 2
        %v3412 = vmax.f32 %v3410, %v3411
        %v3413 = vrot.slane %v3412, 1
        %v3414 = vmax.f32 %v3412, %v3413
        %v3415 = vsel %vm2525, %v2524, -inf
        %v3416 = vrot.slane %v3415, 4
        %v3417 = vmax.f32 %v3415, %v3416
        %v3418 = vrot.slane %v3417, 2
        %v3419 = vmax.f32 %v3417, %v3418
        %v3420 = vrot.slane %v3419, 1
        %v3421 = vmax.f32 %v3419, %v3420
        %vm3550 = vcmask 1041409
        %v3551 = vsel %vm3550, %v2539, %v2532
        %vm3552 = vcmask 1042434
        %v3553 = vsel %vm3552, %v2546, %v3551
        %vm3554 = vcmask 1043459
        %v3555 = vsel %vm3554, %v2553, %v3553
        %vm3556 = vcmask 1044484
        %v3557 = vsel %vm3556, %v2560, %v3555
        %vm3558 = vcmask 1045509
        %v3559 = vsel %vm3558, %v2567, %v3557
        %vm3560 = vcmask 1046534
        %v3561 = vsel %vm3560, %v2574, %v3559
        %vm3562 = vcmask 1047559
        %v3563 = vsel %vm3562, %v2581, %v3561
        %v3564 = vsel %vm3550, %v2595, %v2588
        %v3565 = vsel %vm3552, %v2602, %v3564
        %v3566 = vsel %vm3554, %v2609, %v3565
        %v3567 = vsel %vm3556, %v2616, %v3566
        %v3568 = vsel %vm3558, %v2623, %v3567
        %v3569 = vsel %vm3560, %v2630, %v3568
        %v3570 = vsel %vm3562, %v2637, %v3569
        %v3571 = vsel %vm3550, %v2651, %v2644
        %v3572 = vsel %vm3552, %v2658, %v3571
        %v3573 = vsel %vm3554, %v2665, %v3572
        %v3574 = vsel %vm3556, %v2672, %v3573
        %v3575 = vsel %vm3558, %v2679, %v3574
        %v3576 = vsel %vm3560, %v2686, %v3575
        %v3577 = vsel %vm3562, %v2693, %v3576
        %v3578 = vsel %vm3550, %v2707, %v2700
        %v3579 = vsel %vm3552, %v2714, %v3578
        %v3580 = vsel %vm3554, %v2721, %v3579
        %v3581 = vsel %vm3556, %v2728, %v3580
        %v3582 = vsel %vm3558, %v2735, %v3581
        %v3583 = vsel %vm3560, %v2742, %v3582
        %v3584 = vsel %vm3562, %v2749, %v3583
        %v3585 = vsel %vm3550, %v2763, %v2756
        %v3586 = vsel %vm3552, %v2770, %v3585
        %v3587 = vsel %vm3554, %v2777, %v3586
        %v3588 = vsel %vm3556, %v2784, %v3587
        %v3589 = vsel %vm3558, %v2791, %v3588
        %v3590 = vsel %vm3560, %v2798, %v3589
        %v3591 = vsel %vm3562, %v2805, %v3590
        %v3592 = vsel %vm3550, %v2819, %v2812
        %v3593 = vsel %vm3552, %v2826, %v3592
        %v3594 = vsel %vm3554, %v2833, %v3593
        %v3595 = vsel %vm3556, %v2840, %v3594
        %v3596 = vsel %vm3558, %v2847, %v3595
        %v3597 = vsel %vm3560, %v2854, %v3596
        %v3598 = vsel %vm3562, %v2861, %v3597
        %v3599 = vsel %vm3550, %v2875, %v2868
        %v3600 = vsel %vm3552, %v2882, %v3599
        %v3601 = vsel %vm3554, %v2889, %v3600
        %v3602 = vsel %vm3556, %v2896, %v3601
        %v3603 = vsel %vm3558, %v2903, %v3602
        %v3604 = vsel %vm3560, %v2910, %v3603
        %v3605 = vsel %vm3562, %v2917, %v3604
        %v3606 = vsel %vm3550, %v2931, %v2924
        %v3607 = vsel %vm3552, %v2938, %v3606
        %v3608 = vsel %vm3554, %v2945, %v3607
        %v3609 = vsel %vm3556, %v2952, %v3608
        %v3610 = vsel %vm3558, %v2959, %v3609
        %v3611 = vsel %vm3560, %v2966, %v3610
        %v3612 = vsel %vm3562, %v2973, %v3611
        %v3613 = vsel %vm3550, %v2987, %v2980
        %v3614 = vsel %vm3552, %v2994, %v3613
        %v3615 = vsel %vm3554, %v3001, %v3614
        %v3616 = vsel %vm3556, %v3008, %v3615
        %v3617 = vsel %vm3558, %v3015, %v3616
        %v3618 = vsel %vm3560, %v3022, %v3617
        %v3619 = vsel %vm3562, %v3029, %v3618
        %v3620 = vsel %vm3550, %v3043, %v3036
        %v3621 = vsel %vm3552, %v3050, %v3620
        %v3622 = vsel %vm3554, %v3057, %v3621
        %v3623 = vsel %vm3556, %v3064, %v3622
        %v3624 = vsel %vm3558, %v3071, %v3623
        %v3625 = vsel %vm3560, %v3078, %v3624
        %v3626 = vsel %vm3562, %v3085, %v3625
        %v3627 = vsel %vm3550, %v3099, %v3092
        %v3628 = vsel %vm3552, %v3106, %v3627
        %v3629 = vsel %vm3554, %v3113, %v3628
        %v3630 = vsel %vm3556, %v3120, %v3629
        %v3631 = vsel %vm3558, %v3127, %v3630
        %v3632 = vsel %vm3560, %v3134, %v3631
        %v3633 = vsel %vm3562, %v3141, %v3632
        %v3634 = vsel %vm3550, %v3155, %v3148
        %v3635 = vsel %vm3552, %v3162, %v3634
        %v3636 = vsel %vm3554, %v3169, %v3635
        %v3637 = vsel %vm3556, %v3176, %v3636
        %v3638 = vsel %vm3558, %v3183, %v3637
        %v3639 = vsel %vm3560, %v3190, %v3638
        %v3640 = vsel %vm3562, %v3197, %v3639
        %v3641 = vsel %vm3550, %v3211, %v3204
        %v3642 = vsel %vm3552, %v3218, %v3641
        %v3643 = vsel %vm3554, %v3225, %v3642
        %v3644 = vsel %vm3556, %v3232, %v3643
        %v3645 = vsel %vm3558, %v3239, %v3644
        %v3646 = vsel %vm3560, %v3246, %v3645
        %v3647 = vsel %vm3562, %v3253, %v3646
        %v3648 = vsel %vm3550, %v3267, %v3260
        %v3649 = vsel %vm3552, %v3274, %v3648
        %v3650 = vsel %vm3554, %v3281, %v3649
        %v3651 = vsel %vm3556, %v3288, %v3650
        %v3652 = vsel %vm3558, %v3295, %v3651
        %v3653 = vsel %vm3560, %v3302, %v3652
        %v3654 = vsel %vm3562, %v3309, %v3653
        %v3655 = vsel %vm3550, %v3323, %v3316
        %v3656 = vsel %vm3552, %v3330, %v3655
        %v3657 = vsel %vm3554, %v3337, %v3656
        %v3658 = vsel %vm3556, %v3344, %v3657
        %v3659 = vsel %vm3558, %v3351, %v3658
        %v3660 = vsel %vm3560, %v3358, %v3659
        %v3661 = vsel %vm3562, %v3365, %v3660
        %v3662 = vsel %vm3550, %v3379, %v3372
        %v3663 = vsel %vm3552, %v3386, %v3662
        %v3664 = vsel %vm3554, %v3393, %v3663
        %v3665 = vsel %vm3556, %v3400, %v3664
        %v3666 = vsel %vm3558, %v3407, %v3665
        %v3667 = vsel %vm3560, %v3414, %v3666
        %v3668 = vsel %vm3562, %v3421, %v3667
        %3685 = vxpose.xlu0.b32.start [1/16] %v3563, 128
        %3686 = vxpose.xlu0.b32.cont [2/16] %v3570, 128
        %3687 = vxpose.xlu0.b32.cont [3/16] %v3577, 128
        %3688 = vxpose.xlu0.b32.cont [4/16] %v3584, 128
        %3689 = vxpose.xlu0.b32.cont [5/16] %v3591, 128
        %3690 = vxpose.xlu0.b32.cont [6/16] %v3598, 128
        %3691 = vxpose.xlu0.b32.cont [7/16] %v3605, 128
        %3692 = vxpose.xlu0.b32.cont [8/16] %v3612, 128
        %3693 = vxpose.xlu0.b32.cont [9/16] %v3619, 128
        %3694 = vxpose.xlu0.b32.cont [10/16] %v3626, 128
        %3695 = vxpose.xlu0.b32.cont [11/16] %v3633, 128
        %3696 = vxpose.xlu0.b32.cont [12/16] %v3640, 128
        %3697 = vxpose.xlu0.b32.cont [13/16] %v3647, 128
        %3698 = vxpose.xlu0.b32.cont [14/16] %v3654, 128
        %3699 = vxpose.xlu0.b32.cont [15/16] %v3661, 128
        %3700 = vxpose.xlu0.b32.end [16/16] %v3668, 128
        %v3701 = vpop.trf.xlu0
        %v3702 = vpop.trf.xlu0
        %v3703 = vpop.trf.xlu0
        %v3704 = vpop.trf.xlu0
        %v3705 = vpop.trf.xlu0
        %v3706 = vpop.trf.xlu0
        %v3707 = vpop.trf.xlu0
        %v3708 = vpop.trf.xlu0
        %v3709 = vpop.trf.xlu0
        %v3710 = vpop.trf.xlu0
        %v3711 = vpop.trf.xlu0
        %v3712 = vpop.trf.xlu0
        %v3713 = vpop.trf.xlu0
        %v3714 = vpop.trf.xlu0
        %v3715 = vpop.trf.xlu0
        %v3716 = vpop.trf.xlu0
        %3717 = vst [vmem:[%s242] sm:$0xff] %v3701
        %3718 = vst [vmem:[%s242 + $0x8] sm:$0xff] %v3702
        %3719 = vst [vmem:[%s242 + $0x10] sm:$0xff] %v3703
        %3720 = vst [vmem:[%s242 + $0x18] sm:$0xff] %v3704
        %s3721 = sand.u32 %s153, 1
        %s3722 = scalar_lea.sflag [#allocation3], %s3721
        %s3723 = sand.u32 %s153, 1
        %s3724 = smul.addr %s3723, 32
        %s3725 = scalar_lea.vmem [#allocation2], %s3724
        // Predicated region
        $region41: #{tpu_custom_call.1} parent=39 // pred_check
          %p3726 = pneg %p163
        $region42: #{tpu_custom_call.1} parent=39 // pred_check_branch
          %3728 = sbr.rel (%p3726) target = $region44
        $region43: #{tpu_custom_call.1} parent=39 // pred_region
          %s3730 = ssub.s32 512, 512
          %3731 = vsyncadd %s3722, %s3730
          %s3732 = smul.addr %s23, 8
          %s3733 = sadd.s32 %s24, %s3732
          %s3734 = smul.addr %s3733, 128
          %s3735 = scalar_lea.hbm %s5, %s3734
          %s3736 = sshll.u32 %s3725, 4
          %s3737 = int_to_ptr.vmem [resolvable:$true] %s3736
          %3742 = dma.vmem_to_hbm [thread:$0]  %s3737, 512, %s3735, %s3722, 128, 256, 8
        $region44: #{tpu_custom_call.1} parent=39 // pred_fallthru
          _
      $region40: #{tpu_custom_call.1} parent=5 // pred_fallthru
        _
      %p3743 = scmp.le.s32.totalorder 2, %s14
      // Predicated region
      $region45: #{tpu_custom_call.1} parent=5 // pred_check
        %p3744 = pneg %p3743
      $region46: #{tpu_custom_call.1} parent=5 // pred_check_branch
        %3746 = sbr.rel (%p3744) target = $region48
      $region47: #{tpu_custom_call.1} parent=5 // pred_region
        %s3747 = ssub.s32 %s14, 2
        // Predicated region
        $region49: #{tpu_custom_call.1} parent=47 // pred_check
          %p3748 = pneg %p169
        $region50: #{tpu_custom_call.1} parent=47 // pred_check_branch
          %3750 = sbr.rel (%p3748) target = $region52
        $region51: #{tpu_custom_call.1} parent=47 // pred_region
          %s3751 = sand.u32 %s154, 1
          %s3752 = scalar_lea.sflag [#allocation3], %s3751
          %s3753 = sand.u32 %s154, 1
          %s3754 = smul.addr %s3753, 32
          %s3755 = scalar_lea.vmem [#allocation2], %s3754
          %3756 = dma.done %s3752, 512
        $region52: #{tpu_custom_call.1} parent=47 // pred_fallthru
          _
      $region48: #{tpu_custom_call.1} parent=5 // pred_fallthru
        _
    $region6: #{tpu_custom_call.1} parent=1 // loop_footer
      %s18 = sadd.s32 1, %s14
    $region7: #{tpu_custom_call.1} parent=1 // loop_footer_branch
      %13 = sbr.rel target = $region3
    $region8: #{tpu_custom_call.1} parent=1 // loop_exit
      _
    %3757 = vsyncpa [#allocation3], 1
    %s3758 = scalar_lea.sflag [#allocation3], 1
    %3759 = vsyncpa %s3758, 1

</llo_original>
